<compile_context>
chip_gen: v5e
topology: v5e:2x2
jax: 0.10.0
libtpu: 0.0.40
codegen_flags: <defaults>
</compile_context>

<pallas_src>
import jax
import jax.numpy as jnp
from jax.experimental import pallas as pl
from jax.experimental.pallas import tpu as pltpu

KH = KW = 5
CIN, COUT = 1, 32
H = W = 28
OH, OW = H - KH + 1, W - KW + 1          # 24, 24
NPIX = OH * OW                           # 576
FLAT = COUT * NPIX                       # 18432  (matches nn.Linear(18432, 1))
NLANE = OW * COUT                        # 768    (col index = ox*32 + c)
OUT_LANES = 128                          # lane-dense output slab width


def _disc_kernel(x_ref, wband_ref, bc_ref, wl_ref, bl_ref, o_ref):
    # x_ref    : (B, 28, 28)   raw images for this batch tile
    # wband_ref: (5, 28, 768)  band conv weights per ky, cols = ox*32 + c
    # bc_ref   : (1, 768)      conv bias tiled over ox
    # wl_ref   : (B*24, 768)   linear weight, rows = b*24 + oy, cols = ox*32 + c
    # bl_ref   : (1, 1)        linear bias
    # o_ref    : (B, 128)      per-image logit broadcast across lanes
    b = x_ref.shape[0]
    x = x_ref[...]                                          # (B, 28, 28)

    # Convolution as 5 MXU matmuls (one per kernel row ky); K=28, N=768.
    acc = jnp.zeros((b * OH, NLANE), jnp.float32)
    for ky in range(KH):
        xs = x[:, ky:ky + OH, :].reshape(b * OH, W)         # (B*24, 28)
        acc = acc + jnp.dot(xs, wband_ref[ky],
                            preferred_element_type=jnp.float32)

    conv = jnp.maximum(acc + bc_ref[...], 0.0)              # bias + ReLU (VPU)
    prod = conv * wl_ref[...]                               # Linear(18432, 1) weights
    per_row = jnp.sum(prod.reshape(b, OH, NLANE), axis=2)   # (B, 24)
    logits = jnp.sum(per_row, axis=1, keepdims=True) + bl_ref[...]   # (B, 1)
    o_ref[...] = jnp.broadcast_to(logits, (b, OUT_LANES))   # unmasked lane-dense store


def _prep_params(params, b_tile):
    """Rearrange PyTorch-layout parameters into kernel-friendly layouts."""
    wconv, bconv, wlin, blin = params
    w4 = wconv.reshape(COUT, KH, KW)                        # (c, ky, kx); CIN == 1

    # Band matrices: wband[ky, j, ox*32 + c] = wconv[c, 0, ky, j - ox] if 0 <= j-ox < 5
    wband = jnp.zeros((KH, W, OW, COUT), jnp.float32)
    ox = jnp.arange(OW)
    for ky in range(KH):
        for kx in range(KW):
            vals = jnp.broadcast_to(w4[:, ky, kx], (OW, COUT))
            wband = wband.at[ky, ox + kx, ox, :].set(vals)
    wband = wband.reshape(KH, W, NLANE)

    bc = jnp.tile(bconv, OW).reshape(1, NLANE)              # bc[0, ox*32+c] = bconv[c]

    # PyTorch x.view(N, -1) flattens (C, H, W) C-major: flat = c*576 + oy*24 + ox
    wl = wlin.reshape(COUT, OH, OW).transpose(1, 2, 0)      # (oy, ox, c)
    wl = wl.reshape(OH, NLANE)                              # (24, 768)
    wl_t = jnp.tile(wl, (b_tile, 1))                        # (b_tile*24, 768), VMEM-resident

    bl = blin.reshape(1, 1)
    return wband, bc, wl_t, bl


def discriminator_forward(x, params, b_tile=8):
    """x: (N, 1, 28, 28) float32 (NCHW, like PyTorch).  Returns (N, 1)."""
    assert b_tile % 8 == 0, "batch tile must be a multiple of 8 (sublane alignment)"
    N = x.shape[0]
    wband, bc, wl_t, bl = _prep_params(params, b_tile)

    x2 = x.reshape(N, H, W).astype(jnp.float32)             # single input channel
    n_tiles = (N + b_tile - 1) // b_tile
    n_pad = n_tiles * b_tile
    if n_pad != N:
        x2 = jnp.pad(x2, ((0, n_pad - N), (0, 0), (0, 0)))

    out = pl.pallas_call(
        _disc_kernel,
        out_shape=jax.ShapeDtypeStruct((n_pad, OUT_LANES), jnp.float32),
        grid_spec=pltpu.PrefetchScalarGridSpec(
            num_scalar_prefetch=0,
            grid=(n_tiles,),
            in_specs=[
                pl.BlockSpec((b_tile, H, W), lambda i: (i, 0, 0)),        # raw images
                pl.BlockSpec((KH, W, NLANE), lambda i: (0, 0, 0)),        # band conv weights
                pl.BlockSpec((1, NLANE), lambda i: (0, 0)),               # conv bias
                pl.BlockSpec((b_tile * OH, NLANE), lambda i: (0, 0)),     # linear weights
                pl.BlockSpec((1, 1), lambda i: (0, 0)),                   # linear bias
            ],
            out_specs=pl.BlockSpec((b_tile, OUT_LANES), lambda i: (i, 0)),
        ),
        compiler_params=pltpu.CompilerParams(
            dimension_semantics=("parallel",),                # shards tiles across TCs on v7x
        ),
    )(x2, wband, bc, wl_t, bl)

    return out[:N, :1]                                       # (N, 1)


def reference_forward(x, params):
    """Pure-JAX reference matching the PyTorch module exactly."""
    wconv, bconv, wlin, blin = params
    y = jax.lax.conv_general_dilated(
        x, wconv, window_strides=(1, 1), padding="VALID",
        dimension_numbers=("NCHW", "OIHW", "NCHW"))
    y = y + bconv.reshape(1, COUT, 1, 1)
    y = jnp.maximum(y, 0.0)
    y = y.reshape(x.shape[0], -1)                            # (N, 18432)
    return y @ wlin.T + blin                                 # (N, 1)


def init_params(key):
    """Deterministic synthetic parameters (shapes from Discriminator.__init__)."""
    k1, k2, k3, k4 = jax.random.split(key, 4)
    wconv = jax.random.normal(k1, (COUT, CIN, KH, KW), jnp.float32) * 0.1
    bconv = jax.random.normal(k2, (COUT,), jnp.float32) * 0.1
    wlin = jax.random.normal(k3, (1, FLAT), jnp.float32) * 0.01
    blin = jax.random.normal(k4, (1,), jnp.float32) * 0.1
    return (wconv, bconv, wlin, blin)


if __name__ == "__main__":
    root = jax.random.PRNGKey(0)
    pkey, xkey = jax.random.split(root)
    params = init_params(pkey)
    x = jax.random.normal(xkey, (2, 1, 28, 28), jnp.float32)  # batch=2, MNIST-sized

    out = discriminator_forward(x, params)
    out = jax.block_until_ready(out)

    ref = jax.block_until_ready(reference_forward(x, params))
    assert out.shape == (2, 1), f"bad output shape {out.shape}"
    assert jnp.allclose(out, ref, rtol=1e-3, atol=1e-3), (out, ref)

    print("KERNEL_OK")
</pallas_src>

<mosaic_0001>
module attributes {stable_mosaic.version = 11 : i64} {
  func.func @_disc_kernel(%arg0: i32, %arg1: memref<8x28x28xf32, #tpu.memory_space<vmem>>, %arg2: memref<5x28x768xf32, #tpu.memory_space<vmem>>, %arg3: memref<1x768xf32, #tpu.memory_space<vmem>>, %arg4: memref<192x768xf32, #tpu.memory_space<vmem>>, %arg5: memref<1x1xf32, #tpu.memory_space<vmem>>, %arg6: memref<8x128xf32, #tpu.memory_space<vmem>>) attributes {dimension_semantics = [#tpu.dimension_semantics<parallel>], iteration_bounds = array<i64: 1>, scalar_prefetch = 0 : i64, scratch_operands = 0 : i64, tpu.core_type = #tpu.core_type<tc>, window_params = [{transform_indices = @transform_0, window_bounds = array<i64: 8, 28, 28>}, {pipeline_mode = #tpu.pipeline_mode<synchronous>, transform_indices = @transform_1, window_bounds = array<i64: 5, 28, 768>}, {pipeline_mode = #tpu.pipeline_mode<synchronous>, transform_indices = @transform_2, window_bounds = array<i64: 1, 768>}, {pipeline_mode = #tpu.pipeline_mode<synchronous>, transform_indices = @transform_3, window_bounds = array<i64: 192, 768>}, {pipeline_mode = #tpu.pipeline_mode<synchronous>, transform_indices = @transform_4, window_bounds = array<i64: 1, 1>}, {transform_indices = @transform_5, window_bounds = array<i64: 8, 128>}]} {
    %c0 = arith.constant 0 : index
    %c0_0 = arith.constant 0 : index
    %c0_1 = arith.constant 0 : index
    %0 = vector.load %arg1[%c0, %c0_0, %c0_1] : memref<8x28x28xf32, #tpu.memory_space<vmem>>, vector<8x28x28xf32>
    %cst = arith.constant 0.000000e+00 : f32
    %1 = vector.broadcast %cst : f32 to vector<192x768xf32>
    %2 = vector.extract_strided_slice %0 {offsets = [0, 0, 0], sizes = [8, 24, 28], strides = [1, 1, 1]} : vector<8x28x28xf32> to vector<8x24x28xf32>
    %3 = vector.shape_cast %2 : vector<8x24x28xf32> to vector<192x28xf32>
    %c0_2 = arith.constant 0 : index
    %c0_3 = arith.constant 0 : index
    %c0_4 = arith.constant 0 : index
    %4 = vector.load %arg2[%c0_2, %c0_3, %c0_4] : memref<5x28x768xf32, #tpu.memory_space<vmem>>, vector<1x28x768xf32>
    %5 = vector.shape_cast %4 : vector<1x28x768xf32> to vector<28x768xf32>
    %cst_5 = arith.constant dense<0.000000e+00> : vector<192x768xf32>
    %6 = tpu.matmul %3, %5, %cst_5 {dimension_numbers = #tpu.dot_dimension_numbers<[1], [0], [0], [1], [0, 0, 1, 1], [], []>} : vector<192x28xf32>, vector<28x768xf32>, vector<192x768xf32> -> vector<192x768xf32>
    %7 = arith.addf %1, %6 : vector<192x768xf32>
    %8 = vector.extract_strided_slice %0 {offsets = [0, 1, 0], sizes = [8, 24, 28], strides = [1, 1, 1]} : vector<8x28x28xf32> to vector<8x24x28xf32>
    %9 = vector.shape_cast %8 : vector<8x24x28xf32> to vector<192x28xf32>
    %c1 = arith.constant 1 : index
    %c0_6 = arith.constant 0 : index
    %c0_7 = arith.constant 0 : index
    %10 = vector.load %arg2[%c1, %c0_6, %c0_7] : memref<5x28x768xf32, #tpu.memory_space<vmem>>, vector<1x28x768xf32>
    %11 = vector.shape_cast %10 : vector<1x28x768xf32> to vector<28x768xf32>
    %cst_8 = arith.constant dense<0.000000e+00> : vector<192x768xf32>
    %12 = tpu.matmul %9, %11, %cst_8 {dimension_numbers = #tpu.dot_dimension_numbers<[1], [0], [0], [1], [0, 0, 1, 1], [], []>} : vector<192x28xf32>, vector<28x768xf32>, vector<192x768xf32> -> vector<192x768xf32>
    %13 = arith.addf %7, %12 : vector<192x768xf32>
    %14 = vector.extract_strided_slice %0 {offsets = [0, 2, 0], sizes = [8, 24, 28], strides = [1, 1, 1]} : vector<8x28x28xf32> to vector<8x24x28xf32>
    %15 = vector.shape_cast %14 : vector<8x24x28xf32> to vector<192x28xf32>
    %c2 = arith.constant 2 : index
    %c0_9 = arith.constant 0 : index
    %c0_10 = arith.constant 0 : index
    %16 = vector.load %arg2[%c2, %c0_9, %c0_10] : memref<5x28x768xf32, #tpu.memory_space<vmem>>, vector<1x28x768xf32>
    %17 = vector.shape_cast %16 : vector<1x28x768xf32> to vector<28x768xf32>
    %cst_11 = arith.constant dense<0.000000e+00> : vector<192x768xf32>
    %18 = tpu.matmul %15, %17, %cst_11 {dimension_numbers = #tpu.dot_dimension_numbers<[1], [0], [0], [1], [0, 0, 1, 1], [], []>} : vector<192x28xf32>, vector<28x768xf32>, vector<192x768xf32> -> vector<192x768xf32>
    %19 = arith.addf %13, %18 : vector<192x768xf32>
    %20 = vector.extract_strided_slice %0 {offsets = [0, 3, 0], sizes = [8, 24, 28], strides = [1, 1, 1]} : vector<8x28x28xf32> to vector<8x24x28xf32>
    %21 = vector.shape_cast %20 : vector<8x24x28xf32> to vector<192x28xf32>
    %c3 = arith.constant 3 : index
    %c0_12 = arith.constant 0 : index
    %c0_13 = arith.constant 0 : index
    %22 = vector.load %arg2[%c3, %c0_12, %c0_13] : memref<5x28x768xf32, #tpu.memory_space<vmem>>, vector<1x28x768xf32>
    %23 = vector.shape_cast %22 : vector<1x28x768xf32> to vector<28x768xf32>
    %cst_14 = arith.constant dense<0.000000e+00> : vector<192x768xf32>
    %24 = tpu.matmul %21, %23, %cst_14 {dimension_numbers = #tpu.dot_dimension_numbers<[1], [0], [0], [1], [0, 0, 1, 1], [], []>} : vector<192x28xf32>, vector<28x768xf32>, vector<192x768xf32> -> vector<192x768xf32>
    %25 = arith.addf %19, %24 : vector<192x768xf32>
    %26 = vector.extract_strided_slice %0 {offsets = [0, 4, 0], sizes = [8, 24, 28], strides = [1, 1, 1]} : vector<8x28x28xf32> to vector<8x24x28xf32>
    %27 = vector.shape_cast %26 : vector<8x24x28xf32> to vector<192x28xf32>
    %c4 = arith.constant 4 : index
    %c0_15 = arith.constant 0 : index
    %c0_16 = arith.constant 0 : index
    %28 = vector.load %arg2[%c4, %c0_15, %c0_16] : memref<5x28x768xf32, #tpu.memory_space<vmem>>, vector<1x28x768xf32>
    %29 = vector.shape_cast %28 : vector<1x28x768xf32> to vector<28x768xf32>
    %cst_17 = arith.constant dense<0.000000e+00> : vector<192x768xf32>
    %30 = tpu.matmul %27, %29, %cst_17 {dimension_numbers = #tpu.dot_dimension_numbers<[1], [0], [0], [1], [0, 0, 1, 1], [], []>} : vector<192x28xf32>, vector<28x768xf32>, vector<192x768xf32> -> vector<192x768xf32>
    %31 = arith.addf %25, %30 : vector<192x768xf32>
    %c0_18 = arith.constant 0 : index
    %c0_19 = arith.constant 0 : index
    %32 = vector.load %arg3[%c0_18, %c0_19] : memref<1x768xf32, #tpu.memory_space<vmem>>, vector<1x768xf32>
    %33 = vector.broadcast %32 : vector<1x768xf32> to vector<192x768xf32>
    %34 = arith.addf %31, %33 : vector<192x768xf32>
    %cst_20 = arith.constant 0.000000e+00 : f32
    %35 = vector.broadcast %cst_20 : f32 to vector<192x768xf32>
    %36 = arith.maximumf %34, %35 : vector<192x768xf32>
    %c0_21 = arith.constant 0 : index
    %c0_22 = arith.constant 0 : index
    %37 = vector.load %arg4[%c0_21, %c0_22] : memref<192x768xf32, #tpu.memory_space<vmem>>, vector<192x768xf32>
    %38 = arith.mulf %36, %37 : vector<192x768xf32>
    %39 = vector.shape_cast %38 : vector<192x768xf32> to vector<8x24x768xf32>
    %cst_23 = arith.constant dense<0.000000e+00> : vector<8x24xf32>
    %40 = vector.multi_reduction <add>, %39, %cst_23 [2] : vector<8x24x768xf32> to vector<8x24xf32>
    %cst_24 = arith.constant dense<0.000000e+00> : vector<8xf32>
    %41 = vector.multi_reduction <add>, %40, %cst_24 [1] : vector<8x24xf32> to vector<8xf32>
    %42 = vector.shape_cast %41 : vector<8xf32> to vector<8x1xf32>
    %c0_25 = arith.constant 0 : index
    %c0_26 = arith.constant 0 : index
    %43 = vector.load %arg5[%c0_25, %c0_26] : memref<1x1xf32, #tpu.memory_space<vmem>>, vector<1x1xf32>
    %44 = vector.broadcast %43 : vector<1x1xf32> to vector<8x1xf32>
    %45 = arith.addf %42, %44 : vector<8x1xf32>
    %46 = vector.shape_cast %45 : vector<8x1xf32> to vector<8x1xf32>
    %47 = vector.broadcast %46 : vector<8x1xf32> to vector<8x128xf32>
    %c0_27 = arith.constant 0 : index
    %c0_28 = arith.constant 0 : index
    %48 = vector.load %arg6[%c0_27, %c0_28] : memref<8x128xf32, #tpu.memory_space<vmem>>, vector<8x128xf32>
    tpu.vector_store %arg6[%c0_27, %c0_28], %47 {strides = array<i32>} : memref<8x128xf32, #tpu.memory_space<vmem>>, vector<8x128xf32>,
    return
  }
  func.func @transform_0(%arg0: i32) -> (i32, i32, i32) {
    %c0_i32 = arith.constant 0 : i32
    %c0_i32_0 = arith.constant 0 : i32
    %c0_i32_1 = arith.constant 0 : i32
    return %arg0, %c0_i32, %c0_i32_0 : i32, i32, i32
  }
  func.func @transform_1(%arg0: i32) -> (i32, i32, i32) {
    %c0_i32 = arith.constant 0 : i32
    %c0_i32_0 = arith.constant 0 : i32
    %c0_i32_1 = arith.constant 0 : i32
    %c0_i32_2 = arith.constant 0 : i32
    return %c0_i32, %c0_i32_0, %c0_i32_1 : i32, i32, i32
  }
  func.func @transform_2(%arg0: i32) -> (i32, i32) {
    %c0_i32 = arith.constant 0 : i32
    %c0_i32_0 = arith.constant 0 : i32
    %c0_i32_1 = arith.constant 0 : i32
    return %c0_i32, %c0_i32_0 : i32, i32
  }
  func.func @transform_3(%arg0: i32) -> (i32, i32) {
    %c0_i32 = arith.constant 0 : i32
    %c0_i32_0 = arith.constant 0 : i32
    %c0_i32_1 = arith.constant 0 : i32
    return %c0_i32, %c0_i32_0 : i32, i32
  }
  func.func @transform_4(%arg0: i32) -> (i32, i32) {
    %c0_i32 = arith.constant 0 : i32
    %c0_i32_0 = arith.constant 0 : i32
    %c0_i32_1 = arith.constant 0 : i32
    return %c0_i32, %c0_i32_0 : i32, i32
  }
  func.func @transform_5(%arg0: i32) -> (i32, i32) {
    %c0_i32 = arith.constant 0 : i32
    %c0_i32_0 = arith.constant 0 : i32
    return %arg0, %c0_i32 : i32, i32
  }
}

</mosaic_0001>

<llo_original>
// kernel: tpu_custom_call.1
$region0: #{tpu_custom_call.1}
  #allocation0 [shape = 'u32[]', space=smem, size = 0x4, offset = 0x4, fixed_abs, tag = 'smem constant byte address 0x4 - core index']
  #allocation1 [shape = 'u32[72,128]{1,0:T(1,128)}', space=vmem, size = 0x9000, scoped, tag = 'internal scratch']
  #allocation2 [shape = 'f32[1,1]{1,0:T(1,128)S(1)}', space=vmem, size = 0x200, scoped, tag = 'scoped memory for tpu_custom_call.1']
  %s0 = inlined_call_operand.vmem [shape: f32[8,28,28], index: 0, kind: input, shape index: {}]
  %s1 = inlined_call_operand.hbm [shape: f32[5,28,768], index: 1, kind: input, shape index: {}]
  %s2 = inlined_call_operand.vmem [shape: f32[1,768], index: 2, kind: input, shape index: {}]
  %s3 = inlined_call_operand.hbm [shape: f32[192,768], index: 3, kind: input, shape index: {}]
  %s4 = inlined_call_operand.<no memory space> [shape: f32[1,1], index: 4, kind: input, shape index: {}]
  %s5 = inlined_call_operand.hbm [shape: f32[8,128], index: 5, kind: output, shape index: {}]
  %s6 = sld [smem:[#allocation0]]
  $region38: #{tpu_custom_call.1} parent=0
    _
  %s8 = ssub.s32 1, %s6
  %s9 = scalar_select 0, %s8, %s6
  %v10 = vstv %s4
  %11 = vst [vmem:[#allocation2] sm:$0x1] %v10
  $region1: #{tpu_custom_call.1} parent=0
    #allocation3 [shape = 'u8[491520]{0}', space=vmem, size = 0x78000, scoped, tag = 'input window, operand 1, single buffered']
    #allocation4 [shape = 's32[1]{0}', space=sflag, size = 0x4, scoped, tag = 'scoped memory for tpu_custom_call.1']
    #allocation5 [shape = 's32[1]{0}', space=sflag, size = 0x4, scoped, tag = 'scoped memory for tpu_custom_call.1']
    #allocation6 [shape = 'u8[589824]{0}', space=vmem, size = 0x90000, scoped, tag = 'input window, operand 3, single buffered']
    #allocation7 [shape = 's32[1]{0}', space=sflag, size = 0x4, scoped, tag = 'scoped memory for tpu_custom_call.1']
    #allocation8 [shape = 'u8[4096]{0}', space=vmem, size = 0x1000, scoped, tag = 'output window, operand 0, single buffered']
    %12 = vsyncpa [#allocation4], 0
    %13 = vsyncpa [#allocation7], 0
    %14 = vsyncpa [#allocation5], 0
    // Predicated region
    $region2: #{tpu_custom_call.1} parent=1 // pred_check
      _
    $region3: #{tpu_custom_call.1} parent=1 // pred_check_branch
      %16 = sbr.rel (0) target = $region5
    $region4: #{tpu_custom_call.1} parent=1 // pred_region
      _
    $region5: #{tpu_custom_call.1} parent=1 // pred_fallthru
      _
    // Predicated region
    $region6: #{tpu_custom_call.1} parent=1 // pred_check
      _
    $region7: #{tpu_custom_call.1} parent=1 // pred_check_branch
      %18 = sbr.rel (0) target = $region9
    $region8: #{tpu_custom_call.1} parent=1 // pred_region
      %20 = vsyncadd [#allocation4], 0
      %s21 = sshll.u32 %s1, 4
      %s22 = int_to_ptr.hbm [resolvable:$true] %s21
      %s23 = sshll.u32 [#allocation3], 4
      %s24 = int_to_ptr.vmem [resolvable:$true] %s23
      %29 = dma.hbm_to_vmem [thread:$0]  %s22, 15360, %s24, [#allocation4], 768, 768, 48
    $region9: #{tpu_custom_call.1} parent=1 // pred_fallthru
      _
    // Predicated region
    $region10: #{tpu_custom_call.1} parent=1 // pred_check
      _
    $region11: #{tpu_custom_call.1} parent=1 // pred_check_branch
      %31 = sbr.rel (0) target = $region13
    $region12: #{tpu_custom_call.1} parent=1 // pred_region
      _
    $region13: #{tpu_custom_call.1} parent=1 // pred_fallthru
      _
    // Predicated region
    $region14: #{tpu_custom_call.1} parent=1 // pred_check
      _
    $region15: #{tpu_custom_call.1} parent=1 // pred_check_branch
      %33 = sbr.rel (0) target = $region17
    $region16: #{tpu_custom_call.1} parent=1 // pred_region
      %35 = vsyncadd [#allocation7], 0
      %s36 = sshll.u32 %s3, 4
      %s37 = int_to_ptr.hbm [resolvable:$true] %s36
      %s38 = sshll.u32 [#allocation6], 4
      %s39 = int_to_ptr.vmem [resolvable:$true] %s38
      %44 = dma.hbm_to_vmem [thread:$0]  %s37, 18432, %s39, [#allocation7], 768, 768, 48
    $region17: #{tpu_custom_call.1} parent=1 // pred_fallthru
      _
    // Predicated region
    $region18: #{tpu_custom_call.1} parent=1 // pred_check
      _
    $region19: #{tpu_custom_call.1} parent=1 // pred_check_branch
      %46 = sbr.rel (0) target = $region21
    $region20: #{tpu_custom_call.1} parent=1 // pred_region
      _
    $region21: #{tpu_custom_call.1} parent=1 // pred_fallthru
      _
    // Predicated region
    $region22: #{tpu_custom_call.1} parent=1 // pred_check
      _
    $region23: #{tpu_custom_call.1} parent=1 // pred_check_branch
      %48 = sbr.rel (0) target = $region25
    $region24: #{tpu_custom_call.1} parent=1 // pred_region
      %50 = dma.done [#allocation4], 15360
    $region25: #{tpu_custom_call.1} parent=1 // pred_fallthru
      _
    // Predicated region
    $region26: #{tpu_custom_call.1} parent=1 // pred_check
      _
    $region27: #{tpu_custom_call.1} parent=1 // pred_check_branch
      %52 = sbr.rel (0) target = $region29
    $region28: #{tpu_custom_call.1} parent=1 // pred_region
      %54 = dma.done [#allocation7], 18432
    $region29: #{tpu_custom_call.1} parent=1 // pred_fallthru
      _
    %v55 = vld [vmem:[%s0] sm:$0xff]
    %v56 = vld [vmem:[%s0 + $0x8] sm:$0xff]
    %v57 = vld [vmem:[%s0 + $0x10] sm:$0xff]
    %v58 = vld [vmem:[%s0 + $0x18] sm:$0xf]
    %v59 = vld [vmem:[%s0 + $0x20] sm:$0xff]
    %v60 = vld [vmem:[%s0 + $0x28] sm:$0xff]
    %v61 = vld [vmem:[%s0 + $0x30] sm:$0xff]
    %v62 = vld [vmem:[%s0 + $0x38] sm:$0xf]
    %v63 = vld [vmem:[%s0 + $0x40] sm:$0xff]
    %v64 = vld [vmem:[%s0 + $0x48] sm:$0xff]
    %v65 = vld [vmem:[%s0 + $0x50] sm:$0xff]
    %v66 = vld [vmem:[%s0 + $0x58] sm:$0xf]
    %v67 = vld [vmem:[%s0 + $0x60] sm:$0xff]
    %v68 = vld [vmem:[%s0 + $0x68] sm:$0xff]
    %v69 = vld [vmem:[%s0 + $0x70] sm:$0xff]
    %v70 = vld [vmem:[%s0 + $0x78] sm:$0xf]
    %v71 = vld [vmem:[%s0 + $0x80] sm:$0xff]
    %v72 = vld [vmem:[%s0 + $0x88] sm:$0xff]
    %v73 = vld [vmem:[%s0 + $0x90] sm:$0xff]
    %v74 = vld [vmem:[%s0 + $0x98] sm:$0xf]
    %v75 = vld [vmem:[%s0 + $0xa0] sm:$0xff]
    %v76 = vld [vmem:[%s0 + $0xa8] sm:$0xff]
    %v77 = vld [vmem:[%s0 + $0xb0] sm:$0xff]
    %v78 = vld [vmem:[%s0 + $0xb8] sm:$0xf]
    %v79 = vld [vmem:[%s0 + $0xc0] sm:$0xff]
    %v80 = vld [vmem:[%s0 + $0xc8] sm:$0xff]
    %v81 = vld [vmem:[%s0 + $0xd0] sm:$0xff]
    %v82 = vld [vmem:[%s0 + $0xd8] sm:$0xf]
    %v83 = vld [vmem:[%s0 + $0xe0] sm:$0xff]
    %v84 = vld [vmem:[%s0 + $0xe8] sm:$0xff]
    %v85 = vld [vmem:[%s0 + $0xf0] sm:$0xff]
    %v86 = vld [vmem:[%s0 + $0xf8] sm:$0xf]
    %v87 = vld [vmem:[#allocation3] sm:$0xff]
    %v88 = vld [vmem:[#allocation3 + $0x8] sm:$0xff]
    %v89 = vld [vmem:[#allocation3 + $0x10] sm:$0xff]
    %v90 = vld [vmem:[#allocation3 + $0x18] sm:$0xff]
    %v91 = vld [vmem:[#allocation3 + $0x20] sm:$0xff]
    %v92 = vld [vmem:[#allocation3 + $0x28] sm:$0xff]
    %v93 = vld [vmem:[#allocation3 + $0x30] sm:$0xff]
    %v94 = vld [vmem:[#allocation3 + $0x38] sm:$0xff]
    %v95 = vld [vmem:[#allocation3 + $0x40] sm:$0xff]
    %v96 = vld [vmem:[#allocation3 + $0x48] sm:$0xff]
    %v97 = vld [vmem:[#allocation3 + $0x50] sm:$0xff]
    %v98 = vld [vmem:[#allocation3 + $0x58] sm:$0xff]
    %v99 = vld [vmem:[#allocation3 + $0x60] sm:$0xff]
    %v100 = vld [vmem:[#allocation3 + $0x68] sm:$0xff]
    %v101 = vld [vmem:[#allocation3 + $0x70] sm:$0xff]
    %v102 = vld [vmem:[#allocation3 + $0x78] sm:$0xff]
    %v103 = vld [vmem:[#allocation3 + $0x80] sm:$0xff]
    %v104 = vld [vmem:[#allocation3 + $0x88] sm:$0xff]
    %v105 = vld [vmem:[#allocation3 + $0x90] sm:$0xf]
    %v106 = vld [vmem:[#allocation3 + $0x98] sm:$0xf]
    %v107 = vld [vmem:[#allocation3 + $0xa0] sm:$0xf]
    %v108 = vld [vmem:[#allocation3 + $0xa8] sm:$0xf]
    %v109 = vld [vmem:[#allocation3 + $0xb0] sm:$0xf]
    %v110 = vld [vmem:[#allocation3 + $0xb8] sm:$0xf]
    %vm143 = vcmask 1046528
    %v144 = vrot.slane %v55, 1
    %v145 = vrot.slane %v56, 1
    %v146 = vsel %vm143, %v144, %v145
    %v147 = vrot.slane %v57, 1
    %v148 = vsel %vm143, %v145, %v147
    %v149 = vrot.slane %v58, 1
    %v150 = vsel %vm143, %v147, %v149
    %v151 = vrot.slane %v59, 1
    %v152 = vrot.slane %v60, 1
    %v153 = vsel %vm143, %v151, %v152
    %v154 = vrot.slane %v61, 1
    %v155 = vsel %vm143, %v152, %v154
    %v156 = vrot.slane %v62, 1
    %v157 = vsel %vm143, %v154, %v156
    %v158 = vrot.slane %v63, 1
    %v159 = vrot.slane %v64, 1
    %v160 = vsel %vm143, %v158, %v159
    %v161 = vrot.slane %v65, 1
    %v162 = vsel %vm143, %v159, %v161
    %v163 = vrot.slane %v66, 1
    %v164 = vsel %vm143, %v161, %v163
    %v165 = vrot.slane %v67, 1
    %v166 = vrot.slane %v68, 1
    %v167 = vsel %vm143, %v165, %v166
    %v168 = vrot.slane %v69, 1
    %v169 = vsel %vm143, %v166, %v168
    %v170 = vrot.slane %v70, 1
    %v171 = vsel %vm143, %v168, %v170
    %v172 = vrot.slane %v71, 1
    %v173 = vrot.slane %v72, 1
    %v174 = vsel %vm143, %v172, %v173
    %v175 = vrot.slane %v73, 1
    %v176 = vsel %vm143, %v173, %v175
    %v177 = vrot.slane %v74, 1
    %v178 = vsel %vm143, %v175, %v177
    %v179 = vrot.slane %v75, 1
    %v180 = vrot.slane %v76, 1
    %v181 = vsel %vm143, %v179, %v180
    %v182 = vrot.slane %v77, 1
    %v183 = vsel %vm143, %v180, %v182
    %v184 = vrot.slane %v78, 1
    %v185 = vsel %vm143, %v182, %v184
    %v186 = vrot.slane %v79, 1
    %v187 = vrot.slane %v80, 1
    %v188 = vsel %vm143, %v186, %v187
    %v189 = vrot.slane %v81, 1
    %v190 = vsel %vm143, %v187, %v189
    %v191 = vrot.slane %v82, 1
    %v192 = vsel %vm143, %v189, %v191
    %v193 = vrot.slane %v83, 1
    %v194 = vrot.slane %v84, 1
    %v195 = vsel %vm143, %v193, %v194
    %v196 = vrot.slane %v85, 1
    %v197 = vsel %vm143, %v194, %v196
    %v198 = vrot.slane %v86, 1
    %v199 = vsel %vm143, %v196, %v198
    %s200 = scalar_lea.vmem [#allocation3], 192
    %v201 = vld [vmem:[%s200] sm:$0xff]
    %v202 = vld [vmem:[%s200 + $0x8] sm:$0xff]
    %v203 = vld [vmem:[%s200 + $0x10] sm:$0xff]
    %v204 = vld [vmem:[%s200 + $0x18] sm:$0xff]
    %v205 = vld [vmem:[%s200 + $0x20] sm:$0xff]
    %v206 = vld [vmem:[%s200 + $0x28] sm:$0xff]
    %v207 = vld [vmem:[%s200 + $0x30] sm:$0xff]
    %v208 = vld [vmem:[%s200 + $0x38] sm:$0xff]
    %v209 = vld [vmem:[%s200 + $0x40] sm:$0xff]
    %v210 = vld [vmem:[%s200 + $0x48] sm:$0xff]
    %v211 = vld [vmem:[%s200 + $0x50] sm:$0xff]
    %v212 = vld [vmem:[%s200 + $0x58] sm:$0xff]
    %v213 = vld [vmem:[%s200 + $0x60] sm:$0xff]
    %v214 = vld [vmem:[%s200 + $0x68] sm:$0xff]
    %v215 = vld [vmem:[%s200 + $0x70] sm:$0xff]
    %v216 = vld [vmem:[%s200 + $0x78] sm:$0xff]
    %v217 = vld [vmem:[%s200 + $0x80] sm:$0xff]
    %v218 = vld [vmem:[%s200 + $0x88] sm:$0xff]
    %v219 = vld [vmem:[%s200 + $0x90] sm:$0xf]
    %v220 = vld [vmem:[%s200 + $0x98] sm:$0xf]
    %v221 = vld [vmem:[%s200 + $0xa0] sm:$0xf]
    %v222 = vld [vmem:[%s200 + $0xa8] sm:$0xf]
    %v223 = vld [vmem:[%s200 + $0xb0] sm:$0xf]
    %v224 = vld [vmem:[%s200 + $0xb8] sm:$0xf]
    %vm225 = vcmask 228352
    %v226 = vsel %vm225, %v146, 0
    %v228 = vsel %vm225, %v148, 0
    %v230 = vsel %vm225, %v150, 0
    %v232 = vsel %vm225, %v153, 0
    %v234 = vsel %vm225, %v155, 0
    %v236 = vsel %vm225, %v157, 0
    %v238 = vsel %vm225, %v160, 0
    %v240 = vsel %vm225, %v162, 0
    %v242 = vsel %vm225, %v164, 0
    %v244 = vsel %vm225, %v167, 0
    %v246 = vsel %vm225, %v169, 0
    %v248 = vsel %vm225, %v171, 0
    %v250 = vsel %vm225, %v174, 0
    %v252 = vsel %vm225, %v176, 0
    %v254 = vsel %vm225, %v178, 0
    %v256 = vsel %vm225, %v181, 0
    %v258 = vsel %vm225, %v183, 0
    %v260 = vsel %vm225, %v185, 0
    %v262 = vsel %vm225, %v188, 0
    %v264 = vsel %vm225, %v190, 0
    %v266 = vsel %vm225, %v192, 0
    %v268 = vsel %vm225, %v195, 0
    %v270 = vsel %vm225, %v197, 0
    %v272 = vsel %vm225, %v199, 0
    %vm274 = vcmask 1043456
    %v276 = vsel %vm274, %v219, 0
    %v279 = vsel %vm274, %v220, 0
    %v282 = vsel %vm274, %v221, 0
    %v285 = vsel %vm274, %v222, 0
    %v288 = vsel %vm274, %v223, 0
    %v291 = vsel %vm274, %v224, 0
    %293 = vmatpush.msra.mxu0 0.0
    %294 = vmatpush.msra.mxu0 0.0
    %295 = vmatpush.msra.mxu0 0.0
    %296 = vmatpush.msra.mxu0 0.0
    %297 = vmatpush.msra.mxu0 0.0
    %298 = vmatpush.msra.mxu0 0.0
    %299 = vmatpush.msra.mxu0 0.0
    %300 = vmatpush.msra.mxu0 0.0
    %301 = vmatpush.msra.mxu0 0.0
    %302 = vmatpush.msra.mxu0 0.0
    %303 = vmatpush.msra.mxu0 0.0
    %304 = vmatpush.msra.mxu0 0.0
    %305 = vmatpush.msra.mxu0 %v276
    %306 = vmatpush.msra.mxu0 %v213
    %307 = vmatpush.msra.mxu0 %v207
    %308 = vmatpush.msra.mxu0 %v201
    %309 = vmatmul.f32.gmra.mxu0 %v226
    %v310 = vpop.f32.mrf.mxu0
    %v311 = vadd.f32 0.0, %v310
    %312 = vmatmul.f32.gmra.mxu0 %v228
    %v313 = vpop.f32.mrf.mxu0
    %v314 = vadd.f32 0.0, %v313
    %315 = vmatmul.f32.gmra.mxu0 %v230
    %v316 = vpop.f32.mrf.mxu0
    %v317 = vadd.f32 0.0, %v316
    %318 = vmatmul.f32.gmra.mxu0 %v232
    %v319 = vpop.f32.mrf.mxu0
    %v320 = vadd.f32 0.0, %v319
    %321 = vmatmul.f32.gmra.mxu0 %v234
    %v322 = vpop.f32.mrf.mxu0
    %v323 = vadd.f32 0.0, %v322
    %324 = vmatmul.f32.gmra.mxu0 %v236
    %v325 = vpop.f32.mrf.mxu0
    %v326 = vadd.f32 0.0, %v325
    %327 = vmatmul.f32.gmra.mxu0 %v238
    %v328 = vpop.f32.mrf.mxu0
    %v329 = vadd.f32 0.0, %v328
    %330 = vmatmul.f32.gmra.mxu0 %v240
    %v331 = vpop.f32.mrf.mxu0
    %v332 = vadd.f32 0.0, %v331
    %333 = vmatmul.f32.gmra.mxu0 %v242
    %v334 = vpop.f32.mrf.mxu0
    %v335 = vadd.f32 0.0, %v334
    %336 = vmatmul.f32.gmra.mxu0 %v244
    %v337 = vpop.f32.mrf.mxu0
    %v338 = vadd.f32 0.0, %v337
    %339 = vmatmul.f32.gmra.mxu0 %v246
    %v340 = vpop.f32.mrf.mxu0
    %v341 = vadd.f32 0.0, %v340
    %342 = vmatmul.f32.gmra.mxu0 %v248
    %v343 = vpop.f32.mrf.mxu0
    %v344 = vadd.f32 0.0, %v343
    %345 = vmatmul.f32.gmra.mxu0 %v250
    %v346 = vpop.f32.mrf.mxu0
    %v347 = vadd.f32 0.0, %v346
    %348 = vmatmul.f32.gmra.mxu0 %v252
    %v349 = vpop.f32.mrf.mxu0
    %v350 = vadd.f32 0.0, %v349
    %351 = vmatmul.f32.gmra.mxu0 %v254
    %v352 = vpop.f32.mrf.mxu0
    %v353 = vadd.f32 0.0, %v352
    %354 = vmatmul.f32.gmra.mxu0 %v256
    %v355 = vpop.f32.mrf.mxu0
    %v356 = vadd.f32 0.0, %v355
    %357 = vmatmul.f32.gmra.mxu0 %v258
    %v358 = vpop.f32.mrf.mxu0
    %v359 = vadd.f32 0.0, %v358
    %360 = vmatmul.f32.gmra.mxu0 %v260
    %v361 = vpop.f32.mrf.mxu0
    %v362 = vadd.f32 0.0, %v361
    %363 = vmatmul.f32.gmra.mxu0 %v262
    %v364 = vpop.f32.mrf.mxu0
    %v365 = vadd.f32 0.0, %v364
    %366 = vmatmul.f32.gmra.mxu0 %v264
    %v367 = vpop.f32.mrf.mxu0
    %v368 = vadd.f32 0.0, %v367
    %369 = vmatmul.f32.gmra.mxu0 %v266
    %v370 = vpop.f32.mrf.mxu0
    %v371 = vadd.f32 0.0, %v370
    %372 = vmatmul.f32.gmra.mxu0 %v268
    %v373 = vpop.f32.mrf.mxu0
    %v374 = vadd.f32 0.0, %v373
    %375 = vmatmul.f32.gmra.mxu0 %v270
    %v376 = vpop.f32.mrf.mxu0
    %v377 = vadd.f32 0.0, %v376
    %378 = vmatmul.f32.gmra.mxu0 %v272
    %v379 = vpop.f32.mrf.mxu0
    %v380 = vadd.f32 0.0, %v379
    %381 = vdwg.mxu0
    %382 = vmatpush.msra.mxu0 0.0
    %383 = vmatpush.msra.mxu0 0.0
    %384 = vmatpush.msra.mxu0 0.0
    %385 = vmatpush.msra.mxu0 0.0
    %386 = vmatpush.msra.mxu0 0.0
    %387 = vmatpush.msra.mxu0 0.0
    %388 = vmatpush.msra.mxu0 0.0
    %389 = vmatpush.msra.mxu0 0.0
    %390 = vmatpush.msra.mxu0 0.0
    %391 = vmatpush.msra.mxu0 0.0
    %392 = vmatpush.msra.mxu0 0.0
    %393 = vmatpush.msra.mxu0 0.0
    %394 = vmatpush.msra.mxu0 %v279
    %395 = vmatpush.msra.mxu0 %v214
    %396 = vmatpush.msra.mxu0 %v208
    %397 = vmatpush.msra.mxu0 %v202
    %398 = vmatmul.f32.gmra.mxu0 %v226
    %v399 = vpop.f32.mrf.mxu0
    %v400 = vadd.f32 0.0, %v399
    %401 = vmatmul.f32.gmra.mxu0 %v228
    %v402 = vpop.f32.mrf.mxu0
    %v403 = vadd.f32 0.0, %v402
    %404 = vmatmul.f32.gmra.mxu0 %v230
    %v405 = vpop.f32.mrf.mxu0
    %v406 = vadd.f32 0.0, %v405
    %407 = vmatmul.f32.gmra.mxu0 %v232
    %v408 = vpop.f32.mrf.mxu0
    %v409 = vadd.f32 0.0, %v408
    %410 = vmatmul.f32.gmra.mxu0 %v234
    %v411 = vpop.f32.mrf.mxu0
    %v412 = vadd.f32 0.0, %v411
    %413 = vmatmul.f32.gmra.mxu0 %v236
    %v414 = vpop.f32.mrf.mxu0
    %v415 = vadd.f32 0.0, %v414
    %416 = vmatmul.f32.gmra.mxu0 %v238
    %v417 = vpop.f32.mrf.mxu0
    %v418 = vadd.f32 0.0, %v417
    %419 = vmatmul.f32.gmra.mxu0 %v240
    %v420 = vpop.f32.mrf.mxu0
    %v421 = vadd.f32 0.0, %v420
    %422 = vmatmul.f32.gmra.mxu0 %v242
    %v423 = vpop.f32.mrf.mxu0
    %v424 = vadd.f32 0.0, %v423
    %425 = vmatmul.f32.gmra.mxu0 %v244
    %v426 = vpop.f32.mrf.mxu0
    %v427 = vadd.f32 0.0, %v426
    %428 = vmatmul.f32.gmra.mxu0 %v246
    %v429 = vpop.f32.mrf.mxu0
    %v430 = vadd.f32 0.0, %v429
    %431 = vmatmul.f32.gmra.mxu0 %v248
    %v432 = vpop.f32.mrf.mxu0
    %v433 = vadd.f32 0.0, %v432
    %434 = vmatmul.f32.gmra.mxu0 %v250
    %v435 = vpop.f32.mrf.mxu0
    %v436 = vadd.f32 0.0, %v435
    %437 = vmatmul.f32.gmra.mxu0 %v252
    %v438 = vpop.f32.mrf.mxu0
    %v439 = vadd.f32 0.0, %v438
    %440 = vmatmul.f32.gmra.mxu0 %v254
    %v441 = vpop.f32.mrf.mxu0
    %v442 = vadd.f32 0.0, %v441
    %443 = vmatmul.f32.gmra.mxu0 %v256
    %v444 = vpop.f32.mrf.mxu0
    %v445 = vadd.f32 0.0, %v444
    %446 = vmatmul.f32.gmra.mxu0 %v258
    %v447 = vpop.f32.mrf.mxu0
    %v448 = vadd.f32 0.0, %v447
    %449 = vmatmul.f32.gmra.mxu0 %v260
    %v450 = vpop.f32.mrf.mxu0
    %v451 = vadd.f32 0.0, %v450
    %452 = vmatmul.f32.gmra.mxu0 %v262
    %v453 = vpop.f32.mrf.mxu0
    %v454 = vadd.f32 0.0, %v453
    %455 = vmatmul.f32.gmra.mxu0 %v264
    %v456 = vpop.f32.mrf.mxu0
    %v457 = vadd.f32 0.0, %v456
    %458 = vmatmul.f32.gmra.mxu0 %v266
    %v459 = vpop.f32.mrf.mxu0
    %v460 = vadd.f32 0.0, %v459
    %461 = vmatmul.f32.gmra.mxu0 %v268
    %v462 = vpop.f32.mrf.mxu0
    %v463 = vadd.f32 0.0, %v462
    %464 = vmatmul.f32.gmra.mxu0 %v270
    %v465 = vpop.f32.mrf.mxu0
    %v466 = vadd.f32 0.0, %v465
    %467 = vmatmul.f32.gmra.mxu0 %v272
    %v468 = vpop.f32.mrf.mxu0
    %v469 = vadd.f32 0.0, %v468
    %470 = vdwg.mxu0
    %471 = vmatpush.msra.mxu0 0.0
    %472 = vmatpush.msra.mxu0 0.0
    %473 = vmatpush.msra.mxu0 0.0
    %474 = vmatpush.msra.mxu0 0.0
    %475 = vmatpush.msra.mxu0 0.0
    %476 = vmatpush.msra.mxu0 0.0
    %477 = vmatpush.msra.mxu0 0.0
    %478 = vmatpush.msra.mxu0 0.0
    %479 = vmatpush.msra.mxu0 0.0
    %480 = vmatpush.msra.mxu0 0.0
    %481 = vmatpush.msra.mxu0 0.0
    %482 = vmatpush.msra.mxu0 0.0
    %483 = vmatpush.msra.mxu0 %v282
    %484 = vmatpush.msra.mxu0 %v215
    %485 = vmatpush.msra.mxu0 %v209
    %486 = vmatpush.msra.mxu0 %v203
    %487 = vmatmul.f32.gmra.mxu0 %v226
    %v488 = vpop.f32.mrf.mxu0
    %v489 = vadd.f32 0.0, %v488
    %490 = vmatmul.f32.gmra.mxu0 %v228
    %v491 = vpop.f32.mrf.mxu0
    %v492 = vadd.f32 0.0, %v491
    %493 = vmatmul.f32.gmra.mxu0 %v230
    %v494 = vpop.f32.mrf.mxu0
    %v495 = vadd.f32 0.0, %v494
    %496 = vmatmul.f32.gmra.mxu0 %v232
    %v497 = vpop.f32.mrf.mxu0
    %v498 = vadd.f32 0.0, %v497
    %499 = vmatmul.f32.gmra.mxu0 %v234
    %v500 = vpop.f32.mrf.mxu0
    %v501 = vadd.f32 0.0, %v500
    %502 = vmatmul.f32.gmra.mxu0 %v236
    %v503 = vpop.f32.mrf.mxu0
    %v504 = vadd.f32 0.0, %v503
    %505 = vmatmul.f32.gmra.mxu0 %v238
    %v506 = vpop.f32.mrf.mxu0
    %v507 = vadd.f32 0.0, %v506
    %508 = vmatmul.f32.gmra.mxu0 %v240
    %v509 = vpop.f32.mrf.mxu0
    %v510 = vadd.f32 0.0, %v509
    %511 = vmatmul.f32.gmra.mxu0 %v242
    %v512 = vpop.f32.mrf.mxu0
    %v513 = vadd.f32 0.0, %v512
    %514 = vmatmul.f32.gmra.mxu0 %v244
    %v515 = vpop.f32.mrf.mxu0
    %v516 = vadd.f32 0.0, %v515
    %517 = vmatmul.f32.gmra.mxu0 %v246
    %v518 = vpop.f32.mrf.mxu0
    %v519 = vadd.f32 0.0, %v518
    %520 = vmatmul.f32.gmra.mxu0 %v248
    %v521 = vpop.f32.mrf.mxu0
    %v522 = vadd.f32 0.0, %v521
    %523 = vmatmul.f32.gmra.mxu0 %v250
    %v524 = vpop.f32.mrf.mxu0
    %v525 = vadd.f32 0.0, %v524
    %526 = vmatmul.f32.gmra.mxu0 %v252
    %v527 = vpop.f32.mrf.mxu0
    %v528 = vadd.f32 0.0, %v527
    %529 = vmatmul.f32.gmra.mxu0 %v254
    %v530 = vpop.f32.mrf.mxu0
    %v531 = vadd.f32 0.0, %v530
    %532 = vmatmul.f32.gmra.mxu0 %v256
    %v533 = vpop.f32.mrf.mxu0
    %v534 = vadd.f32 0.0, %v533
    %535 = vmatmul.f32.gmra.mxu0 %v258
    %v536 = vpop.f32.mrf.mxu0
    %v537 = vadd.f32 0.0, %v536
    %538 = vmatmul.f32.gmra.mxu0 %v260
    %v539 = vpop.f32.mrf.mxu0
    %v540 = vadd.f32 0.0, %v539
    %541 = vmatmul.f32.gmra.mxu0 %v262
    %v542 = vpop.f32.mrf.mxu0
    %v543 = vadd.f32 0.0, %v542
    %544 = vmatmul.f32.gmra.mxu0 %v264
    %v545 = vpop.f32.mrf.mxu0
    %v546 = vadd.f32 0.0, %v545
    %547 = vmatmul.f32.gmra.mxu0 %v266
    %v548 = vpop.f32.mrf.mxu0
    %v549 = vadd.f32 0.0, %v548
    %550 = vmatmul.f32.gmra.mxu0 %v268
    %v551 = vpop.f32.mrf.mxu0
    %v552 = vadd.f32 0.0, %v551
    %553 = vmatmul.f32.gmra.mxu0 %v270
    %v554 = vpop.f32.mrf.mxu0
    %v555 = vadd.f32 0.0, %v554
    %556 = vmatmul.f32.gmra.mxu0 %v272
    %v557 = vpop.f32.mrf.mxu0
    %v558 = vadd.f32 0.0, %v557
    %559 = vdwg.mxu0
    %560 = vmatpush.msra.mxu0 0.0
    %561 = vmatpush.msra.mxu0 0.0
    %562 = vmatpush.msra.mxu0 0.0
    %563 = vmatpush.msra.mxu0 0.0
    %564 = vmatpush.msra.mxu0 0.0
    %565 = vmatpush.msra.mxu0 0.0
    %566 = vmatpush.msra.mxu0 0.0
    %567 = vmatpush.msra.mxu0 0.0
    %568 = vmatpush.msra.mxu0 0.0
    %569 = vmatpush.msra.mxu0 0.0
    %570 = vmatpush.msra.mxu0 0.0
    %571 = vmatpush.msra.mxu0 0.0
    %572 = vmatpush.msra.mxu0 %v285
    %573 = vmatpush.msra.mxu0 %v216
    %574 = vmatpush.msra.mxu0 %v210
    %575 = vmatpush.msra.mxu0 %v204
    %576 = vmatmul.f32.gmra.mxu0 %v226
    %v577 = vpop.f32.mrf.mxu0
    %v578 = vadd.f32 0.0, %v577
    %579 = vmatmul.f32.gmra.mxu0 %v228
    %v580 = vpop.f32.mrf.mxu0
    %v581 = vadd.f32 0.0, %v580
    %582 = vmatmul.f32.gmra.mxu0 %v230
    %v583 = vpop.f32.mrf.mxu0
    %v584 = vadd.f32 0.0, %v583
    %585 = vmatmul.f32.gmra.mxu0 %v232
    %v586 = vpop.f32.mrf.mxu0
    %v587 = vadd.f32 0.0, %v586
    %588 = vmatmul.f32.gmra.mxu0 %v234
    %v589 = vpop.f32.mrf.mxu0
    %v590 = vadd.f32 0.0, %v589
    %591 = vmatmul.f32.gmra.mxu0 %v236
    %v592 = vpop.f32.mrf.mxu0
    %v593 = vadd.f32 0.0, %v592
    %594 = vmatmul.f32.gmra.mxu0 %v238
    %v595 = vpop.f32.mrf.mxu0
    %v596 = vadd.f32 0.0, %v595
    %597 = vmatmul.f32.gmra.mxu0 %v240
    %v598 = vpop.f32.mrf.mxu0
    %v599 = vadd.f32 0.0, %v598
    %600 = vmatmul.f32.gmra.mxu0 %v242
    %v601 = vpop.f32.mrf.mxu0
    %v602 = vadd.f32 0.0, %v601
    %603 = vmatmul.f32.gmra.mxu0 %v244
    %v604 = vpop.f32.mrf.mxu0
    %v605 = vadd.f32 0.0, %v604
    %606 = vmatmul.f32.gmra.mxu0 %v246
    %v607 = vpop.f32.mrf.mxu0
    %v608 = vadd.f32 0.0, %v607
    %609 = vmatmul.f32.gmra.mxu0 %v248
    %v610 = vpop.f32.mrf.mxu0
    %v611 = vadd.f32 0.0, %v610
    %612 = vmatmul.f32.gmra.mxu0 %v250
    %v613 = vpop.f32.mrf.mxu0
    %v614 = vadd.f32 0.0, %v613
    %615 = vmatmul.f32.gmra.mxu0 %v252
    %v616 = vpop.f32.mrf.mxu0
    %v617 = vadd.f32 0.0, %v616
    %618 = vmatmul.f32.gmra.mxu0 %v254
    %v619 = vpop.f32.mrf.mxu0
    %v620 = vadd.f32 0.0, %v619
    %621 = vmatmul.f32.gmra.mxu0 %v256
    %v622 = vpop.f32.mrf.mxu0
    %v623 = vadd.f32 0.0, %v622
    %624 = vmatmul.f32.gmra.mxu0 %v258
    %v625 = vpop.f32.mrf.mxu0
    %v626 = vadd.f32 0.0, %v625
    %627 = vmatmul.f32.gmra.mxu0 %v260
    %v628 = vpop.f32.mrf.mxu0
    %v629 = vadd.f32 0.0, %v628
    %630 = vmatmul.f32.gmra.mxu0 %v262
    %v631 = vpop.f32.mrf.mxu0
    %v632 = vadd.f32 0.0, %v631
    %633 = vmatmul.f32.gmra.mxu0 %v264
    %v634 = vpop.f32.mrf.mxu0
    %v635 = vadd.f32 0.0, %v634
    %636 = vmatmul.f32.gmra.mxu0 %v266
    %v637 = vpop.f32.mrf.mxu0
    %v638 = vadd.f32 0.0, %v637
    %639 = vmatmul.f32.gmra.mxu0 %v268
    %v640 = vpop.f32.mrf.mxu0
    %v641 = vadd.f32 0.0, %v640
    %642 = vmatmul.f32.gmra.mxu0 %v270
    %v643 = vpop.f32.mrf.mxu0
    %v644 = vadd.f32 0.0, %v643
    %645 = vmatmul.f32.gmra.mxu0 %v272
    %v646 = vpop.f32.mrf.mxu0
    %v647 = vadd.f32 0.0, %v646
    %648 = vdwg.mxu0
    %649 = vmatpush.msra.mxu0 0.0
    %650 = vmatpush.msra.mxu0 0.0
    %651 = vmatpush.msra.mxu0 0.0
    %652 = vmatpush.msra.mxu0 0.0
    %653 = vmatpush.msra.mxu0 0.0
    %654 = vmatpush.msra.mxu0 0.0
    %655 = vmatpush.msra.mxu0 0.0
    %656 = vmatpush.msra.mxu0 0.0
    %657 = vmatpush.msra.mxu0 0.0
    %658 = vmatpush.msra.mxu0 0.0
    %659 = vmatpush.msra.mxu0 0.0
    %660 = vmatpush.msra.mxu0 0.0
    %661 = vmatpush.msra.mxu0 %v288
    %662 = vmatpush.msra.mxu0 %v217
    %663 = vmatpush.msra.mxu0 %v211
    %664 = vmatpush.msra.mxu0 %v205
    %665 = vmatmul.f32.gmra.mxu0 %v226
    %v666 = vpop.f32.mrf.mxu0
    %v667 = vadd.f32 0.0, %v666
    %668 = vmatmul.f32.gmra.mxu0 %v228
    %v669 = vpop.f32.mrf.mxu0
    %v670 = vadd.f32 0.0, %v669
    %671 = vmatmul.f32.gmra.mxu0 %v230
    %v672 = vpop.f32.mrf.mxu0
    %v673 = vadd.f32 0.0, %v672
    %674 = vmatmul.f32.gmra.mxu0 %v232
    %v675 = vpop.f32.mrf.mxu0
    %v676 = vadd.f32 0.0, %v675
    %677 = vmatmul.f32.gmra.mxu0 %v234
    %v678 = vpop.f32.mrf.mxu0
    %v679 = vadd.f32 0.0, %v678
    %680 = vmatmul.f32.gmra.mxu0 %v236
    %v681 = vpop.f32.mrf.mxu0
    %v682 = vadd.f32 0.0, %v681
    %683 = vmatmul.f32.gmra.mxu0 %v238
    %v684 = vpop.f32.mrf.mxu0
    %v685 = vadd.f32 0.0, %v684
    %686 = vmatmul.f32.gmra.mxu0 %v240
    %v687 = vpop.f32.mrf.mxu0
    %v688 = vadd.f32 0.0, %v687
    %689 = vmatmul.f32.gmra.mxu0 %v242
    %v690 = vpop.f32.mrf.mxu0
    %v691 = vadd.f32 0.0, %v690
    %692 = vmatmul.f32.gmra.mxu0 %v244
    %v693 = vpop.f32.mrf.mxu0
    %v694 = vadd.f32 0.0, %v693
    %695 = vmatmul.f32.gmra.mxu0 %v246
    %v696 = vpop.f32.mrf.mxu0
    %v697 = vadd.f32 0.0, %v696
    %698 = vmatmul.f32.gmra.mxu0 %v248
    %v699 = vpop.f32.mrf.mxu0
    %v700 = vadd.f32 0.0, %v699
    %701 = vmatmul.f32.gmra.mxu0 %v250
    %v702 = vpop.f32.mrf.mxu0
    %v703 = vadd.f32 0.0, %v702
    %704 = vmatmul.f32.gmra.mxu0 %v252
    %v705 = vpop.f32.mrf.mxu0
    %v706 = vadd.f32 0.0, %v705
    %707 = vmatmul.f32.gmra.mxu0 %v254
    %v708 = vpop.f32.mrf.mxu0
    %v709 = vadd.f32 0.0, %v708
    %710 = vmatmul.f32.gmra.mxu0 %v256
    %v711 = vpop.f32.mrf.mxu0
    %v712 = vadd.f32 0.0, %v711
    %713 = vmatmul.f32.gmra.mxu0 %v258
    %v714 = vpop.f32.mrf.mxu0
    %v715 = vadd.f32 0.0, %v714
    %716 = vmatmul.f32.gmra.mxu0 %v260
    %v717 = vpop.f32.mrf.mxu0
    %v718 = vadd.f32 0.0, %v717
    %719 = vmatmul.f32.gmra.mxu0 %v262
    %v720 = vpop.f32.mrf.mxu0
    %v721 = vadd.f32 0.0, %v720
    %722 = vmatmul.f32.gmra.mxu0 %v264
    %v723 = vpop.f32.mrf.mxu0
    %v724 = vadd.f32 0.0, %v723
    %725 = vmatmul.f32.gmra.mxu0 %v266
    %v726 = vpop.f32.mrf.mxu0
    %v727 = vadd.f32 0.0, %v726
    %728 = vmatmul.f32.gmra.mxu0 %v268
    %v729 = vpop.f32.mrf.mxu0
    %v730 = vadd.f32 0.0, %v729
    %731 = vmatmul.f32.gmra.mxu0 %v270
    %v732 = vpop.f32.mrf.mxu0
    %v733 = vadd.f32 0.0, %v732
    %734 = vmatmul.f32.gmra.mxu0 %v272
    %v735 = vpop.f32.mrf.mxu0
    %v736 = vadd.f32 0.0, %v735
    %737 = vdwg.mxu0
    %738 = vmatpush.msra.mxu0 0.0
    %739 = vmatpush.msra.mxu0 0.0
    %740 = vmatpush.msra.mxu0 0.0
    %741 = vmatpush.msra.mxu0 0.0
    %742 = vmatpush.msra.mxu0 0.0
    %743 = vmatpush.msra.mxu0 0.0
    %744 = vmatpush.msra.mxu0 0.0
    %745 = vmatpush.msra.mxu0 0.0
    %746 = vmatpush.msra.mxu0 0.0
    %747 = vmatpush.msra.mxu0 0.0
    %748 = vmatpush.msra.mxu0 0.0
    %749 = vmatpush.msra.mxu0 0.0
    %750 = vmatpush.msra.mxu0 %v291
    %751 = vmatpush.msra.mxu0 %v218
    %752 = vmatpush.msra.mxu0 %v212
    %753 = vmatpush.msra.mxu0 %v206
    %754 = vmatmul.f32.gmra.mxu0 %v226
    %v755 = vpop.f32.mrf.mxu0
    %v756 = vadd.f32 0.0, %v755
    %757 = vmatmul.f32.gmra.mxu0 %v228
    %v758 = vpop.f32.mrf.mxu0
    %v759 = vadd.f32 0.0, %v758
    %760 = vmatmul.f32.gmra.mxu0 %v230
    %v761 = vpop.f32.mrf.mxu0
    %v762 = vadd.f32 0.0, %v761
    %763 = vmatmul.f32.gmra.mxu0 %v232
    %v764 = vpop.f32.mrf.mxu0
    %v765 = vadd.f32 0.0, %v764
    %766 = vmatmul.f32.gmra.mxu0 %v234
    %v767 = vpop.f32.mrf.mxu0
    %v768 = vadd.f32 0.0, %v767
    %769 = vmatmul.f32.gmra.mxu0 %v236
    %v770 = vpop.f32.mrf.mxu0
    %v771 = vadd.f32 0.0, %v770
    %772 = vmatmul.f32.gmra.mxu0 %v238
    %v773 = vpop.f32.mrf.mxu0
    %v774 = vadd.f32 0.0, %v773
    %775 = vmatmul.f32.gmra.mxu0 %v240
    %v776 = vpop.f32.mrf.mxu0
    %v777 = vadd.f32 0.0, %v776
    %778 = vmatmul.f32.gmra.mxu0 %v242
    %v779 = vpop.f32.mrf.mxu0
    %v780 = vadd.f32 0.0, %v779
    %781 = vmatmul.f32.gmra.mxu0 %v244
    %v782 = vpop.f32.mrf.mxu0
    %v783 = vadd.f32 0.0, %v782
    %784 = vmatmul.f32.gmra.mxu0 %v246
    %v785 = vpop.f32.mrf.mxu0
    %v786 = vadd.f32 0.0, %v785
    %787 = vmatmul.f32.gmra.mxu0 %v248
    %v788 = vpop.f32.mrf.mxu0
    %v789 = vadd.f32 0.0, %v788
    %790 = vmatmul.f32.gmra.mxu0 %v250
    %v791 = vpop.f32.mrf.mxu0
    %v792 = vadd.f32 0.0, %v791
    %793 = vmatmul.f32.gmra.mxu0 %v252
    %v794 = vpop.f32.mrf.mxu0
    %v795 = vadd.f32 0.0, %v794
    %796 = vmatmul.f32.gmra.mxu0 %v254
    %v797 = vpop.f32.mrf.mxu0
    %v798 = vadd.f32 0.0, %v797
    %799 = vmatmul.f32.gmra.mxu0 %v256
    %v800 = vpop.f32.mrf.mxu0
    %v801 = vadd.f32 0.0, %v800
    %802 = vmatmul.f32.gmra.mxu0 %v258
    %v803 = vpop.f32.mrf.mxu0
    %v804 = vadd.f32 0.0, %v803
    %805 = vmatmul.f32.gmra.mxu0 %v260
    %v806 = vpop.f32.mrf.mxu0
    %v807 = vadd.f32 0.0, %v806
    %808 = vmatmul.f32.gmra.mxu0 %v262
    %v809 = vpop.f32.mrf.mxu0
    %v810 = vadd.f32 0.0, %v809
    %811 = vmatmul.f32.gmra.mxu0 %v264
    %v812 = vpop.f32.mrf.mxu0
    %v813 = vadd.f32 0.0, %v812
    %814 = vmatmul.f32.gmra.mxu0 %v266
    %v815 = vpop.f32.mrf.mxu0
    %v816 = vadd.f32 0.0, %v815
    %817 = vmatmul.f32.gmra.mxu0 %v268
    %v818 = vpop.f32.mrf.mxu0
    %v819 = vadd.f32 0.0, %v818
    %820 = vmatmul.f32.gmra.mxu0 %v270
    %v821 = vpop.f32.mrf.mxu0
    %v822 = vadd.f32 0.0, %v821
    %823 = vmatmul.f32.gmra.mxu0 %v272
    %v824 = vpop.f32.mrf.mxu0
    %v825 = vadd.f32 0.0, %v824
    %826 = vdwg.mxu0
    %v827 = vsel %vm225, %v55, 0
    %v829 = vsel %vm225, %v56, 0
    %v831 = vsel %vm225, %v57, 0
    %v833 = vsel %vm225, %v59, 0
    %v835 = vsel %vm225, %v60, 0
    %v837 = vsel %vm225, %v61, 0
    %v839 = vsel %vm225, %v63, 0
    %v841 = vsel %vm225, %v64, 0
    %v843 = vsel %vm225, %v65, 0
    %v845 = vsel %vm225, %v67, 0
    %v847 = vsel %vm225, %v68, 0
    %v849 = vsel %vm225, %v69, 0
    %v851 = vsel %vm225, %v71, 0
    %v853 = vsel %vm225, %v72, 0
    %v855 = vsel %vm225, %v73, 0
    %v857 = vsel %vm225, %v75, 0
    %v859 = vsel %vm225, %v76, 0
    %v861 = vsel %vm225, %v77, 0
    %v863 = vsel %vm225, %v79, 0
    %v865 = vsel %vm225, %v80, 0
    %v867 = vsel %vm225, %v81, 0
    %v869 = vsel %vm225, %v83, 0
    %v871 = vsel %vm225, %v84, 0
    %v873 = vsel %vm225, %v85, 0
    %v876 = vsel %vm274, %v105, 0
    %v879 = vsel %vm274, %v106, 0
    %v882 = vsel %vm274, %v107, 0
    %v885 = vsel %vm274, %v108, 0
    %v888 = vsel %vm274, %v109, 0
    %v891 = vsel %vm274, %v110, 0
    %893 = vmatpush.msra.mxu0 0.0
    %894 = vmatpush.msra.mxu0 0.0
    %895 = vmatpush.msra.mxu0 0.0
    %896 = vmatpush.msra.mxu0 0.0
    %897 = vmatpush.msra.mxu0 0.0
    %898 = vmatpush.msra.mxu0 0.0
    %899 = vmatpush.msra.mxu0 0.0
    %900 = vmatpush.msra.mxu0 0.0
    %901 = vmatpush.msra.mxu0 0.0
    %902 = vmatpush.msra.mxu0 0.0
    %903 = vmatpush.msra.mxu0 0.0
    %904 = vmatpush.msra.mxu0 0.0
    %905 = vmatpush.msra.mxu0 %v876
    %906 = vmatpush.msra.mxu0 %v99
    %907 = vmatpush.msra.mxu0 %v93
    %908 = vmatpush.msra.mxu0 %v87
    %909 = vmatmul.f32.gmra.mxu0 %v827
    %v910 = vpop.f32.mrf.mxu0
    %v911 = vadd.f32 %v311, %v910
    %912 = vmatmul.f32.gmra.mxu0 %v829
    %v913 = vpop.f32.mrf.mxu0
    %v914 = vadd.f32 %v314, %v913
    %915 = vmatmul.f32.gmra.mxu0 %v831
    %v916 = vpop.f32.mrf.mxu0
    %v917 = vadd.f32 %v317, %v916
    %918 = vmatmul.f32.gmra.mxu0 %v833
    %v919 = vpop.f32.mrf.mxu0
    %v920 = vadd.f32 %v320, %v919
    %921 = vmatmul.f32.gmra.mxu0 %v835
    %v922 = vpop.f32.mrf.mxu0
    %v923 = vadd.f32 %v323, %v922
    %924 = vmatmul.f32.gmra.mxu0 %v837
    %v925 = vpop.f32.mrf.mxu0
    %v926 = vadd.f32 %v326, %v925
    %927 = vmatmul.f32.gmra.mxu0 %v839
    %v928 = vpop.f32.mrf.mxu0
    %v929 = vadd.f32 %v329, %v928
    %930 = vmatmul.f32.gmra.mxu0 %v841
    %v931 = vpop.f32.mrf.mxu0
    %v932 = vadd.f32 %v332, %v931
    %933 = vmatmul.f32.gmra.mxu0 %v843
    %v934 = vpop.f32.mrf.mxu0
    %v935 = vadd.f32 %v335, %v934
    %936 = vmatmul.f32.gmra.mxu0 %v845
    %v937 = vpop.f32.mrf.mxu0
    %v938 = vadd.f32 %v338, %v937
    %939 = vmatmul.f32.gmra.mxu0 %v847
    %v940 = vpop.f32.mrf.mxu0
    %v941 = vadd.f32 %v341, %v940
    %942 = vmatmul.f32.gmra.mxu0 %v849
    %v943 = vpop.f32.mrf.mxu0
    %v944 = vadd.f32 %v344, %v943
    %945 = vmatmul.f32.gmra.mxu0 %v851
    %v946 = vpop.f32.mrf.mxu0
    %v947 = vadd.f32 %v347, %v946
    %948 = vmatmul.f32.gmra.mxu0 %v853
    %v949 = vpop.f32.mrf.mxu0
    %v950 = vadd.f32 %v350, %v949
    %951 = vmatmul.f32.gmra.mxu0 %v855
    %v952 = vpop.f32.mrf.mxu0
    %v953 = vadd.f32 %v353, %v952
    %954 = vmatmul.f32.gmra.mxu0 %v857
    %v955 = vpop.f32.mrf.mxu0
    %v956 = vadd.f32 %v356, %v955
    %957 = vmatmul.f32.gmra.mxu0 %v859
    %v958 = vpop.f32.mrf.mxu0
    %v959 = vadd.f32 %v359, %v958
    %960 = vmatmul.f32.gmra.mxu0 %v861
    %v961 = vpop.f32.mrf.mxu0
    %v962 = vadd.f32 %v362, %v961
    %963 = vmatmul.f32.gmra.mxu0 %v863
    %v964 = vpop.f32.mrf.mxu0
    %v965 = vadd.f32 %v365, %v964
    %966 = vmatmul.f32.gmra.mxu0 %v865
    %v967 = vpop.f32.mrf.mxu0
    %v968 = vadd.f32 %v368, %v967
    %969 = vmatmul.f32.gmra.mxu0 %v867
    %v970 = vpop.f32.mrf.mxu0
    %v971 = vadd.f32 %v371, %v970
    %972 = vmatmul.f32.gmra.mxu0 %v869
    %v973 = vpop.f32.mrf.mxu0
    %v974 = vadd.f32 %v374, %v973
    %975 = vmatmul.f32.gmra.mxu0 %v871
    %v976 = vpop.f32.mrf.mxu0
    %v977 = vadd.f32 %v377, %v976
    %978 = vmatmul.f32.gmra.mxu0 %v873
    %v979 = vpop.f32.mrf.mxu0
    %v980 = vadd.f32 %v380, %v979
    %981 = vdwg.mxu0
    %982 = vmatpush.msra.mxu0 0.0
    %983 = vmatpush.msra.mxu0 0.0
    %984 = vmatpush.msra.mxu0 0.0
    %985 = vmatpush.msra.mxu0 0.0
    %986 = vmatpush.msra.mxu0 0.0
    %987 = vmatpush.msra.mxu0 0.0
    %988 = vmatpush.msra.mxu0 0.0
    %989 = vmatpush.msra.mxu0 0.0
    %990 = vmatpush.msra.mxu0 0.0
    %991 = vmatpush.msra.mxu0 0.0
    %992 = vmatpush.msra.mxu0 0.0
    %993 = vmatpush.msra.mxu0 0.0
    %994 = vmatpush.msra.mxu0 %v879
    %995 = vmatpush.msra.mxu0 %v100
    %996 = vmatpush.msra.mxu0 %v94
    %997 = vmatpush.msra.mxu0 %v88
    %998 = vmatmul.f32.gmra.mxu0 %v827
    %v999 = vpop.f32.mrf.mxu0
    %v1000 = vadd.f32 %v400, %v999
    %1001 = vmatmul.f32.gmra.mxu0 %v829
    %v1002 = vpop.f32.mrf.mxu0
    %v1003 = vadd.f32 %v403, %v1002
    %1004 = vmatmul.f32.gmra.mxu0 %v831
    %v1005 = vpop.f32.mrf.mxu0
    %v1006 = vadd.f32 %v406, %v1005
    %1007 = vmatmul.f32.gmra.mxu0 %v833
    %v1008 = vpop.f32.mrf.mxu0
    %v1009 = vadd.f32 %v409, %v1008
    %1010 = vmatmul.f32.gmra.mxu0 %v835
    %v1011 = vpop.f32.mrf.mxu0
    %v1012 = vadd.f32 %v412, %v1011
    %1013 = vmatmul.f32.gmra.mxu0 %v837
    %v1014 = vpop.f32.mrf.mxu0
    %v1015 = vadd.f32 %v415, %v1014
    %1016 = vmatmul.f32.gmra.mxu0 %v839
    %v1017 = vpop.f32.mrf.mxu0
    %v1018 = vadd.f32 %v418, %v1017
    %1019 = vmatmul.f32.gmra.mxu0 %v841
    %v1020 = vpop.f32.mrf.mxu0
    %v1021 = vadd.f32 %v421, %v1020
    %1022 = vmatmul.f32.gmra.mxu0 %v843
    %v1023 = vpop.f32.mrf.mxu0
    %v1024 = vadd.f32 %v424, %v1023
    %1025 = vmatmul.f32.gmra.mxu0 %v845
    %v1026 = vpop.f32.mrf.mxu0
    %v1027 = vadd.f32 %v427, %v1026
    %1028 = vmatmul.f32.gmra.mxu0 %v847
    %v1029 = vpop.f32.mrf.mxu0
    %v1030 = vadd.f32 %v430, %v1029
    %1031 = vmatmul.f32.gmra.mxu0 %v849
    %v1032 = vpop.f32.mrf.mxu0
    %v1033 = vadd.f32 %v433, %v1032
    %1034 = vmatmul.f32.gmra.mxu0 %v851
    %v1035 = vpop.f32.mrf.mxu0
    %v1036 = vadd.f32 %v436, %v1035
    %1037 = vmatmul.f32.gmra.mxu0 %v853
    %v1038 = vpop.f32.mrf.mxu0
    %v1039 = vadd.f32 %v439, %v1038
    %1040 = vmatmul.f32.gmra.mxu0 %v855
    %v1041 = vpop.f32.mrf.mxu0
    %v1042 = vadd.f32 %v442, %v1041
    %1043 = vmatmul.f32.gmra.mxu0 %v857
    %v1044 = vpop.f32.mrf.mxu0
    %v1045 = vadd.f32 %v445, %v1044
    %1046 = vmatmul.f32.gmra.mxu0 %v859
    %v1047 = vpop.f32.mrf.mxu0
    %v1048 = vadd.f32 %v448, %v1047
    %1049 = vmatmul.f32.gmra.mxu0 %v861
    %v1050 = vpop.f32.mrf.mxu0
    %v1051 = vadd.f32 %v451, %v1050
    %1052 = vmatmul.f32.gmra.mxu0 %v863
    %v1053 = vpop.f32.mrf.mxu0
    %v1054 = vadd.f32 %v454, %v1053
    %1055 = vmatmul.f32.gmra.mxu0 %v865
    %v1056 = vpop.f32.mrf.mxu0
    %v1057 = vadd.f32 %v457, %v1056
    %1058 = vmatmul.f32.gmra.mxu0 %v867
    %v1059 = vpop.f32.mrf.mxu0
    %v1060 = vadd.f32 %v460, %v1059
    %1061 = vmatmul.f32.gmra.mxu0 %v869
    %v1062 = vpop.f32.mrf.mxu0
    %v1063 = vadd.f32 %v463, %v1062
    %1064 = vmatmul.f32.gmra.mxu0 %v871
    %v1065 = vpop.f32.mrf.mxu0
    %v1066 = vadd.f32 %v466, %v1065
    %1067 = vmatmul.f32.gmra.mxu0 %v873
    %v1068 = vpop.f32.mrf.mxu0
    %v1069 = vadd.f32 %v469, %v1068
    %1070 = vdwg.mxu0
    %1071 = vmatpush.msra.mxu0 0.0
    %1072 = vmatpush.msra.mxu0 0.0
    %1073 = vmatpush.msra.mxu0 0.0
    %1074 = vmatpush.msra.mxu0 0.0
    %1075 = vmatpush.msra.mxu0 0.0
    %1076 = vmatpush.msra.mxu0 0.0
    %1077 = vmatpush.msra.mxu0 0.0
    %1078 = vmatpush.msra.mxu0 0.0
    %1079 = vmatpush.msra.mxu0 0.0
    %1080 = vmatpush.msra.mxu0 0.0
    %1081 = vmatpush.msra.mxu0 0.0
    %1082 = vmatpush.msra.mxu0 0.0
    %1083 = vmatpush.msra.mxu0 %v882
    %1084 = vmatpush.msra.mxu0 %v101
    %1085 = vmatpush.msra.mxu0 %v95
    %1086 = vmatpush.msra.mxu0 %v89
    %1087 = vmatmul.f32.gmra.mxu0 %v827
    %v1088 = vpop.f32.mrf.mxu0
    %v1089 = vadd.f32 %v489, %v1088
    %1090 = vmatmul.f32.gmra.mxu0 %v829
    %v1091 = vpop.f32.mrf.mxu0
    %v1092 = vadd.f32 %v492, %v1091
    %1093 = vmatmul.f32.gmra.mxu0 %v831
    %v1094 = vpop.f32.mrf.mxu0
    %v1095 = vadd.f32 %v495, %v1094
    %1096 = vmatmul.f32.gmra.mxu0 %v833
    %v1097 = vpop.f32.mrf.mxu0
    %v1098 = vadd.f32 %v498, %v1097
    %1099 = vmatmul.f32.gmra.mxu0 %v835
    %v1100 = vpop.f32.mrf.mxu0
    %v1101 = vadd.f32 %v501, %v1100
    %1102 = vmatmul.f32.gmra.mxu0 %v837
    %v1103 = vpop.f32.mrf.mxu0
    %v1104 = vadd.f32 %v504, %v1103
    %1105 = vmatmul.f32.gmra.mxu0 %v839
    %v1106 = vpop.f32.mrf.mxu0
    %v1107 = vadd.f32 %v507, %v1106
    %1108 = vmatmul.f32.gmra.mxu0 %v841
    %v1109 = vpop.f32.mrf.mxu0
    %v1110 = vadd.f32 %v510, %v1109
    %1111 = vmatmul.f32.gmra.mxu0 %v843
    %v1112 = vpop.f32.mrf.mxu0
    %v1113 = vadd.f32 %v513, %v1112
    %1114 = vmatmul.f32.gmra.mxu0 %v845
    %v1115 = vpop.f32.mrf.mxu0
    %v1116 = vadd.f32 %v516, %v1115
    %1117 = vmatmul.f32.gmra.mxu0 %v847
    %v1118 = vpop.f32.mrf.mxu0
    %v1119 = vadd.f32 %v519, %v1118
    %1120 = vmatmul.f32.gmra.mxu0 %v849
    %v1121 = vpop.f32.mrf.mxu0
    %v1122 = vadd.f32 %v522, %v1121
    %1123 = vmatmul.f32.gmra.mxu0 %v851
    %v1124 = vpop.f32.mrf.mxu0
    %v1125 = vadd.f32 %v525, %v1124
    %1126 = vmatmul.f32.gmra.mxu0 %v853
    %v1127 = vpop.f32.mrf.mxu0
    %v1128 = vadd.f32 %v528, %v1127
    %1129 = vmatmul.f32.gmra.mxu0 %v855
    %v1130 = vpop.f32.mrf.mxu0
    %v1131 = vadd.f32 %v531, %v1130
    %1132 = vmatmul.f32.gmra.mxu0 %v857
    %v1133 = vpop.f32.mrf.mxu0
    %v1134 = vadd.f32 %v534, %v1133
    %1135 = vmatmul.f32.gmra.mxu0 %v859
    %v1136 = vpop.f32.mrf.mxu0
    %v1137 = vadd.f32 %v537, %v1136
    %1138 = vmatmul.f32.gmra.mxu0 %v861
    %v1139 = vpop.f32.mrf.mxu0
    %v1140 = vadd.f32 %v540, %v1139
    %1141 = vmatmul.f32.gmra.mxu0 %v863
    %v1142 = vpop.f32.mrf.mxu0
    %v1143 = vadd.f32 %v543, %v1142
    %1144 = vmatmul.f32.gmra.mxu0 %v865
    %v1145 = vpop.f32.mrf.mxu0
    %v1146 = vadd.f32 %v546, %v1145
    %1147 = vmatmul.f32.gmra.mxu0 %v867
    %v1148 = vpop.f32.mrf.mxu0
    %v1149 = vadd.f32 %v549, %v1148
    %1150 = vmatmul.f32.gmra.mxu0 %v869
    %v1151 = vpop.f32.mrf.mxu0
    %v1152 = vadd.f32 %v552, %v1151
    %1153 = vmatmul.f32.gmra.mxu0 %v871
    %v1154 = vpop.f32.mrf.mxu0
    %v1155 = vadd.f32 %v555, %v1154
    %1156 = vmatmul.f32.gmra.mxu0 %v873
    %v1157 = vpop.f32.mrf.mxu0
    %v1158 = vadd.f32 %v558, %v1157
    %1159 = vdwg.mxu0
    %1160 = vmatpush.msra.mxu0 0.0
    %1161 = vmatpush.msra.mxu0 0.0
    %1162 = vmatpush.msra.mxu0 0.0
    %1163 = vmatpush.msra.mxu0 0.0
    %1164 = vmatpush.msra.mxu0 0.0
    %1165 = vmatpush.msra.mxu0 0.0
    %1166 = vmatpush.msra.mxu0 0.0
    %1167 = vmatpush.msra.mxu0 0.0
    %1168 = vmatpush.msra.mxu0 0.0
    %1169 = vmatpush.msra.mxu0 0.0
    %1170 = vmatpush.msra.mxu0 0.0
    %1171 = vmatpush.msra.mxu0 0.0
    %1172 = vmatpush.msra.mxu0 %v885
    %1173 = vmatpush.msra.mxu0 %v102
    %1174 = vmatpush.msra.mxu0 %v96
    %1175 = vmatpush.msra.mxu0 %v90
    %1176 = vmatmul.f32.gmra.mxu0 %v827
    %v1177 = vpop.f32.mrf.mxu0
    %v1178 = vadd.f32 %v578, %v1177
    %1179 = vmatmul.f32.gmra.mxu0 %v829
    %v1180 = vpop.f32.mrf.mxu0
    %v1181 = vadd.f32 %v581, %v1180
    %1182 = vmatmul.f32.gmra.mxu0 %v831
    %v1183 = vpop.f32.mrf.mxu0
    %v1184 = vadd.f32 %v584, %v1183
    %1185 = vmatmul.f32.gmra.mxu0 %v833
    %v1186 = vpop.f32.mrf.mxu0
    %v1187 = vadd.f32 %v587, %v1186
    %1188 = vmatmul.f32.gmra.mxu0 %v835
    %v1189 = vpop.f32.mrf.mxu0
    %v1190 = vadd.f32 %v590, %v1189
    %1191 = vmatmul.f32.gmra.mxu0 %v837
    %v1192 = vpop.f32.mrf.mxu0
    %v1193 = vadd.f32 %v593, %v1192
    %1194 = vmatmul.f32.gmra.mxu0 %v839
    %v1195 = vpop.f32.mrf.mxu0
    %v1196 = vadd.f32 %v596, %v1195
    %1197 = vmatmul.f32.gmra.mxu0 %v841
    %v1198 = vpop.f32.mrf.mxu0
    %v1199 = vadd.f32 %v599, %v1198
    %1200 = vmatmul.f32.gmra.mxu0 %v843
    %v1201 = vpop.f32.mrf.mxu0
    %v1202 = vadd.f32 %v602, %v1201
    %1203 = vmatmul.f32.gmra.mxu0 %v845
    %v1204 = vpop.f32.mrf.mxu0
    %v1205 = vadd.f32 %v605, %v1204
    %1206 = vmatmul.f32.gmra.mxu0 %v847
    %v1207 = vpop.f32.mrf.mxu0
    %v1208 = vadd.f32 %v608, %v1207
    %1209 = vmatmul.f32.gmra.mxu0 %v849
    %v1210 = vpop.f32.mrf.mxu0
    %v1211 = vadd.f32 %v611, %v1210
    %1212 = vmatmul.f32.gmra.mxu0 %v851
    %v1213 = vpop.f32.mrf.mxu0
    %v1214 = vadd.f32 %v614, %v1213
    %1215 = vmatmul.f32.gmra.mxu0 %v853
    %v1216 = vpop.f32.mrf.mxu0
    %v1217 = vadd.f32 %v617, %v1216
    %1218 = vmatmul.f32.gmra.mxu0 %v855
    %v1219 = vpop.f32.mrf.mxu0
    %v1220 = vadd.f32 %v620, %v1219
    %1221 = vmatmul.f32.gmra.mxu0 %v857
    %v1222 = vpop.f32.mrf.mxu0
    %v1223 = vadd.f32 %v623, %v1222
    %1224 = vmatmul.f32.gmra.mxu0 %v859
    %v1225 = vpop.f32.mrf.mxu0
    %v1226 = vadd.f32 %v626, %v1225
    %1227 = vmatmul.f32.gmra.mxu0 %v861
    %v1228 = vpop.f32.mrf.mxu0
    %v1229 = vadd.f32 %v629, %v1228
    %1230 = vmatmul.f32.gmra.mxu0 %v863
    %v1231 = vpop.f32.mrf.mxu0
    %v1232 = vadd.f32 %v632, %v1231
    %1233 = vmatmul.f32.gmra.mxu0 %v865
    %v1234 = vpop.f32.mrf.mxu0
    %v1235 = vadd.f32 %v635, %v1234
    %1236 = vmatmul.f32.gmra.mxu0 %v867
    %v1237 = vpop.f32.mrf.mxu0
    %v1238 = vadd.f32 %v638, %v1237
    %1239 = vmatmul.f32.gmra.mxu0 %v869
    %v1240 = vpop.f32.mrf.mxu0
    %v1241 = vadd.f32 %v641, %v1240
    %1242 = vmatmul.f32.gmra.mxu0 %v871
    %v1243 = vpop.f32.mrf.mxu0
    %v1244 = vadd.f32 %v644, %v1243
    %1245 = vmatmul.f32.gmra.mxu0 %v873
    %v1246 = vpop.f32.mrf.mxu0
    %v1247 = vadd.f32 %v647, %v1246
    %1248 = vdwg.mxu0
    %1249 = vmatpush.msra.mxu0 0.0
    %1250 = vmatpush.msra.mxu0 0.0
    %1251 = vmatpush.msra.mxu0 0.0
    %1252 = vmatpush.msra.mxu0 0.0
    %1253 = vmatpush.msra.mxu0 0.0
    %1254 = vmatpush.msra.mxu0 0.0
    %1255 = vmatpush.msra.mxu0 0.0
    %1256 = vmatpush.msra.mxu0 0.0
    %1257 = vmatpush.msra.mxu0 0.0
    %1258 = vmatpush.msra.mxu0 0.0
    %1259 = vmatpush.msra.mxu0 0.0
    %1260 = vmatpush.msra.mxu0 0.0
    %1261 = vmatpush.msra.mxu0 %v888
    %1262 = vmatpush.msra.mxu0 %v103
    %1263 = vmatpush.msra.mxu0 %v97
    %1264 = vmatpush.msra.mxu0 %v91
    %1265 = vmatmul.f32.gmra.mxu0 %v827
    %v1266 = vpop.f32.mrf.mxu0
    %v1267 = vadd.f32 %v667, %v1266
    %1268 = vmatmul.f32.gmra.mxu0 %v829
    %v1269 = vpop.f32.mrf.mxu0
    %v1270 = vadd.f32 %v670, %v1269
    %1271 = vmatmul.f32.gmra.mxu0 %v831
    %v1272 = vpop.f32.mrf.mxu0
    %v1273 = vadd.f32 %v673, %v1272
    %1274 = vmatmul.f32.gmra.mxu0 %v833
    %v1275 = vpop.f32.mrf.mxu0
    %v1276 = vadd.f32 %v676, %v1275
    %1277 = vmatmul.f32.gmra.mxu0 %v835
    %v1278 = vpop.f32.mrf.mxu0
    %v1279 = vadd.f32 %v679, %v1278
    %1280 = vmatmul.f32.gmra.mxu0 %v837
    %v1281 = vpop.f32.mrf.mxu0
    %v1282 = vadd.f32 %v682, %v1281
    %1283 = vmatmul.f32.gmra.mxu0 %v839
    %v1284 = vpop.f32.mrf.mxu0
    %v1285 = vadd.f32 %v685, %v1284
    %1286 = vmatmul.f32.gmra.mxu0 %v841
    %v1287 = vpop.f32.mrf.mxu0
    %v1288 = vadd.f32 %v688, %v1287
    %1289 = vmatmul.f32.gmra.mxu0 %v843
    %v1290 = vpop.f32.mrf.mxu0
    %v1291 = vadd.f32 %v691, %v1290
    %1292 = vmatmul.f32.gmra.mxu0 %v845
    %v1293 = vpop.f32.mrf.mxu0
    %v1294 = vadd.f32 %v694, %v1293
    %1295 = vmatmul.f32.gmra.mxu0 %v847
    %v1296 = vpop.f32.mrf.mxu0
    %v1297 = vadd.f32 %v697, %v1296
    %1298 = vmatmul.f32.gmra.mxu0 %v849
    %v1299 = vpop.f32.mrf.mxu0
    %v1300 = vadd.f32 %v700, %v1299
    %1301 = vmatmul.f32.gmra.mxu0 %v851
    %v1302 = vpop.f32.mrf.mxu0
    %v1303 = vadd.f32 %v703, %v1302
    %1304 = vmatmul.f32.gmra.mxu0 %v853
    %v1305 = vpop.f32.mrf.mxu0
    %v1306 = vadd.f32 %v706, %v1305
    %1307 = vmatmul.f32.gmra.mxu0 %v855
    %v1308 = vpop.f32.mrf.mxu0
    %v1309 = vadd.f32 %v709, %v1308
    %1310 = vmatmul.f32.gmra.mxu0 %v857
    %v1311 = vpop.f32.mrf.mxu0
    %v1312 = vadd.f32 %v712, %v1311
    %1313 = vmatmul.f32.gmra.mxu0 %v859
    %v1314 = vpop.f32.mrf.mxu0
    %v1315 = vadd.f32 %v715, %v1314
    %1316 = vmatmul.f32.gmra.mxu0 %v861
    %v1317 = vpop.f32.mrf.mxu0
    %v1318 = vadd.f32 %v718, %v1317
    %1319 = vmatmul.f32.gmra.mxu0 %v863
    %v1320 = vpop.f32.mrf.mxu0
    %v1321 = vadd.f32 %v721, %v1320
    %1322 = vmatmul.f32.gmra.mxu0 %v865
    %v1323 = vpop.f32.mrf.mxu0
    %v1324 = vadd.f32 %v724, %v1323
    %1325 = vmatmul.f32.gmra.mxu0 %v867
    %v1326 = vpop.f32.mrf.mxu0
    %v1327 = vadd.f32 %v727, %v1326
    %1328 = vmatmul.f32.gmra.mxu0 %v869
    %v1329 = vpop.f32.mrf.mxu0
    %v1330 = vadd.f32 %v730, %v1329
    %1331 = vmatmul.f32.gmra.mxu0 %v871
    %v1332 = vpop.f32.mrf.mxu0
    %v1333 = vadd.f32 %v733, %v1332
    %1334 = vmatmul.f32.gmra.mxu0 %v873
    %v1335 = vpop.f32.mrf.mxu0
    %v1336 = vadd.f32 %v736, %v1335
    %1337 = vdwg.mxu0
    %1338 = vmatpush.msra.mxu0 0.0
    %1339 = vmatpush.msra.mxu0 0.0
    %1340 = vmatpush.msra.mxu0 0.0
    %1341 = vmatpush.msra.mxu0 0.0
    %1342 = vmatpush.msra.mxu0 0.0
    %1343 = vmatpush.msra.mxu0 0.0
    %1344 = vmatpush.msra.mxu0 0.0
    %1345 = vmatpush.msra.mxu0 0.0
    %1346 = vmatpush.msra.mxu0 0.0
    %1347 = vmatpush.msra.mxu0 0.0
    %1348 = vmatpush.msra.mxu0 0.0
    %1349 = vmatpush.msra.mxu0 0.0
    %1350 = vmatpush.msra.mxu0 %v891
    %1351 = vmatpush.msra.mxu0 %v104
    %1352 = vmatpush.msra.mxu0 %v98
    %1353 = vmatpush.msra.mxu0 %v92
    %1354 = vmatmul.f32.gmra.mxu0 %v827
    %v1355 = vpop.f32.mrf.mxu0
    %v1356 = vadd.f32 %v756, %v1355
    %1357 = vmatmul.f32.gmra.mxu0 %v829
    %v1358 = vpop.f32.mrf.mxu0
    %v1359 = vadd.f32 %v759, %v1358
    %1360 = vmatmul.f32.gmra.mxu0 %v831
    %v1361 = vpop.f32.mrf.mxu0
    %v1362 = vadd.f32 %v762, %v1361
    %1363 = vmatmul.f32.gmra.mxu0 %v833
    %v1364 = vpop.f32.mrf.mxu0
    %v1365 = vadd.f32 %v765, %v1364
    %1366 = vmatmul.f32.gmra.mxu0 %v835
    %v1367 = vpop.f32.mrf.mxu0
    %v1368 = vadd.f32 %v768, %v1367
    %1369 = vmatmul.f32.gmra.mxu0 %v837
    %v1370 = vpop.f32.mrf.mxu0
    %v1371 = vadd.f32 %v771, %v1370
    %1372 = vmatmul.f32.gmra.mxu0 %v839
    %v1373 = vpop.f32.mrf.mxu0
    %v1374 = vadd.f32 %v774, %v1373
    %1375 = vmatmul.f32.gmra.mxu0 %v841
    %v1376 = vpop.f32.mrf.mxu0
    %v1377 = vadd.f32 %v777, %v1376
    %1378 = vmatmul.f32.gmra.mxu0 %v843
    %v1379 = vpop.f32.mrf.mxu0
    %v1380 = vadd.f32 %v780, %v1379
    %1381 = vmatmul.f32.gmra.mxu0 %v845
    %v1382 = vpop.f32.mrf.mxu0
    %v1383 = vadd.f32 %v783, %v1382
    %1384 = vmatmul.f32.gmra.mxu0 %v847
    %v1385 = vpop.f32.mrf.mxu0
    %v1386 = vadd.f32 %v786, %v1385
    %1387 = vmatmul.f32.gmra.mxu0 %v849
    %v1388 = vpop.f32.mrf.mxu0
    %v1389 = vadd.f32 %v789, %v1388
    %1390 = vmatmul.f32.gmra.mxu0 %v851
    %v1391 = vpop.f32.mrf.mxu0
    %v1392 = vadd.f32 %v792, %v1391
    %1393 = vmatmul.f32.gmra.mxu0 %v853
    %v1394 = vpop.f32.mrf.mxu0
    %v1395 = vadd.f32 %v795, %v1394
    %1396 = vmatmul.f32.gmra.mxu0 %v855
    %v1397 = vpop.f32.mrf.mxu0
    %v1398 = vadd.f32 %v798, %v1397
    %1399 = vmatmul.f32.gmra.mxu0 %v857
    %v1400 = vpop.f32.mrf.mxu0
    %v1401 = vadd.f32 %v801, %v1400
    %1402 = vmatmul.f32.gmra.mxu0 %v859
    %v1403 = vpop.f32.mrf.mxu0
    %v1404 = vadd.f32 %v804, %v1403
    %1405 = vmatmul.f32.gmra.mxu0 %v861
    %v1406 = vpop.f32.mrf.mxu0
    %v1407 = vadd.f32 %v807, %v1406
    %1408 = vmatmul.f32.gmra.mxu0 %v863
    %v1409 = vpop.f32.mrf.mxu0
    %v1410 = vadd.f32 %v810, %v1409
    %1411 = vmatmul.f32.gmra.mxu0 %v865
    %v1412 = vpop.f32.mrf.mxu0
    %v1413 = vadd.f32 %v813, %v1412
    %1414 = vmatmul.f32.gmra.mxu0 %v867
    %v1415 = vpop.f32.mrf.mxu0
    %v1416 = vadd.f32 %v816, %v1415
    %1417 = vmatmul.f32.gmra.mxu0 %v869
    %v1418 = vpop.f32.mrf.mxu0
    %v1419 = vadd.f32 %v819, %v1418
    %1420 = vmatmul.f32.gmra.mxu0 %v871
    %v1421 = vpop.f32.mrf.mxu0
    %v1422 = vadd.f32 %v822, %v1421
    %1423 = vmatmul.f32.gmra.mxu0 %v873
    %v1424 = vpop.f32.mrf.mxu0
    %v1425 = vadd.f32 %v825, %v1424
    %1426 = vdwg.mxu0
    %vm1427 = vcmask 1045504
    %v1428 = vrot.slane %v55, 2
    %v1429 = vrot.slane %v56, 2
    %v1430 = vsel %vm1427, %v1428, %v1429
    %v1431 = vrot.slane %v57, 2
    %v1432 = vsel %vm1427, %v1429, %v1431
    %v1433 = vrot.slane %v58, 2
    %v1434 = vsel %vm1427, %v1431, %v1433
    %v1435 = vrot.slane %v59, 2
    %v1436 = vrot.slane %v60, 2
    %v1437 = vsel %vm1427, %v1435, %v1436
    %v1438 = vrot.slane %v61, 2
    %v1439 = vsel %vm1427, %v1436, %v1438
    %v1440 = vrot.slane %v62, 2
    %v1441 = vsel %vm1427, %v1438, %v1440
    %v1442 = vrot.slane %v63, 2
    %v1443 = vrot.slane %v64, 2
    %v1444 = vsel %vm1427, %v1442, %v1443
    %v1445 = vrot.slane %v65, 2
    %v1446 = vsel %vm1427, %v1443, %v1445
    %v1447 = vrot.slane %v66, 2
    %v1448 = vsel %vm1427, %v1445, %v1447
    %v1449 = vrot.slane %v67, 2
    %v1450 = vrot.slane %v68, 2
    %v1451 = vsel %vm1427, %v1449, %v1450
    %v1452 = vrot.slane %v69, 2
    %v1453 = vsel %vm1427, %v1450, %v1452
    %v1454 = vrot.slane %v70, 2
    %v1455 = vsel %vm1427, %v1452, %v1454
    %v1456 = vrot.slane %v71, 2
    %v1457 = vrot.slane %v72, 2
    %v1458 = vsel %vm1427, %v1456, %v1457
    %v1459 = vrot.slane %v73, 2
    %v1460 = vsel %vm1427, %v1457, %v1459
    %v1461 = vrot.slane %v74, 2
    %v1462 = vsel %vm1427, %v1459, %v1461
    %v1463 = vrot.slane %v75, 2
    %v1464 = vrot.slane %v76, 2
    %v1465 = vsel %vm1427, %v1463, %v1464
    %v1466 = vrot.slane %v77, 2
    %v1467 = vsel %vm1427, %v1464, %v1466
    %v1468 = vrot.slane %v78, 2
    %v1469 = vsel %vm1427, %v1466, %v1468
    %v1470 = vrot.slane %v79, 2
    %v1471 = vrot.slane %v80, 2
    %v1472 = vsel %vm1427, %v1470, %v1471
    %v1473 = vrot.slane %v81, 2
    %v1474 = vsel %vm1427, %v1471, %v1473
    %v1475 = vrot.slane %v82, 2
    %v1476 = vsel %vm1427, %v1473, %v1475
    %v1477 = vrot.slane %v83, 2
    %v1478 = vrot.slane %v84, 2
    %v1479 = vsel %vm1427, %v1477, %v1478
    %v1480 = vrot.slane %v85, 2
    %v1481 = vsel %vm1427, %v1478, %v1480
    %v1482 = vrot.slane %v86, 2
    %v1483 = vsel %vm1427, %v1480, %v1482
    %s1484 = scalar_lea.vmem [#allocation3], 384
    %v1485 = vld [vmem:[%s1484] sm:$0xff]
    %v1486 = vld [vmem:[%s1484 + $0x8] sm:$0xff]
    %v1487 = vld [vmem:[%s1484 + $0x10] sm:$0xff]
    %v1488 = vld [vmem:[%s1484 + $0x18] sm:$0xff]
    %v1489 = vld [vmem:[%s1484 + $0x20] sm:$0xff]
    %v1490 = vld [vmem:[%s1484 + $0x28] sm:$0xff]
    %v1491 = vld [vmem:[%s1484 + $0x30] sm:$0xff]
    %v1492 = vld [vmem:[%s1484 + $0x38] sm:$0xff]
    %v1493 = vld [vmem:[%s1484 + $0x40] sm:$0xff]
    %v1494 = vld [vmem:[%s1484 + $0x48] sm:$0xff]
    %v1495 = vld [vmem:[%s1484 + $0x50] sm:$0xff]
    %v1496 = vld [vmem:[%s1484 + $0x58] sm:$0xff]
    %v1497 = vld [vmem:[%s1484 + $0x60] sm:$0xff]
    %v1498 = vld [vmem:[%s1484 + $0x68] sm:$0xff]
    %v1499 = vld [vmem:[%s1484 + $0x70] sm:$0xff]
    %v1500 = vld [vmem:[%s1484 + $0x78] sm:$0xff]
    %v1501 = vld [vmem:[%s1484 + $0x80] sm:$0xff]
    %v1502 = vld [vmem:[%s1484 + $0x88] sm:$0xff]
    %v1503 = vld [vmem:[%s1484 + $0x90] sm:$0xf]
    %v1504 = vld [vmem:[%s1484 + $0x98] sm:$0xf]
    %v1505 = vld [vmem:[%s1484 + $0xa0] sm:$0xf]
    %v1506 = vld [vmem:[%s1484 + $0xa8] sm:$0xf]
    %v1507 = vld [vmem:[%s1484 + $0xb0] sm:$0xf]
    %v1508 = vld [vmem:[%s1484 + $0xb8] sm:$0xf]
    %v1509 = vsel %vm225, %v1430, 0
    %v1511 = vsel %vm225, %v1432, 0
    %v1513 = vsel %vm225, %v1434, 0
    %v1515 = vsel %vm225, %v1437, 0
    %v1517 = vsel %vm225, %v1439, 0
    %v1519 = vsel %vm225, %v1441, 0
    %v1521 = vsel %vm225, %v1444, 0
    %v1523 = vsel %vm225, %v1446, 0
    %v1525 = vsel %vm225, %v1448, 0
    %v1527 = vsel %vm225, %v1451, 0
    %v1529 = vsel %vm225, %v1453, 0
    %v1531 = vsel %vm225, %v1455, 0
    %v1533 = vsel %vm225, %v1458, 0
    %v1535 = vsel %vm225, %v1460, 0
    %v1537 = vsel %vm225, %v1462, 0
    %v1539 = vsel %vm225, %v1465, 0
    %v1541 = vsel %vm225, %v1467, 0
    %v1543 = vsel %vm225, %v1469, 0
    %v1545 = vsel %vm225, %v1472, 0
    %v1547 = vsel %vm225, %v1474, 0
    %v1549 = vsel %vm225, %v1476, 0
    %v1551 = vsel %vm225, %v1479, 0
    %v1553 = vsel %vm225, %v1481, 0
    %v1555 = vsel %vm225, %v1483, 0
    %v1558 = vsel %vm274, %v1503, 0
    %v1561 = vsel %vm274, %v1504, 0
    %v1564 = vsel %vm274, %v1505, 0
    %v1567 = vsel %vm274, %v1506, 0
    %v1570 = vsel %vm274, %v1507, 0
    %v1573 = vsel %vm274, %v1508, 0
    %1575 = vmatpush.msra.mxu0 0.0
    %1576 = vmatpush.msra.mxu0 0.0
    %1577 = vmatpush.msra.mxu0 0.0
    %1578 = vmatpush.msra.mxu0 0.0
    %1579 = vmatpush.msra.mxu0 0.0
    %1580 = vmatpush.msra.mxu0 0.0
    %1581 = vmatpush.msra.mxu0 0.0
    %1582 = vmatpush.msra.mxu0 0.0
    %1583 = vmatpush.msra.mxu0 0.0
    %1584 = vmatpush.msra.mxu0 0.0
    %1585 = vmatpush.msra.mxu0 0.0
    %1586 = vmatpush.msra.mxu0 0.0
    %1587 = vmatpush.msra.mxu0 %v1558
    %1588 = vmatpush.msra.mxu0 %v1497
    %1589 = vmatpush.msra.mxu0 %v1491
    %1590 = vmatpush.msra.mxu0 %v1485
    %1591 = vmatmul.f32.gmra.mxu0 %v1509
    %v1592 = vpop.f32.mrf.mxu0
    %v1593 = vadd.f32 0.0, %v1592
    %1594 = vmatmul.f32.gmra.mxu0 %v1511
    %v1595 = vpop.f32.mrf.mxu0
    %v1596 = vadd.f32 0.0, %v1595
    %1597 = vmatmul.f32.gmra.mxu0 %v1513
    %v1598 = vpop.f32.mrf.mxu0
    %v1599 = vadd.f32 0.0, %v1598
    %1600 = vmatmul.f32.gmra.mxu0 %v1515
    %v1601 = vpop.f32.mrf.mxu0
    %v1602 = vadd.f32 0.0, %v1601
    %1603 = vmatmul.f32.gmra.mxu0 %v1517
    %v1604 = vpop.f32.mrf.mxu0
    %v1605 = vadd.f32 0.0, %v1604
    %1606 = vmatmul.f32.gmra.mxu0 %v1519
    %v1607 = vpop.f32.mrf.mxu0
    %v1608 = vadd.f32 0.0, %v1607
    %1609 = vmatmul.f32.gmra.mxu0 %v1521
    %v1610 = vpop.f32.mrf.mxu0
    %v1611 = vadd.f32 0.0, %v1610
    %1612 = vmatmul.f32.gmra.mxu0 %v1523
    %v1613 = vpop.f32.mrf.mxu0
    %v1614 = vadd.f32 0.0, %v1613
    %1615 = vmatmul.f32.gmra.mxu0 %v1525
    %v1616 = vpop.f32.mrf.mxu0
    %v1617 = vadd.f32 0.0, %v1616
    %1618 = vmatmul.f32.gmra.mxu0 %v1527
    %v1619 = vpop.f32.mrf.mxu0
    %v1620 = vadd.f32 0.0, %v1619
    %1621 = vmatmul.f32.gmra.mxu0 %v1529
    %v1622 = vpop.f32.mrf.mxu0
    %v1623 = vadd.f32 0.0, %v1622
    %1624 = vmatmul.f32.gmra.mxu0 %v1531
    %v1625 = vpop.f32.mrf.mxu0
    %v1626 = vadd.f32 0.0, %v1625
    %1627 = vmatmul.f32.gmra.mxu0 %v1533
    %v1628 = vpop.f32.mrf.mxu0
    %v1629 = vadd.f32 0.0, %v1628
    %1630 = vmatmul.f32.gmra.mxu0 %v1535
    %v1631 = vpop.f32.mrf.mxu0
    %v1632 = vadd.f32 0.0, %v1631
    %1633 = vmatmul.f32.gmra.mxu0 %v1537
    %v1634 = vpop.f32.mrf.mxu0
    %v1635 = vadd.f32 0.0, %v1634
    %1636 = vmatmul.f32.gmra.mxu0 %v1539
    %v1637 = vpop.f32.mrf.mxu0
    %v1638 = vadd.f32 0.0, %v1637
    %1639 = vmatmul.f32.gmra.mxu0 %v1541
    %v1640 = vpop.f32.mrf.mxu0
    %v1641 = vadd.f32 0.0, %v1640
    %1642 = vmatmul.f32.gmra.mxu0 %v1543
    %v1643 = vpop.f32.mrf.mxu0
    %v1644 = vadd.f32 0.0, %v1643
    %1645 = vmatmul.f32.gmra.mxu0 %v1545
    %v1646 = vpop.f32.mrf.mxu0
    %v1647 = vadd.f32 0.0, %v1646
    %1648 = vmatmul.f32.gmra.mxu0 %v1547
    %v1649 = vpop.f32.mrf.mxu0
    %v1650 = vadd.f32 0.0, %v1649
    %1651 = vmatmul.f32.gmra.mxu0 %v1549
    %v1652 = vpop.f32.mrf.mxu0
    %v1653 = vadd.f32 0.0, %v1652
    %1654 = vmatmul.f32.gmra.mxu0 %v1551
    %v1655 = vpop.f32.mrf.mxu0
    %v1656 = vadd.f32 0.0, %v1655
    %1657 = vmatmul.f32.gmra.mxu0 %v1553
    %v1658 = vpop.f32.mrf.mxu0
    %v1659 = vadd.f32 0.0, %v1658
    %1660 = vmatmul.f32.gmra.mxu0 %v1555
    %v1661 = vpop.f32.mrf.mxu0
    %v1662 = vadd.f32 0.0, %v1661
    %1663 = vdwg.mxu0
    %1664 = vmatpush.msra.mxu0 0.0
    %1665 = vmatpush.msra.mxu0 0.0
    %1666 = vmatpush.msra.mxu0 0.0
    %1667 = vmatpush.msra.mxu0 0.0
    %1668 = vmatpush.msra.mxu0 0.0
    %1669 = vmatpush.msra.mxu0 0.0
    %1670 = vmatpush.msra.mxu0 0.0
    %1671 = vmatpush.msra.mxu0 0.0
    %1672 = vmatpush.msra.mxu0 0.0
    %1673 = vmatpush.msra.mxu0 0.0
    %1674 = vmatpush.msra.mxu0 0.0
    %1675 = vmatpush.msra.mxu0 0.0
    %1676 = vmatpush.msra.mxu0 %v1561
    %1677 = vmatpush.msra.mxu0 %v1498
    %1678 = vmatpush.msra.mxu0 %v1492
    %1679 = vmatpush.msra.mxu0 %v1486
    %1680 = vmatmul.f32.gmra.mxu0 %v1509
    %v1681 = vpop.f32.mrf.mxu0
    %v1682 = vadd.f32 0.0, %v1681
    %1683 = vmatmul.f32.gmra.mxu0 %v1511
    %v1684 = vpop.f32.mrf.mxu0
    %v1685 = vadd.f32 0.0, %v1684
    %1686 = vmatmul.f32.gmra.mxu0 %v1513
    %v1687 = vpop.f32.mrf.mxu0
    %v1688 = vadd.f32 0.0, %v1687
    %1689 = vmatmul.f32.gmra.mxu0 %v1515
    %v1690 = vpop.f32.mrf.mxu0
    %v1691 = vadd.f32 0.0, %v1690
    %1692 = vmatmul.f32.gmra.mxu0 %v1517
    %v1693 = vpop.f32.mrf.mxu0
    %v1694 = vadd.f32 0.0, %v1693
    %1695 = vmatmul.f32.gmra.mxu0 %v1519
    %v1696 = vpop.f32.mrf.mxu0
    %v1697 = vadd.f32 0.0, %v1696
    %1698 = vmatmul.f32.gmra.mxu0 %v1521
    %v1699 = vpop.f32.mrf.mxu0
    %v1700 = vadd.f32 0.0, %v1699
    %1701 = vmatmul.f32.gmra.mxu0 %v1523
    %v1702 = vpop.f32.mrf.mxu0
    %v1703 = vadd.f32 0.0, %v1702
    %1704 = vmatmul.f32.gmra.mxu0 %v1525
    %v1705 = vpop.f32.mrf.mxu0
    %v1706 = vadd.f32 0.0, %v1705
    %1707 = vmatmul.f32.gmra.mxu0 %v1527
    %v1708 = vpop.f32.mrf.mxu0
    %v1709 = vadd.f32 0.0, %v1708
    %1710 = vmatmul.f32.gmra.mxu0 %v1529
    %v1711 = vpop.f32.mrf.mxu0
    %v1712 = vadd.f32 0.0, %v1711
    %1713 = vmatmul.f32.gmra.mxu0 %v1531
    %v1714 = vpop.f32.mrf.mxu0
    %v1715 = vadd.f32 0.0, %v1714
    %1716 = vmatmul.f32.gmra.mxu0 %v1533
    %v1717 = vpop.f32.mrf.mxu0
    %v1718 = vadd.f32 0.0, %v1717
    %1719 = vmatmul.f32.gmra.mxu0 %v1535
    %v1720 = vpop.f32.mrf.mxu0
    %v1721 = vadd.f32 0.0, %v1720
    %1722 = vmatmul.f32.gmra.mxu0 %v1537
    %v1723 = vpop.f32.mrf.mxu0
    %v1724 = vadd.f32 0.0, %v1723
    %1725 = vmatmul.f32.gmra.mxu0 %v1539
    %v1726 = vpop.f32.mrf.mxu0
    %v1727 = vadd.f32 0.0, %v1726
    %1728 = vmatmul.f32.gmra.mxu0 %v1541
    %v1729 = vpop.f32.mrf.mxu0
    %v1730 = vadd.f32 0.0, %v1729
    %1731 = vmatmul.f32.gmra.mxu0 %v1543
    %v1732 = vpop.f32.mrf.mxu0
    %v1733 = vadd.f32 0.0, %v1732
    %1734 = vmatmul.f32.gmra.mxu0 %v1545
    %v1735 = vpop.f32.mrf.mxu0
    %v1736 = vadd.f32 0.0, %v1735
    %1737 = vmatmul.f32.gmra.mxu0 %v1547
    %v1738 = vpop.f32.mrf.mxu0
    %v1739 = vadd.f32 0.0, %v1738
    %1740 = vmatmul.f32.gmra.mxu0 %v1549
    %v1741 = vpop.f32.mrf.mxu0
    %v1742 = vadd.f32 0.0, %v1741
    %1743 = vmatmul.f32.gmra.mxu0 %v1551
    %v1744 = vpop.f32.mrf.mxu0
    %v1745 = vadd.f32 0.0, %v1744
    %1746 = vmatmul.f32.gmra.mxu0 %v1553
    %v1747 = vpop.f32.mrf.mxu0
    %v1748 = vadd.f32 0.0, %v1747
    %1749 = vmatmul.f32.gmra.mxu0 %v1555
    %v1750 = vpop.f32.mrf.mxu0
    %v1751 = vadd.f32 0.0, %v1750
    %1752 = vdwg.mxu0
    %1753 = vmatpush.msra.mxu0 0.0
    %1754 = vmatpush.msra.mxu0 0.0
    %1755 = vmatpush.msra.mxu0 0.0
    %1756 = vmatpush.msra.mxu0 0.0
    %1757 = vmatpush.msra.mxu0 0.0
    %1758 = vmatpush.msra.mxu0 0.0
    %1759 = vmatpush.msra.mxu0 0.0
    %1760 = vmatpush.msra.mxu0 0.0
    %1761 = vmatpush.msra.mxu0 0.0
    %1762 = vmatpush.msra.mxu0 0.0
    %1763 = vmatpush.msra.mxu0 0.0
    %1764 = vmatpush.msra.mxu0 0.0
    %1765 = vmatpush.msra.mxu0 %v1564
    %1766 = vmatpush.msra.mxu0 %v1499
    %1767 = vmatpush.msra.mxu0 %v1493
    %1768 = vmatpush.msra.mxu0 %v1487
    %1769 = vmatmul.f32.gmra.mxu0 %v1509
    %v1770 = vpop.f32.mrf.mxu0
    %v1771 = vadd.f32 0.0, %v1770
    %1772 = vmatmul.f32.gmra.mxu0 %v1511
    %v1773 = vpop.f32.mrf.mxu0
    %v1774 = vadd.f32 0.0, %v1773
    %1775 = vmatmul.f32.gmra.mxu0 %v1513
    %v1776 = vpop.f32.mrf.mxu0
    %v1777 = vadd.f32 0.0, %v1776
    %1778 = vmatmul.f32.gmra.mxu0 %v1515
    %v1779 = vpop.f32.mrf.mxu0
    %v1780 = vadd.f32 0.0, %v1779
    %1781 = vmatmul.f32.gmra.mxu0 %v1517
    %v1782 = vpop.f32.mrf.mxu0
    %v1783 = vadd.f32 0.0, %v1782
    %1784 = vmatmul.f32.gmra.mxu0 %v1519
    %v1785 = vpop.f32.mrf.mxu0
    %v1786 = vadd.f32 0.0, %v1785
    %1787 = vmatmul.f32.gmra.mxu0 %v1521
    %v1788 = vpop.f32.mrf.mxu0
    %v1789 = vadd.f32 0.0, %v1788
    %1790 = vmatmul.f32.gmra.mxu0 %v1523
    %v1791 = vpop.f32.mrf.mxu0
    %v1792 = vadd.f32 0.0, %v1791
    %1793 = vmatmul.f32.gmra.mxu0 %v1525
    %v1794 = vpop.f32.mrf.mxu0
    %v1795 = vadd.f32 0.0, %v1794
    %1796 = vmatmul.f32.gmra.mxu0 %v1527
    %v1797 = vpop.f32.mrf.mxu0
    %v1798 = vadd.f32 0.0, %v1797
    %1799 = vmatmul.f32.gmra.mxu0 %v1529
    %v1800 = vpop.f32.mrf.mxu0
    %v1801 = vadd.f32 0.0, %v1800
    %1802 = vmatmul.f32.gmra.mxu0 %v1531
    %v1803 = vpop.f32.mrf.mxu0
    %v1804 = vadd.f32 0.0, %v1803
    %1805 = vmatmul.f32.gmra.mxu0 %v1533
    %v1806 = vpop.f32.mrf.mxu0
    %v1807 = vadd.f32 0.0, %v1806
    %1808 = vmatmul.f32.gmra.mxu0 %v1535
    %v1809 = vpop.f32.mrf.mxu0
    %v1810 = vadd.f32 0.0, %v1809
    %1811 = vmatmul.f32.gmra.mxu0 %v1537
    %v1812 = vpop.f32.mrf.mxu0
    %v1813 = vadd.f32 0.0, %v1812
    %1814 = vmatmul.f32.gmra.mxu0 %v1539
    %v1815 = vpop.f32.mrf.mxu0
    %v1816 = vadd.f32 0.0, %v1815
    %1817 = vmatmul.f32.gmra.mxu0 %v1541
    %v1818 = vpop.f32.mrf.mxu0
    %v1819 = vadd.f32 0.0, %v1818
    %1820 = vmatmul.f32.gmra.mxu0 %v1543
    %v1821 = vpop.f32.mrf.mxu0
    %v1822 = vadd.f32 0.0, %v1821
    %1823 = vmatmul.f32.gmra.mxu0 %v1545
    %v1824 = vpop.f32.mrf.mxu0
    %v1825 = vadd.f32 0.0, %v1824
    %1826 = vmatmul.f32.gmra.mxu0 %v1547
    %v1827 = vpop.f32.mrf.mxu0
    %v1828 = vadd.f32 0.0, %v1827
    %1829 = vmatmul.f32.gmra.mxu0 %v1549
    %v1830 = vpop.f32.mrf.mxu0
    %v1831 = vadd.f32 0.0, %v1830
    %1832 = vmatmul.f32.gmra.mxu0 %v1551
    %v1833 = vpop.f32.mrf.mxu0
    %v1834 = vadd.f32 0.0, %v1833
    %1835 = vmatmul.f32.gmra.mxu0 %v1553
    %v1836 = vpop.f32.mrf.mxu0
    %v1837 = vadd.f32 0.0, %v1836
    %1838 = vmatmul.f32.gmra.mxu0 %v1555
    %v1839 = vpop.f32.mrf.mxu0
    %v1840 = vadd.f32 0.0, %v1839
    %1841 = vdwg.mxu0
    %1842 = vmatpush.msra.mxu0 0.0
    %1843 = vmatpush.msra.mxu0 0.0
    %1844 = vmatpush.msra.mxu0 0.0
    %1845 = vmatpush.msra.mxu0 0.0
    %1846 = vmatpush.msra.mxu0 0.0
    %1847 = vmatpush.msra.mxu0 0.0
    %1848 = vmatpush.msra.mxu0 0.0
    %1849 = vmatpush.msra.mxu0 0.0
    %1850 = vmatpush.msra.mxu0 0.0
    %1851 = vmatpush.msra.mxu0 0.0
    %1852 = vmatpush.msra.mxu0 0.0
    %1853 = vmatpush.msra.mxu0 0.0
    %1854 = vmatpush.msra.mxu0 %v1567
    %1855 = vmatpush.msra.mxu0 %v1500
    %1856 = vmatpush.msra.mxu0 %v1494
    %1857 = vmatpush.msra.mxu0 %v1488
    %1858 = vmatmul.f32.gmra.mxu0 %v1509
    %v1859 = vpop.f32.mrf.mxu0
    %v1860 = vadd.f32 0.0, %v1859
    %1861 = vmatmul.f32.gmra.mxu0 %v1511
    %v1862 = vpop.f32.mrf.mxu0
    %v1863 = vadd.f32 0.0, %v1862
    %1864 = vmatmul.f32.gmra.mxu0 %v1513
    %v1865 = vpop.f32.mrf.mxu0
    %v1866 = vadd.f32 0.0, %v1865
    %1867 = vmatmul.f32.gmra.mxu0 %v1515
    %v1868 = vpop.f32.mrf.mxu0
    %v1869 = vadd.f32 0.0, %v1868
    %1870 = vmatmul.f32.gmra.mxu0 %v1517
    %v1871 = vpop.f32.mrf.mxu0
    %v1872 = vadd.f32 0.0, %v1871
    %1873 = vmatmul.f32.gmra.mxu0 %v1519
    %v1874 = vpop.f32.mrf.mxu0
    %v1875 = vadd.f32 0.0, %v1874
    %1876 = vmatmul.f32.gmra.mxu0 %v1521
    %v1877 = vpop.f32.mrf.mxu0
    %v1878 = vadd.f32 0.0, %v1877
    %1879 = vmatmul.f32.gmra.mxu0 %v1523
    %v1880 = vpop.f32.mrf.mxu0
    %v1881 = vadd.f32 0.0, %v1880
    %1882 = vmatmul.f32.gmra.mxu0 %v1525
    %v1883 = vpop.f32.mrf.mxu0
    %v1884 = vadd.f32 0.0, %v1883
    %1885 = vmatmul.f32.gmra.mxu0 %v1527
    %v1886 = vpop.f32.mrf.mxu0
    %v1887 = vadd.f32 0.0, %v1886
    %1888 = vmatmul.f32.gmra.mxu0 %v1529
    %v1889 = vpop.f32.mrf.mxu0
    %v1890 = vadd.f32 0.0, %v1889
    %1891 = vmatmul.f32.gmra.mxu0 %v1531
    %v1892 = vpop.f32.mrf.mxu0
    %v1893 = vadd.f32 0.0, %v1892
    %1894 = vmatmul.f32.gmra.mxu0 %v1533
    %v1895 = vpop.f32.mrf.mxu0
    %v1896 = vadd.f32 0.0, %v1895
    %1897 = vmatmul.f32.gmra.mxu0 %v1535
    %v1898 = vpop.f32.mrf.mxu0
    %v1899 = vadd.f32 0.0, %v1898
    %1900 = vmatmul.f32.gmra.mxu0 %v1537
    %v1901 = vpop.f32.mrf.mxu0
    %v1902 = vadd.f32 0.0, %v1901
    %1903 = vmatmul.f32.gmra.mxu0 %v1539
    %v1904 = vpop.f32.mrf.mxu0
    %v1905 = vadd.f32 0.0, %v1904
    %1906 = vmatmul.f32.gmra.mxu0 %v1541
    %v1907 = vpop.f32.mrf.mxu0
    %v1908 = vadd.f32 0.0, %v1907
    %1909 = vmatmul.f32.gmra.mxu0 %v1543
    %v1910 = vpop.f32.mrf.mxu0
    %v1911 = vadd.f32 0.0, %v1910
    %1912 = vmatmul.f32.gmra.mxu0 %v1545
    %v1913 = vpop.f32.mrf.mxu0
    %v1914 = vadd.f32 0.0, %v1913
    %1915 = vmatmul.f32.gmra.mxu0 %v1547
    %v1916 = vpop.f32.mrf.mxu0
    %v1917 = vadd.f32 0.0, %v1916
    %1918 = vmatmul.f32.gmra.mxu0 %v1549
    %v1919 = vpop.f32.mrf.mxu0
    %v1920 = vadd.f32 0.0, %v1919
    %1921 = vmatmul.f32.gmra.mxu0 %v1551
    %v1922 = vpop.f32.mrf.mxu0
    %v1923 = vadd.f32 0.0, %v1922
    %1924 = vmatmul.f32.gmra.mxu0 %v1553
    %v1925 = vpop.f32.mrf.mxu0
    %v1926 = vadd.f32 0.0, %v1925
    %1927 = vmatmul.f32.gmra.mxu0 %v1555
    %v1928 = vpop.f32.mrf.mxu0
    %v1929 = vadd.f32 0.0, %v1928
    %1930 = vdwg.mxu0
    %1931 = vmatpush.msra.mxu0 0.0
    %1932 = vmatpush.msra.mxu0 0.0
    %1933 = vmatpush.msra.mxu0 0.0
    %1934 = vmatpush.msra.mxu0 0.0
    %1935 = vmatpush.msra.mxu0 0.0
    %1936 = vmatpush.msra.mxu0 0.0
    %1937 = vmatpush.msra.mxu0 0.0
    %1938 = vmatpush.msra.mxu0 0.0
    %1939 = vmatpush.msra.mxu0 0.0
    %1940 = vmatpush.msra.mxu0 0.0
    %1941 = vmatpush.msra.mxu0 0.0
    %1942 = vmatpush.msra.mxu0 0.0
    %1943 = vmatpush.msra.mxu0 %v1570
    %1944 = vmatpush.msra.mxu0 %v1501
    %1945 = vmatpush.msra.mxu0 %v1495
    %1946 = vmatpush.msra.mxu0 %v1489
    %1947 = vmatmul.f32.gmra.mxu0 %v1509
    %v1948 = vpop.f32.mrf.mxu0
    %v1949 = vadd.f32 0.0, %v1948
    %1950 = vmatmul.f32.gmra.mxu0 %v1511
    %v1951 = vpop.f32.mrf.mxu0
    %v1952 = vadd.f32 0.0, %v1951
    %1953 = vmatmul.f32.gmra.mxu0 %v1513
    %v1954 = vpop.f32.mrf.mxu0
    %v1955 = vadd.f32 0.0, %v1954
    %1956 = vmatmul.f32.gmra.mxu0 %v1515
    %v1957 = vpop.f32.mrf.mxu0
    %v1958 = vadd.f32 0.0, %v1957
    %1959 = vmatmul.f32.gmra.mxu0 %v1517
    %v1960 = vpop.f32.mrf.mxu0
    %v1961 = vadd.f32 0.0, %v1960
    %1962 = vmatmul.f32.gmra.mxu0 %v1519
    %v1963 = vpop.f32.mrf.mxu0
    %v1964 = vadd.f32 0.0, %v1963
    %1965 = vmatmul.f32.gmra.mxu0 %v1521
    %v1966 = vpop.f32.mrf.mxu0
    %v1967 = vadd.f32 0.0, %v1966
    %1968 = vmatmul.f32.gmra.mxu0 %v1523
    %v1969 = vpop.f32.mrf.mxu0
    %v1970 = vadd.f32 0.0, %v1969
    %1971 = vmatmul.f32.gmra.mxu0 %v1525
    %v1972 = vpop.f32.mrf.mxu0
    %v1973 = vadd.f32 0.0, %v1972
    %1974 = vmatmul.f32.gmra.mxu0 %v1527
    %v1975 = vpop.f32.mrf.mxu0
    %v1976 = vadd.f32 0.0, %v1975
    %1977 = vmatmul.f32.gmra.mxu0 %v1529
    %v1978 = vpop.f32.mrf.mxu0
    %v1979 = vadd.f32 0.0, %v1978
    %1980 = vmatmul.f32.gmra.mxu0 %v1531
    %v1981 = vpop.f32.mrf.mxu0
    %v1982 = vadd.f32 0.0, %v1981
    %1983 = vmatmul.f32.gmra.mxu0 %v1533
    %v1984 = vpop.f32.mrf.mxu0
    %v1985 = vadd.f32 0.0, %v1984
    %1986 = vmatmul.f32.gmra.mxu0 %v1535
    %v1987 = vpop.f32.mrf.mxu0
    %v1988 = vadd.f32 0.0, %v1987
    %1989 = vmatmul.f32.gmra.mxu0 %v1537
    %v1990 = vpop.f32.mrf.mxu0
    %v1991 = vadd.f32 0.0, %v1990
    %1992 = vmatmul.f32.gmra.mxu0 %v1539
    %v1993 = vpop.f32.mrf.mxu0
    %v1994 = vadd.f32 0.0, %v1993
    %1995 = vmatmul.f32.gmra.mxu0 %v1541
    %v1996 = vpop.f32.mrf.mxu0
    %v1997 = vadd.f32 0.0, %v1996
    %1998 = vmatmul.f32.gmra.mxu0 %v1543
    %v1999 = vpop.f32.mrf.mxu0
    %v2000 = vadd.f32 0.0, %v1999
    %2001 = vmatmul.f32.gmra.mxu0 %v1545
    %v2002 = vpop.f32.mrf.mxu0
    %v2003 = vadd.f32 0.0, %v2002
    %2004 = vmatmul.f32.gmra.mxu0 %v1547
    %v2005 = vpop.f32.mrf.mxu0
    %v2006 = vadd.f32 0.0, %v2005
    %2007 = vmatmul.f32.gmra.mxu0 %v1549
    %v2008 = vpop.f32.mrf.mxu0
    %v2009 = vadd.f32 0.0, %v2008
    %2010 = vmatmul.f32.gmra.mxu0 %v1551
    %v2011 = vpop.f32.mrf.mxu0
    %v2012 = vadd.f32 0.0, %v2011
    %2013 = vmatmul.f32.gmra.mxu0 %v1553
    %v2014 = vpop.f32.mrf.mxu0
    %v2015 = vadd.f32 0.0, %v2014
    %2016 = vmatmul.f32.gmra.mxu0 %v1555
    %v2017 = vpop.f32.mrf.mxu0
    %v2018 = vadd.f32 0.0, %v2017
    %2019 = vdwg.mxu0
    %2020 = vmatpush.msra.mxu0 0.0
    %2021 = vmatpush.msra.mxu0 0.0
    %2022 = vmatpush.msra.mxu0 0.0
    %2023 = vmatpush.msra.mxu0 0.0
    %2024 = vmatpush.msra.mxu0 0.0
    %2025 = vmatpush.msra.mxu0 0.0
    %2026 = vmatpush.msra.mxu0 0.0
    %2027 = vmatpush.msra.mxu0 0.0
    %2028 = vmatpush.msra.mxu0 0.0
    %2029 = vmatpush.msra.mxu0 0.0
    %2030 = vmatpush.msra.mxu0 0.0
    %2031 = vmatpush.msra.mxu0 0.0
    %2032 = vmatpush.msra.mxu0 %v1573
    %2033 = vmatpush.msra.mxu0 %v1502
    %2034 = vmatpush.msra.mxu0 %v1496
    %2035 = vmatpush.msra.mxu0 %v1490
    %2036 = vmatmul.f32.gmra.mxu0 %v1509
    %v2037 = vpop.f32.mrf.mxu0
    %v2038 = vadd.f32 0.0, %v2037
    %2039 = vmatmul.f32.gmra.mxu0 %v1511
    %v2040 = vpop.f32.mrf.mxu0
    %v2041 = vadd.f32 0.0, %v2040
    %2042 = vmatmul.f32.gmra.mxu0 %v1513
    %v2043 = vpop.f32.mrf.mxu0
    %v2044 = vadd.f32 0.0, %v2043
    %2045 = vmatmul.f32.gmra.mxu0 %v1515
    %v2046 = vpop.f32.mrf.mxu0
    %v2047 = vadd.f32 0.0, %v2046
    %2048 = vmatmul.f32.gmra.mxu0 %v1517
    %v2049 = vpop.f32.mrf.mxu0
    %v2050 = vadd.f32 0.0, %v2049
    %2051 = vmatmul.f32.gmra.mxu0 %v1519
    %v2052 = vpop.f32.mrf.mxu0
    %v2053 = vadd.f32 0.0, %v2052
    %2054 = vmatmul.f32.gmra.mxu0 %v1521
    %v2055 = vpop.f32.mrf.mxu0
    %v2056 = vadd.f32 0.0, %v2055
    %2057 = vmatmul.f32.gmra.mxu0 %v1523
    %v2058 = vpop.f32.mrf.mxu0
    %v2059 = vadd.f32 0.0, %v2058
    %2060 = vmatmul.f32.gmra.mxu0 %v1525
    %v2061 = vpop.f32.mrf.mxu0
    %v2062 = vadd.f32 0.0, %v2061
    %2063 = vmatmul.f32.gmra.mxu0 %v1527
    %v2064 = vpop.f32.mrf.mxu0
    %v2065 = vadd.f32 0.0, %v2064
    %2066 = vmatmul.f32.gmra.mxu0 %v1529
    %v2067 = vpop.f32.mrf.mxu0
    %v2068 = vadd.f32 0.0, %v2067
    %2069 = vmatmul.f32.gmra.mxu0 %v1531
    %v2070 = vpop.f32.mrf.mxu0
    %v2071 = vadd.f32 0.0, %v2070
    %2072 = vmatmul.f32.gmra.mxu0 %v1533
    %v2073 = vpop.f32.mrf.mxu0
    %v2074 = vadd.f32 0.0, %v2073
    %2075 = vmatmul.f32.gmra.mxu0 %v1535
    %v2076 = vpop.f32.mrf.mxu0
    %v2077 = vadd.f32 0.0, %v2076
    %2078 = vmatmul.f32.gmra.mxu0 %v1537
    %v2079 = vpop.f32.mrf.mxu0
    %v2080 = vadd.f32 0.0, %v2079
    %2081 = vmatmul.f32.gmra.mxu0 %v1539
    %v2082 = vpop.f32.mrf.mxu0
    %v2083 = vadd.f32 0.0, %v2082
    %2084 = vmatmul.f32.gmra.mxu0 %v1541
    %v2085 = vpop.f32.mrf.mxu0
    %v2086 = vadd.f32 0.0, %v2085
    %2087 = vmatmul.f32.gmra.mxu0 %v1543
    %v2088 = vpop.f32.mrf.mxu0
    %v2089 = vadd.f32 0.0, %v2088
    %2090 = vmatmul.f32.gmra.mxu0 %v1545
    %v2091 = vpop.f32.mrf.mxu0
    %v2092 = vadd.f32 0.0, %v2091
    %2093 = vmatmul.f32.gmra.mxu0 %v1547
    %v2094 = vpop.f32.mrf.mxu0
    %v2095 = vadd.f32 0.0, %v2094
    %2096 = vmatmul.f32.gmra.mxu0 %v1549
    %v2097 = vpop.f32.mrf.mxu0
    %v2098 = vadd.f32 0.0, %v2097
    %2099 = vmatmul.f32.gmra.mxu0 %v1551
    %v2100 = vpop.f32.mrf.mxu0
    %v2101 = vadd.f32 0.0, %v2100
    %2102 = vmatmul.f32.gmra.mxu0 %v1553
    %v2103 = vpop.f32.mrf.mxu0
    %v2104 = vadd.f32 0.0, %v2103
    %2105 = vmatmul.f32.gmra.mxu0 %v1555
    %v2106 = vpop.f32.mrf.mxu0
    %v2107 = vadd.f32 0.0, %v2106
    %2108 = vdwg.mxu0
    %v2109 = vadd.f32 %v911, %v1593
    %v2110 = vadd.f32 %v1000, %v1682
    %v2111 = vadd.f32 %v1089, %v1771
    %v2112 = vadd.f32 %v1178, %v1860
    %v2113 = vadd.f32 %v1267, %v1949
    %v2114 = vadd.f32 %v1356, %v2038
    %v2115 = vadd.f32 %v914, %v1596
    %v2116 = vadd.f32 %v1003, %v1685
    %v2117 = vadd.f32 %v1092, %v1774
    %v2118 = vadd.f32 %v1181, %v1863
    %v2119 = vadd.f32 %v1270, %v1952
    %v2120 = vadd.f32 %v1359, %v2041
    %v2121 = vadd.f32 %v917, %v1599
    %v2122 = vadd.f32 %v1006, %v1688
    %v2123 = vadd.f32 %v1095, %v1777
    %v2124 = vadd.f32 %v1184, %v1866
    %v2125 = vadd.f32 %v1273, %v1955
    %v2126 = vadd.f32 %v1362, %v2044
    %v2127 = vadd.f32 %v920, %v1602
    %v2128 = vadd.f32 %v1009, %v1691
    %v2129 = vadd.f32 %v1098, %v1780
    %v2130 = vadd.f32 %v1187, %v1869
    %v2131 = vadd.f32 %v1276, %v1958
    %v2132 = vadd.f32 %v1365, %v2047
    %v2133 = vadd.f32 %v923, %v1605
    %v2134 = vadd.f32 %v1012, %v1694
    %v2135 = vadd.f32 %v1101, %v1783
    %v2136 = vadd.f32 %v1190, %v1872
    %v2137 = vadd.f32 %v1279, %v1961
    %v2138 = vadd.f32 %v1368, %v2050
    %v2139 = vadd.f32 %v926, %v1608
    %v2140 = vadd.f32 %v1015, %v1697
    %v2141 = vadd.f32 %v1104, %v1786
    %v2142 = vadd.f32 %v1193, %v1875
    %v2143 = vadd.f32 %v1282, %v1964
    %v2144 = vadd.f32 %v1371, %v2053
    %v2145 = vadd.f32 %v929, %v1611
    %v2146 = vadd.f32 %v1018, %v1700
    %v2147 = vadd.f32 %v1107, %v1789
    %v2148 = vadd.f32 %v1196, %v1878
    %v2149 = vadd.f32 %v1285, %v1967
    %v2150 = vadd.f32 %v1374, %v2056
    %v2151 = vadd.f32 %v932, %v1614
    %v2152 = vadd.f32 %v1021, %v1703
    %v2153 = vadd.f32 %v1110, %v1792
    %v2154 = vadd.f32 %v1199, %v1881
    %v2155 = vadd.f32 %v1288, %v1970
    %v2156 = vadd.f32 %v1377, %v2059
    %v2157 = vadd.f32 %v935, %v1617
    %v2158 = vadd.f32 %v1024, %v1706
    %v2159 = vadd.f32 %v1113, %v1795
    %v2160 = vadd.f32 %v1202, %v1884
    %v2161 = vadd.f32 %v1291, %v1973
    %v2162 = vadd.f32 %v1380, %v2062
    %v2163 = vadd.f32 %v938, %v1620
    %v2164 = vadd.f32 %v1027, %v1709
    %v2165 = vadd.f32 %v1116, %v1798
    %v2166 = vadd.f32 %v1205, %v1887
    %v2167 = vadd.f32 %v1294, %v1976
    %v2168 = vadd.f32 %v1383, %v2065
    %v2169 = vadd.f32 %v941, %v1623
    %v2170 = vadd.f32 %v1030, %v1712
    %v2171 = vadd.f32 %v1119, %v1801
    %v2172 = vadd.f32 %v1208, %v1890
    %v2173 = vadd.f32 %v1297, %v1979
    %v2174 = vadd.f32 %v1386, %v2068
    %v2175 = vadd.f32 %v944, %v1626
    %v2176 = vadd.f32 %v1033, %v1715
    %v2177 = vadd.f32 %v1122, %v1804
    %v2178 = vadd.f32 %v1211, %v1893
    %v2179 = vadd.f32 %v1300, %v1982
    %v2180 = vadd.f32 %v1389, %v2071
    %v2181 = vadd.f32 %v947, %v1629
    %v2182 = vadd.f32 %v1036, %v1718
    %v2183 = vadd.f32 %v1125, %v1807
    %v2184 = vadd.f32 %v1214, %v1896
    %v2185 = vadd.f32 %v1303, %v1985
    %v2186 = vadd.f32 %v1392, %v2074
    %v2187 = vadd.f32 %v950, %v1632
    %v2188 = vadd.f32 %v1039, %v1721
    %v2189 = vadd.f32 %v1128, %v1810
    %v2190 = vadd.f32 %v1217, %v1899
    %v2191 = vadd.f32 %v1306, %v1988
    %v2192 = vadd.f32 %v1395, %v2077
    %v2193 = vadd.f32 %v953, %v1635
    %v2194 = vadd.f32 %v1042, %v1724
    %v2195 = vadd.f32 %v1131, %v1813
    %v2196 = vadd.f32 %v1220, %v1902
    %v2197 = vadd.f32 %v1309, %v1991
    %v2198 = vadd.f32 %v1398, %v2080
    %v2199 = vadd.f32 %v956, %v1638
    %v2200 = vadd.f32 %v1045, %v1727
    %v2201 = vadd.f32 %v1134, %v1816
    %v2202 = vadd.f32 %v1223, %v1905
    %v2203 = vadd.f32 %v1312, %v1994
    %v2204 = vadd.f32 %v1401, %v2083
    %v2205 = vadd.f32 %v959, %v1641
    %v2206 = vadd.f32 %v1048, %v1730
    %v2207 = vadd.f32 %v1137, %v1819
    %v2208 = vadd.f32 %v1226, %v1908
    %v2209 = vadd.f32 %v1315, %v1997
    %v2210 = vadd.f32 %v1404, %v2086
    %v2211 = vadd.f32 %v962, %v1644
    %v2212 = vadd.f32 %v1051, %v1733
    %v2213 = vadd.f32 %v1140, %v1822
    %v2214 = vadd.f32 %v1229, %v1911
    %v2215 = vadd.f32 %v1318, %v2000
    %v2216 = vadd.f32 %v1407, %v2089
    %v2217 = vadd.f32 %v965, %v1647
    %v2218 = vadd.f32 %v1054, %v1736
    %v2219 = vadd.f32 %v1143, %v1825
    %v2220 = vadd.f32 %v1232, %v1914
    %v2221 = vadd.f32 %v1321, %v2003
    %v2222 = vadd.f32 %v1410, %v2092
    %v2223 = vadd.f32 %v968, %v1650
    %v2224 = vadd.f32 %v1057, %v1739
    %v2225 = vadd.f32 %v1146, %v1828
    %v2226 = vadd.f32 %v1235, %v1917
    %v2227 = vadd.f32 %v1324, %v2006
    %v2228 = vadd.f32 %v1413, %v2095
    %v2229 = vadd.f32 %v971, %v1653
    %v2230 = vadd.f32 %v1060, %v1742
    %v2231 = vadd.f32 %v1149, %v1831
    %v2232 = vadd.f32 %v1238, %v1920
    %v2233 = vadd.f32 %v1327, %v2009
    %v2234 = vadd.f32 %v1416, %v2098
    %v2235 = vadd.f32 %v974, %v1656
    %v2236 = vadd.f32 %v1063, %v1745
    %v2237 = vadd.f32 %v1152, %v1834
    %v2238 = vadd.f32 %v1241, %v1923
    %v2239 = vadd.f32 %v1330, %v2012
    %v2240 = vadd.f32 %v1419, %v2101
    %v2241 = vadd.f32 %v977, %v1659
    %v2242 = vadd.f32 %v1066, %v1748
    %v2243 = vadd.f32 %v1155, %v1837
    %v2244 = vadd.f32 %v1244, %v1926
    %v2245 = vadd.f32 %v1333, %v2015
    %v2246 = vadd.f32 %v1422, %v2104
    %v2247 = vadd.f32 %v980, %v1662
    %v2248 = vadd.f32 %v1069, %v1751
    %v2249 = vadd.f32 %v1158, %v1840
    %v2250 = vadd.f32 %v1247, %v1929
    %v2251 = vadd.f32 %v1336, %v2018
    %v2252 = vadd.f32 %v1425, %v2107
    %vm2253 = vcmask 1044480
    %v2254 = vrot.slane %v55, 3
    %v2255 = vrot.slane %v56, 3
    %v2256 = vsel %vm2253, %v2254, %v2255
    %v2257 = vrot.slane %v57, 3
    %v2258 = vsel %vm2253, %v2255, %v2257
    %v2259 = vrot.slane %v58, 3
    %v2260 = vsel %vm2253, %v2257, %v2259
    %v2261 = vrot.slane %v59, 3
    %v2262 = vrot.slane %v60, 3
    %v2263 = vsel %vm2253, %v2261, %v2262
    %v2264 = vrot.slane %v61, 3
    %v2265 = vsel %vm2253, %v2262, %v2264
    %v2266 = vrot.slane %v62, 3
    %v2267 = vsel %vm2253, %v2264, %v2266
    %v2268 = vrot.slane %v63, 3
    %v2269 = vrot.slane %v64, 3
    %v2270 = vsel %vm2253, %v2268, %v2269
    %v2271 = vrot.slane %v65, 3
    %v2272 = vsel %vm2253, %v2269, %v2271
    %v2273 = vrot.slane %v66, 3
    %v2274 = vsel %vm2253, %v2271, %v2273
    %v2275 = vrot.slane %v67, 3
    %v2276 = vrot.slane %v68, 3
    %v2277 = vsel %vm2253, %v2275, %v2276
    %v2278 = vrot.slane %v69, 3
    %v2279 = vsel %vm2253, %v2276, %v2278
    %v2280 = vrot.slane %v70, 3
    %v2281 = vsel %vm2253, %v2278, %v2280
    %v2282 = vrot.slane %v71, 3
    %v2283 = vrot.slane %v72, 3
    %v2284 = vsel %vm2253, %v2282, %v2283
    %v2285 = vrot.slane %v73, 3
    %v2286 = vsel %vm2253, %v2283, %v2285
    %v2287 = vrot.slane %v74, 3
    %v2288 = vsel %vm2253, %v2285, %v2287
    %v2289 = vrot.slane %v75, 3
    %v2290 = vrot.slane %v76, 3
    %v2291 = vsel %vm2253, %v2289, %v2290
    %v2292 = vrot.slane %v77, 3
    %v2293 = vsel %vm2253, %v2290, %v2292
    %v2294 = vrot.slane %v78, 3
    %v2295 = vsel %vm2253, %v2292, %v2294
    %v2296 = vrot.slane %v79, 3
    %v2297 = vrot.slane %v80, 3
    %v2298 = vsel %vm2253, %v2296, %v2297
    %v2299 = vrot.slane %v81, 3
    %v2300 = vsel %vm2253, %v2297, %v2299
    %v2301 = vrot.slane %v82, 3
    %v2302 = vsel %vm2253, %v2299, %v2301
    %v2303 = vrot.slane %v83, 3
    %v2304 = vrot.slane %v84, 3
    %v2305 = vsel %vm2253, %v2303, %v2304
    %v2306 = vrot.slane %v85, 3
    %v2307 = vsel %vm2253, %v2304, %v2306
    %v2308 = vrot.slane %v86, 3
    %v2309 = vsel %vm2253, %v2306, %v2308
    %s2310 = scalar_lea.vmem [#allocation3], 576
    %v2311 = vld [vmem:[%s2310] sm:$0xff]
    %v2312 = vld [vmem:[%s2310 + $0x8] sm:$0xff]
    %v2313 = vld [vmem:[%s2310 + $0x10] sm:$0xff]
    %v2314 = vld [vmem:[%s2310 + $0x18] sm:$0xff]
    %v2315 = vld [vmem:[%s2310 + $0x20] sm:$0xff]
    %v2316 = vld [vmem:[%s2310 + $0x28] sm:$0xff]
    %v2317 = vld [vmem:[%s2310 + $0x30] sm:$0xff]
    %v2318 = vld [vmem:[%s2310 + $0x38] sm:$0xff]
    %v2319 = vld [vmem:[%s2310 + $0x40] sm:$0xff]
    %v2320 = vld [vmem:[%s2310 + $0x48] sm:$0xff]
    %v2321 = vld [vmem:[%s2310 + $0x50] sm:$0xff]
    %v2322 = vld [vmem:[%s2310 + $0x58] sm:$0xff]
    %v2323 = vld [vmem:[%s2310 + $0x60] sm:$0xff]
    %v2324 = vld [vmem:[%s2310 + $0x68] sm:$0xff]
    %v2325 = vld [vmem:[%s2310 + $0x70] sm:$0xff]
    %v2326 = vld [vmem:[%s2310 + $0x78] sm:$0xff]
    %v2327 = vld [vmem:[%s2310 + $0x80] sm:$0xff]
    %v2328 = vld [vmem:[%s2310 + $0x88] sm:$0xff]
    %v2329 = vld [vmem:[%s2310 + $0x90] sm:$0xf]
    %v2330 = vld [vmem:[%s2310 + $0x98] sm:$0xf]
    %v2331 = vld [vmem:[%s2310 + $0xa0] sm:$0xf]
    %v2332 = vld [vmem:[%s2310 + $0xa8] sm:$0xf]
    %v2333 = vld [vmem:[%s2310 + $0xb0] sm:$0xf]
    %v2334 = vld [vmem:[%s2310 + $0xb8] sm:$0xf]
    %v2335 = vsel %vm225, %v2256, 0
    %v2337 = vsel %vm225, %v2258, 0
    %v2339 = vsel %vm225, %v2260, 0
    %v2341 = vsel %vm225, %v2263, 0
    %v2343 = vsel %vm225, %v2265, 0
    %v2345 = vsel %vm225, %v2267, 0
    %v2347 = vsel %vm225, %v2270, 0
    %v2349 = vsel %vm225, %v2272, 0
    %v2351 = vsel %vm225, %v2274, 0
    %v2353 = vsel %vm225, %v2277, 0
    %v2355 = vsel %vm225, %v2279, 0
    %v2357 = vsel %vm225, %v2281, 0
    %v2359 = vsel %vm225, %v2284, 0
    %v2361 = vsel %vm225, %v2286, 0
    %v2363 = vsel %vm225, %v2288, 0
    %v2365 = vsel %vm225, %v2291, 0
    %v2367 = vsel %vm225, %v2293, 0
    %v2369 = vsel %vm225, %v2295, 0
    %v2371 = vsel %vm225, %v2298, 0
    %v2373 = vsel %vm225, %v2300, 0
    %v2375 = vsel %vm225, %v2302, 0
    %v2377 = vsel %vm225, %v2305, 0
    %v2379 = vsel %vm225, %v2307, 0
    %v2381 = vsel %vm225, %v2309, 0
    %v2384 = vsel %vm274, %v2329, 0
    %v2387 = vsel %vm274, %v2330, 0
    %v2390 = vsel %vm274, %v2331, 0
    %v2393 = vsel %vm274, %v2332, 0
    %v2396 = vsel %vm274, %v2333, 0
    %v2399 = vsel %vm274, %v2334, 0
    %2401 = vmatpush.msra.mxu0 0.0
    %2402 = vmatpush.msra.mxu0 0.0
    %2403 = vmatpush.msra.mxu0 0.0
    %2404 = vmatpush.msra.mxu0 0.0
    %2405 = vmatpush.msra.mxu0 0.0
    %2406 = vmatpush.msra.mxu0 0.0
    %2407 = vmatpush.msra.mxu0 0.0
    %2408 = vmatpush.msra.mxu0 0.0
    %2409 = vmatpush.msra.mxu0 0.0
    %2410 = vmatpush.msra.mxu0 0.0
    %2411 = vmatpush.msra.mxu0 0.0
    %2412 = vmatpush.msra.mxu0 0.0
    %2413 = vmatpush.msra.mxu0 %v2384
    %2414 = vmatpush.msra.mxu0 %v2323
    %2415 = vmatpush.msra.mxu0 %v2317
    %2416 = vmatpush.msra.mxu0 %v2311
    %2417 = vmatmul.f32.gmra.mxu0 %v2335
    %v2418 = vpop.f32.mrf.mxu0
    %v2419 = vadd.f32 0.0, %v2418
    %2420 = vmatmul.f32.gmra.mxu0 %v2337
    %v2421 = vpop.f32.mrf.mxu0
    %v2422 = vadd.f32 0.0, %v2421
    %2423 = vmatmul.f32.gmra.mxu0 %v2339
    %v2424 = vpop.f32.mrf.mxu0
    %v2425 = vadd.f32 0.0, %v2424
    %2426 = vmatmul.f32.gmra.mxu0 %v2341
    %v2427 = vpop.f32.mrf.mxu0
    %v2428 = vadd.f32 0.0, %v2427
    %2429 = vmatmul.f32.gmra.mxu0 %v2343
    %v2430 = vpop.f32.mrf.mxu0
    %v2431 = vadd.f32 0.0, %v2430
    %2432 = vmatmul.f32.gmra.mxu0 %v2345
    %v2433 = vpop.f32.mrf.mxu0
    %v2434 = vadd.f32 0.0, %v2433
    %2435 = vmatmul.f32.gmra.mxu0 %v2347
    %v2436 = vpop.f32.mrf.mxu0
    %v2437 = vadd.f32 0.0, %v2436
    %2438 = vmatmul.f32.gmra.mxu0 %v2349
    %v2439 = vpop.f32.mrf.mxu0
    %v2440 = vadd.f32 0.0, %v2439
    %2441 = vmatmul.f32.gmra.mxu0 %v2351
    %v2442 = vpop.f32.mrf.mxu0
    %v2443 = vadd.f32 0.0, %v2442
    %2444 = vmatmul.f32.gmra.mxu0 %v2353
    %v2445 = vpop.f32.mrf.mxu0
    %v2446 = vadd.f32 0.0, %v2445
    %2447 = vmatmul.f32.gmra.mxu0 %v2355
    %v2448 = vpop.f32.mrf.mxu0
    %v2449 = vadd.f32 0.0, %v2448
    %2450 = vmatmul.f32.gmra.mxu0 %v2357
    %v2451 = vpop.f32.mrf.mxu0
    %v2452 = vadd.f32 0.0, %v2451
    %2453 = vmatmul.f32.gmra.mxu0 %v2359
    %v2454 = vpop.f32.mrf.mxu0
    %v2455 = vadd.f32 0.0, %v2454
    %2456 = vmatmul.f32.gmra.mxu0 %v2361
    %v2457 = vpop.f32.mrf.mxu0
    %v2458 = vadd.f32 0.0, %v2457
    %2459 = vmatmul.f32.gmra.mxu0 %v2363
    %v2460 = vpop.f32.mrf.mxu0
    %v2461 = vadd.f32 0.0, %v2460
    %2462 = vmatmul.f32.gmra.mxu0 %v2365
    %v2463 = vpop.f32.mrf.mxu0
    %v2464 = vadd.f32 0.0, %v2463
    %2465 = vmatmul.f32.gmra.mxu0 %v2367
    %v2466 = vpop.f32.mrf.mxu0
    %v2467 = vadd.f32 0.0, %v2466
    %2468 = vmatmul.f32.gmra.mxu0 %v2369
    %v2469 = vpop.f32.mrf.mxu0
    %v2470 = vadd.f32 0.0, %v2469
    %2471 = vmatmul.f32.gmra.mxu0 %v2371
    %v2472 = vpop.f32.mrf.mxu0
    %v2473 = vadd.f32 0.0, %v2472
    %2474 = vmatmul.f32.gmra.mxu0 %v2373
    %v2475 = vpop.f32.mrf.mxu0
    %v2476 = vadd.f32 0.0, %v2475
    %2477 = vmatmul.f32.gmra.mxu0 %v2375
    %v2478 = vpop.f32.mrf.mxu0
    %v2479 = vadd.f32 0.0, %v2478
    %2480 = vmatmul.f32.gmra.mxu0 %v2377
    %v2481 = vpop.f32.mrf.mxu0
    %v2482 = vadd.f32 0.0, %v2481
    %2483 = vmatmul.f32.gmra.mxu0 %v2379
    %v2484 = vpop.f32.mrf.mxu0
    %v2485 = vadd.f32 0.0, %v2484
    %2486 = vmatmul.f32.gmra.mxu0 %v2381
    %v2487 = vpop.f32.mrf.mxu0
    %v2488 = vadd.f32 0.0, %v2487
    %2489 = vdwg.mxu0
    %2490 = vmatpush.msra.mxu0 0.0
    %2491 = vmatpush.msra.mxu0 0.0
    %2492 = vmatpush.msra.mxu0 0.0
    %2493 = vmatpush.msra.mxu0 0.0
    %2494 = vmatpush.msra.mxu0 0.0
    %2495 = vmatpush.msra.mxu0 0.0
    %2496 = vmatpush.msra.mxu0 0.0
    %2497 = vmatpush.msra.mxu0 0.0
    %2498 = vmatpush.msra.mxu0 0.0
    %2499 = vmatpush.msra.mxu0 0.0
    %2500 = vmatpush.msra.mxu0 0.0
    %2501 = vmatpush.msra.mxu0 0.0
    %2502 = vmatpush.msra.mxu0 %v2387
    %2503 = vmatpush.msra.mxu0 %v2324
    %2504 = vmatpush.msra.mxu0 %v2318
    %2505 = vmatpush.msra.mxu0 %v2312
    %2506 = vmatmul.f32.gmra.mxu0 %v2335
    %v2507 = vpop.f32.mrf.mxu0
    %v2508 = vadd.f32 0.0, %v2507
    %2509 = vmatmul.f32.gmra.mxu0 %v2337
    %v2510 = vpop.f32.mrf.mxu0
    %v2511 = vadd.f32 0.0, %v2510
    %2512 = vmatmul.f32.gmra.mxu0 %v2339
    %v2513 = vpop.f32.mrf.mxu0
    %v2514 = vadd.f32 0.0, %v2513
    %2515 = vmatmul.f32.gmra.mxu0 %v2341
    %v2516 = vpop.f32.mrf.mxu0
    %v2517 = vadd.f32 0.0, %v2516
    %2518 = vmatmul.f32.gmra.mxu0 %v2343
    %v2519 = vpop.f32.mrf.mxu0
    %v2520 = vadd.f32 0.0, %v2519
    %2521 = vmatmul.f32.gmra.mxu0 %v2345
    %v2522 = vpop.f32.mrf.mxu0
    %v2523 = vadd.f32 0.0, %v2522
    %2524 = vmatmul.f32.gmra.mxu0 %v2347
    %v2525 = vpop.f32.mrf.mxu0
    %v2526 = vadd.f32 0.0, %v2525
    %2527 = vmatmul.f32.gmra.mxu0 %v2349
    %v2528 = vpop.f32.mrf.mxu0
    %v2529 = vadd.f32 0.0, %v2528
    %2530 = vmatmul.f32.gmra.mxu0 %v2351
    %v2531 = vpop.f32.mrf.mxu0
    %v2532 = vadd.f32 0.0, %v2531
    %2533 = vmatmul.f32.gmra.mxu0 %v2353
    %v2534 = vpop.f32.mrf.mxu0
    %v2535 = vadd.f32 0.0, %v2534
    %2536 = vmatmul.f32.gmra.mxu0 %v2355
    %v2537 = vpop.f32.mrf.mxu0
    %v2538 = vadd.f32 0.0, %v2537
    %2539 = vmatmul.f32.gmra.mxu0 %v2357
    %v2540 = vpop.f32.mrf.mxu0
    %v2541 = vadd.f32 0.0, %v2540
    %2542 = vmatmul.f32.gmra.mxu0 %v2359
    %v2543 = vpop.f32.mrf.mxu0
    %v2544 = vadd.f32 0.0, %v2543
    %2545 = vmatmul.f32.gmra.mxu0 %v2361
    %v2546 = vpop.f32.mrf.mxu0
    %v2547 = vadd.f32 0.0, %v2546
    %2548 = vmatmul.f32.gmra.mxu0 %v2363
    %v2549 = vpop.f32.mrf.mxu0
    %v2550 = vadd.f32 0.0, %v2549
    %2551 = vmatmul.f32.gmra.mxu0 %v2365
    %v2552 = vpop.f32.mrf.mxu0
    %v2553 = vadd.f32 0.0, %v2552
    %2554 = vmatmul.f32.gmra.mxu0 %v2367
    %v2555 = vpop.f32.mrf.mxu0
    %v2556 = vadd.f32 0.0, %v2555
    %2557 = vmatmul.f32.gmra.mxu0 %v2369
    %v2558 = vpop.f32.mrf.mxu0
    %v2559 = vadd.f32 0.0, %v2558
    %2560 = vmatmul.f32.gmra.mxu0 %v2371
    %v2561 = vpop.f32.mrf.mxu0
    %v2562 = vadd.f32 0.0, %v2561
    %2563 = vmatmul.f32.gmra.mxu0 %v2373
    %v2564 = vpop.f32.mrf.mxu0
    %v2565 = vadd.f32 0.0, %v2564
    %2566 = vmatmul.f32.gmra.mxu0 %v2375
    %v2567 = vpop.f32.mrf.mxu0
    %v2568 = vadd.f32 0.0, %v2567
    %2569 = vmatmul.f32.gmra.mxu0 %v2377
    %v2570 = vpop.f32.mrf.mxu0
    %v2571 = vadd.f32 0.0, %v2570
    %2572 = vmatmul.f32.gmra.mxu0 %v2379
    %v2573 = vpop.f32.mrf.mxu0
    %v2574 = vadd.f32 0.0, %v2573
    %2575 = vmatmul.f32.gmra.mxu0 %v2381
    %v2576 = vpop.f32.mrf.mxu0
    %v2577 = vadd.f32 0.0, %v2576
    %2578 = vdwg.mxu0
    %2579 = vmatpush.msra.mxu0 0.0
    %2580 = vmatpush.msra.mxu0 0.0
    %2581 = vmatpush.msra.mxu0 0.0
    %2582 = vmatpush.msra.mxu0 0.0
    %2583 = vmatpush.msra.mxu0 0.0
    %2584 = vmatpush.msra.mxu0 0.0
    %2585 = vmatpush.msra.mxu0 0.0
    %2586 = vmatpush.msra.mxu0 0.0
    %2587 = vmatpush.msra.mxu0 0.0
    %2588 = vmatpush.msra.mxu0 0.0
    %2589 = vmatpush.msra.mxu0 0.0
    %2590 = vmatpush.msra.mxu0 0.0
    %2591 = vmatpush.msra.mxu0 %v2390
    %2592 = vmatpush.msra.mxu0 %v2325
    %2593 = vmatpush.msra.mxu0 %v2319
    %2594 = vmatpush.msra.mxu0 %v2313
    %2595 = vmatmul.f32.gmra.mxu0 %v2335
    %v2596 = vpop.f32.mrf.mxu0
    %v2597 = vadd.f32 0.0, %v2596
    %2598 = vmatmul.f32.gmra.mxu0 %v2337
    %v2599 = vpop.f32.mrf.mxu0
    %v2600 = vadd.f32 0.0, %v2599
    %2601 = vmatmul.f32.gmra.mxu0 %v2339
    %v2602 = vpop.f32.mrf.mxu0
    %v2603 = vadd.f32 0.0, %v2602
    %2604 = vmatmul.f32.gmra.mxu0 %v2341
    %v2605 = vpop.f32.mrf.mxu0
    %v2606 = vadd.f32 0.0, %v2605
    %2607 = vmatmul.f32.gmra.mxu0 %v2343
    %v2608 = vpop.f32.mrf.mxu0
    %v2609 = vadd.f32 0.0, %v2608
    %2610 = vmatmul.f32.gmra.mxu0 %v2345
    %v2611 = vpop.f32.mrf.mxu0
    %v2612 = vadd.f32 0.0, %v2611
    %2613 = vmatmul.f32.gmra.mxu0 %v2347
    %v2614 = vpop.f32.mrf.mxu0
    %v2615 = vadd.f32 0.0, %v2614
    %2616 = vmatmul.f32.gmra.mxu0 %v2349
    %v2617 = vpop.f32.mrf.mxu0
    %v2618 = vadd.f32 0.0, %v2617
    %2619 = vmatmul.f32.gmra.mxu0 %v2351
    %v2620 = vpop.f32.mrf.mxu0
    %v2621 = vadd.f32 0.0, %v2620
    %2622 = vmatmul.f32.gmra.mxu0 %v2353
    %v2623 = vpop.f32.mrf.mxu0
    %v2624 = vadd.f32 0.0, %v2623
    %2625 = vmatmul.f32.gmra.mxu0 %v2355
    %v2626 = vpop.f32.mrf.mxu0
    %v2627 = vadd.f32 0.0, %v2626
    %2628 = vmatmul.f32.gmra.mxu0 %v2357
    %v2629 = vpop.f32.mrf.mxu0
    %v2630 = vadd.f32 0.0, %v2629
    %2631 = vmatmul.f32.gmra.mxu0 %v2359
    %v2632 = vpop.f32.mrf.mxu0
    %v2633 = vadd.f32 0.0, %v2632
    %2634 = vmatmul.f32.gmra.mxu0 %v2361
    %v2635 = vpop.f32.mrf.mxu0
    %v2636 = vadd.f32 0.0, %v2635
    %2637 = vmatmul.f32.gmra.mxu0 %v2363
    %v2638 = vpop.f32.mrf.mxu0
    %v2639 = vadd.f32 0.0, %v2638
    %2640 = vmatmul.f32.gmra.mxu0 %v2365
    %v2641 = vpop.f32.mrf.mxu0
    %v2642 = vadd.f32 0.0, %v2641
    %2643 = vmatmul.f32.gmra.mxu0 %v2367
    %v2644 = vpop.f32.mrf.mxu0
    %v2645 = vadd.f32 0.0, %v2644
    %2646 = vmatmul.f32.gmra.mxu0 %v2369
    %v2647 = vpop.f32.mrf.mxu0
    %v2648 = vadd.f32 0.0, %v2647
    %2649 = vmatmul.f32.gmra.mxu0 %v2371
    %v2650 = vpop.f32.mrf.mxu0
    %v2651 = vadd.f32 0.0, %v2650
    %2652 = vmatmul.f32.gmra.mxu0 %v2373
    %v2653 = vpop.f32.mrf.mxu0
    %v2654 = vadd.f32 0.0, %v2653
    %2655 = vmatmul.f32.gmra.mxu0 %v2375
    %v2656 = vpop.f32.mrf.mxu0
    %v2657 = vadd.f32 0.0, %v2656
    %2658 = vmatmul.f32.gmra.mxu0 %v2377
    %v2659 = vpop.f32.mrf.mxu0
    %v2660 = vadd.f32 0.0, %v2659
    %2661 = vmatmul.f32.gmra.mxu0 %v2379
    %v2662 = vpop.f32.mrf.mxu0
    %v2663 = vadd.f32 0.0, %v2662
    %2664 = vmatmul.f32.gmra.mxu0 %v2381
    %v2665 = vpop.f32.mrf.mxu0
    %v2666 = vadd.f32 0.0, %v2665
    %2667 = vdwg.mxu0
    %2668 = vmatpush.msra.mxu0 0.0
    %2669 = vmatpush.msra.mxu0 0.0
    %2670 = vmatpush.msra.mxu0 0.0
    %2671 = vmatpush.msra.mxu0 0.0
    %2672 = vmatpush.msra.mxu0 0.0
    %2673 = vmatpush.msra.mxu0 0.0
    %2674 = vmatpush.msra.mxu0 0.0
    %2675 = vmatpush.msra.mxu0 0.0
    %2676 = vmatpush.msra.mxu0 0.0
    %2677 = vmatpush.msra.mxu0 0.0
    %2678 = vmatpush.msra.mxu0 0.0
    %2679 = vmatpush.msra.mxu0 0.0
    %2680 = vmatpush.msra.mxu0 %v2393
    %2681 = vmatpush.msra.mxu0 %v2326
    %2682 = vmatpush.msra.mxu0 %v2320
    %2683 = vmatpush.msra.mxu0 %v2314
    %2684 = vmatmul.f32.gmra.mxu0 %v2335
    %v2685 = vpop.f32.mrf.mxu0
    %v2686 = vadd.f32 0.0, %v2685
    %2687 = vmatmul.f32.gmra.mxu0 %v2337
    %v2688 = vpop.f32.mrf.mxu0
    %v2689 = vadd.f32 0.0, %v2688
    %2690 = vmatmul.f32.gmra.mxu0 %v2339
    %v2691 = vpop.f32.mrf.mxu0
    %v2692 = vadd.f32 0.0, %v2691
    %2693 = vmatmul.f32.gmra.mxu0 %v2341
    %v2694 = vpop.f32.mrf.mxu0
    %v2695 = vadd.f32 0.0, %v2694
    %2696 = vmatmul.f32.gmra.mxu0 %v2343
    %v2697 = vpop.f32.mrf.mxu0
    %v2698 = vadd.f32 0.0, %v2697
    %2699 = vmatmul.f32.gmra.mxu0 %v2345
    %v2700 = vpop.f32.mrf.mxu0
    %v2701 = vadd.f32 0.0, %v2700
    %2702 = vmatmul.f32.gmra.mxu0 %v2347
    %v2703 = vpop.f32.mrf.mxu0
    %v2704 = vadd.f32 0.0, %v2703
    %2705 = vmatmul.f32.gmra.mxu0 %v2349
    %v2706 = vpop.f32.mrf.mxu0
    %v2707 = vadd.f32 0.0, %v2706
    %2708 = vmatmul.f32.gmra.mxu0 %v2351
    %v2709 = vpop.f32.mrf.mxu0
    %v2710 = vadd.f32 0.0, %v2709
    %2711 = vmatmul.f32.gmra.mxu0 %v2353
    %v2712 = vpop.f32.mrf.mxu0
    %v2713 = vadd.f32 0.0, %v2712
    %2714 = vmatmul.f32.gmra.mxu0 %v2355
    %v2715 = vpop.f32.mrf.mxu0
    %v2716 = vadd.f32 0.0, %v2715
    %2717 = vmatmul.f32.gmra.mxu0 %v2357
    %v2718 = vpop.f32.mrf.mxu0
    %v2719 = vadd.f32 0.0, %v2718
    %2720 = vmatmul.f32.gmra.mxu0 %v2359
    %v2721 = vpop.f32.mrf.mxu0
    %v2722 = vadd.f32 0.0, %v2721
    %2723 = vmatmul.f32.gmra.mxu0 %v2361
    %v2724 = vpop.f32.mrf.mxu0
    %v2725 = vadd.f32 0.0, %v2724
    %2726 = vmatmul.f32.gmra.mxu0 %v2363
    %v2727 = vpop.f32.mrf.mxu0
    %v2728 = vadd.f32 0.0, %v2727
    %2729 = vmatmul.f32.gmra.mxu0 %v2365
    %v2730 = vpop.f32.mrf.mxu0
    %v2731 = vadd.f32 0.0, %v2730
    %2732 = vmatmul.f32.gmra.mxu0 %v2367
    %v2733 = vpop.f32.mrf.mxu0
    %v2734 = vadd.f32 0.0, %v2733
    %2735 = vmatmul.f32.gmra.mxu0 %v2369
    %v2736 = vpop.f32.mrf.mxu0
    %v2737 = vadd.f32 0.0, %v2736
    %2738 = vmatmul.f32.gmra.mxu0 %v2371
    %v2739 = vpop.f32.mrf.mxu0
    %v2740 = vadd.f32 0.0, %v2739
    %2741 = vmatmul.f32.gmra.mxu0 %v2373
    %v2742 = vpop.f32.mrf.mxu0
    %v2743 = vadd.f32 0.0, %v2742
    %2744 = vmatmul.f32.gmra.mxu0 %v2375
    %v2745 = vpop.f32.mrf.mxu0
    %v2746 = vadd.f32 0.0, %v2745
    %2747 = vmatmul.f32.gmra.mxu0 %v2377
    %v2748 = vpop.f32.mrf.mxu0
    %v2749 = vadd.f32 0.0, %v2748
    %2750 = vmatmul.f32.gmra.mxu0 %v2379
    %v2751 = vpop.f32.mrf.mxu0
    %v2752 = vadd.f32 0.0, %v2751
    %2753 = vmatmul.f32.gmra.mxu0 %v2381
    %v2754 = vpop.f32.mrf.mxu0
    %v2755 = vadd.f32 0.0, %v2754
    %2756 = vdwg.mxu0
    %2757 = vmatpush.msra.mxu0 0.0
    %2758 = vmatpush.msra.mxu0 0.0
    %2759 = vmatpush.msra.mxu0 0.0
    %2760 = vmatpush.msra.mxu0 0.0
    %2761 = vmatpush.msra.mxu0 0.0
    %2762 = vmatpush.msra.mxu0 0.0
    %2763 = vmatpush.msra.mxu0 0.0
    %2764 = vmatpush.msra.mxu0 0.0
    %2765 = vmatpush.msra.mxu0 0.0
    %2766 = vmatpush.msra.mxu0 0.0
    %2767 = vmatpush.msra.mxu0 0.0
    %2768 = vmatpush.msra.mxu0 0.0
    %2769 = vmatpush.msra.mxu0 %v2396
    %2770 = vmatpush.msra.mxu0 %v2327
    %2771 = vmatpush.msra.mxu0 %v2321
    %2772 = vmatpush.msra.mxu0 %v2315
    %2773 = vmatmul.f32.gmra.mxu0 %v2335
    %v2774 = vpop.f32.mrf.mxu0
    %v2775 = vadd.f32 0.0, %v2774
    %2776 = vmatmul.f32.gmra.mxu0 %v2337
    %v2777 = vpop.f32.mrf.mxu0
    %v2778 = vadd.f32 0.0, %v2777
    %2779 = vmatmul.f32.gmra.mxu0 %v2339
    %v2780 = vpop.f32.mrf.mxu0
    %v2781 = vadd.f32 0.0, %v2780
    %2782 = vmatmul.f32.gmra.mxu0 %v2341
    %v2783 = vpop.f32.mrf.mxu0
    %v2784 = vadd.f32 0.0, %v2783
    %2785 = vmatmul.f32.gmra.mxu0 %v2343
    %v2786 = vpop.f32.mrf.mxu0
    %v2787 = vadd.f32 0.0, %v2786
    %2788 = vmatmul.f32.gmra.mxu0 %v2345
    %v2789 = vpop.f32.mrf.mxu0
    %v2790 = vadd.f32 0.0, %v2789
    %2791 = vmatmul.f32.gmra.mxu0 %v2347
    %v2792 = vpop.f32.mrf.mxu0
    %v2793 = vadd.f32 0.0, %v2792
    %2794 = vmatmul.f32.gmra.mxu0 %v2349
    %v2795 = vpop.f32.mrf.mxu0
    %v2796 = vadd.f32 0.0, %v2795
    %2797 = vmatmul.f32.gmra.mxu0 %v2351
    %v2798 = vpop.f32.mrf.mxu0
    %v2799 = vadd.f32 0.0, %v2798
    %2800 = vmatmul.f32.gmra.mxu0 %v2353
    %v2801 = vpop.f32.mrf.mxu0
    %v2802 = vadd.f32 0.0, %v2801
    %2803 = vmatmul.f32.gmra.mxu0 %v2355
    %v2804 = vpop.f32.mrf.mxu0
    %v2805 = vadd.f32 0.0, %v2804
    %2806 = vmatmul.f32.gmra.mxu0 %v2357
    %v2807 = vpop.f32.mrf.mxu0
    %v2808 = vadd.f32 0.0, %v2807
    %2809 = vmatmul.f32.gmra.mxu0 %v2359
    %v2810 = vpop.f32.mrf.mxu0
    %v2811 = vadd.f32 0.0, %v2810
    %2812 = vmatmul.f32.gmra.mxu0 %v2361
    %v2813 = vpop.f32.mrf.mxu0
    %v2814 = vadd.f32 0.0, %v2813
    %2815 = vmatmul.f32.gmra.mxu0 %v2363
    %v2816 = vpop.f32.mrf.mxu0
    %v2817 = vadd.f32 0.0, %v2816
    %2818 = vmatmul.f32.gmra.mxu0 %v2365
    %v2819 = vpop.f32.mrf.mxu0
    %v2820 = vadd.f32 0.0, %v2819
    %2821 = vmatmul.f32.gmra.mxu0 %v2367
    %v2822 = vpop.f32.mrf.mxu0
    %v2823 = vadd.f32 0.0, %v2822
    %2824 = vmatmul.f32.gmra.mxu0 %v2369
    %v2825 = vpop.f32.mrf.mxu0
    %v2826 = vadd.f32 0.0, %v2825
    %2827 = vmatmul.f32.gmra.mxu0 %v2371
    %v2828 = vpop.f32.mrf.mxu0
    %v2829 = vadd.f32 0.0, %v2828
    %2830 = vmatmul.f32.gmra.mxu0 %v2373
    %v2831 = vpop.f32.mrf.mxu0
    %v2832 = vadd.f32 0.0, %v2831
    %2833 = vmatmul.f32.gmra.mxu0 %v2375
    %v2834 = vpop.f32.mrf.mxu0
    %v2835 = vadd.f32 0.0, %v2834
    %2836 = vmatmul.f32.gmra.mxu0 %v2377
    %v2837 = vpop.f32.mrf.mxu0
    %v2838 = vadd.f32 0.0, %v2837
    %2839 = vmatmul.f32.gmra.mxu0 %v2379
    %v2840 = vpop.f32.mrf.mxu0
    %v2841 = vadd.f32 0.0, %v2840
    %2842 = vmatmul.f32.gmra.mxu0 %v2381
    %v2843 = vpop.f32.mrf.mxu0
    %v2844 = vadd.f32 0.0, %v2843
    %2845 = vdwg.mxu0
    %2846 = vmatpush.msra.mxu0 0.0
    %2847 = vmatpush.msra.mxu0 0.0
    %2848 = vmatpush.msra.mxu0 0.0
    %2849 = vmatpush.msra.mxu0 0.0
    %2850 = vmatpush.msra.mxu0 0.0
    %2851 = vmatpush.msra.mxu0 0.0
    %2852 = vmatpush.msra.mxu0 0.0
    %2853 = vmatpush.msra.mxu0 0.0
    %2854 = vmatpush.msra.mxu0 0.0
    %2855 = vmatpush.msra.mxu0 0.0
    %2856 = vmatpush.msra.mxu0 0.0
    %2857 = vmatpush.msra.mxu0 0.0
    %2858 = vmatpush.msra.mxu0 %v2399
    %2859 = vmatpush.msra.mxu0 %v2328
    %2860 = vmatpush.msra.mxu0 %v2322
    %2861 = vmatpush.msra.mxu0 %v2316
    %2862 = vmatmul.f32.gmra.mxu0 %v2335
    %v2863 = vpop.f32.mrf.mxu0
    %v2864 = vadd.f32 0.0, %v2863
    %2865 = vmatmul.f32.gmra.mxu0 %v2337
    %v2866 = vpop.f32.mrf.mxu0
    %v2867 = vadd.f32 0.0, %v2866
    %2868 = vmatmul.f32.gmra.mxu0 %v2339
    %v2869 = vpop.f32.mrf.mxu0
    %v2870 = vadd.f32 0.0, %v2869
    %2871 = vmatmul.f32.gmra.mxu0 %v2341
    %v2872 = vpop.f32.mrf.mxu0
    %v2873 = vadd.f32 0.0, %v2872
    %2874 = vmatmul.f32.gmra.mxu0 %v2343
    %v2875 = vpop.f32.mrf.mxu0
    %v2876 = vadd.f32 0.0, %v2875
    %2877 = vmatmul.f32.gmra.mxu0 %v2345
    %v2878 = vpop.f32.mrf.mxu0
    %v2879 = vadd.f32 0.0, %v2878
    %2880 = vmatmul.f32.gmra.mxu0 %v2347
    %v2881 = vpop.f32.mrf.mxu0
    %v2882 = vadd.f32 0.0, %v2881
    %2883 = vmatmul.f32.gmra.mxu0 %v2349
    %v2884 = vpop.f32.mrf.mxu0
    %v2885 = vadd.f32 0.0, %v2884
    %2886 = vmatmul.f32.gmra.mxu0 %v2351
    %v2887 = vpop.f32.mrf.mxu0
    %v2888 = vadd.f32 0.0, %v2887
    %2889 = vmatmul.f32.gmra.mxu0 %v2353
    %v2890 = vpop.f32.mrf.mxu0
    %v2891 = vadd.f32 0.0, %v2890
    %2892 = vmatmul.f32.gmra.mxu0 %v2355
    %v2893 = vpop.f32.mrf.mxu0
    %v2894 = vadd.f32 0.0, %v2893
    %2895 = vmatmul.f32.gmra.mxu0 %v2357
    %v2896 = vpop.f32.mrf.mxu0
    %v2897 = vadd.f32 0.0, %v2896
    %2898 = vmatmul.f32.gmra.mxu0 %v2359
    %v2899 = vpop.f32.mrf.mxu0
    %v2900 = vadd.f32 0.0, %v2899
    %2901 = vmatmul.f32.gmra.mxu0 %v2361
    %v2902 = vpop.f32.mrf.mxu0
    %v2903 = vadd.f32 0.0, %v2902
    %2904 = vmatmul.f32.gmra.mxu0 %v2363
    %v2905 = vpop.f32.mrf.mxu0
    %v2906 = vadd.f32 0.0, %v2905
    %2907 = vmatmul.f32.gmra.mxu0 %v2365
    %v2908 = vpop.f32.mrf.mxu0
    %v2909 = vadd.f32 0.0, %v2908
    %2910 = vmatmul.f32.gmra.mxu0 %v2367
    %v2911 = vpop.f32.mrf.mxu0
    %v2912 = vadd.f32 0.0, %v2911
    %2913 = vmatmul.f32.gmra.mxu0 %v2369
    %v2914 = vpop.f32.mrf.mxu0
    %v2915 = vadd.f32 0.0, %v2914
    %2916 = vmatmul.f32.gmra.mxu0 %v2371
    %v2917 = vpop.f32.mrf.mxu0
    %v2918 = vadd.f32 0.0, %v2917
    %2919 = vmatmul.f32.gmra.mxu0 %v2373
    %v2920 = vpop.f32.mrf.mxu0
    %v2921 = vadd.f32 0.0, %v2920
    %2922 = vmatmul.f32.gmra.mxu0 %v2375
    %v2923 = vpop.f32.mrf.mxu0
    %v2924 = vadd.f32 0.0, %v2923
    %2925 = vmatmul.f32.gmra.mxu0 %v2377
    %v2926 = vpop.f32.mrf.mxu0
    %v2927 = vadd.f32 0.0, %v2926
    %2928 = vmatmul.f32.gmra.mxu0 %v2379
    %v2929 = vpop.f32.mrf.mxu0
    %v2930 = vadd.f32 0.0, %v2929
    %2931 = vmatmul.f32.gmra.mxu0 %v2381
    %v2932 = vpop.f32.mrf.mxu0
    %v2933 = vadd.f32 0.0, %v2932
    %2934 = vdwg.mxu0
    %v2935 = vadd.f32 %v2109, %v2419
    %v2936 = vadd.f32 %v2110, %v2508
    %v2937 = vadd.f32 %v2111, %v2597
    %v2938 = vadd.f32 %v2112, %v2686
    %v2939 = vadd.f32 %v2113, %v2775
    %v2940 = vadd.f32 %v2114, %v2864
    %v2941 = vadd.f32 %v2115, %v2422
    %v2942 = vadd.f32 %v2116, %v2511
    %v2943 = vadd.f32 %v2117, %v2600
    %v2944 = vadd.f32 %v2118, %v2689
    %v2945 = vadd.f32 %v2119, %v2778
    %v2946 = vadd.f32 %v2120, %v2867
    %v2947 = vadd.f32 %v2121, %v2425
    %v2948 = vadd.f32 %v2122, %v2514
    %v2949 = vadd.f32 %v2123, %v2603
    %v2950 = vadd.f32 %v2124, %v2692
    %v2951 = vadd.f32 %v2125, %v2781
    %v2952 = vadd.f32 %v2126, %v2870
    %v2953 = vadd.f32 %v2127, %v2428
    %v2954 = vadd.f32 %v2128, %v2517
    %v2955 = vadd.f32 %v2129, %v2606
    %v2956 = vadd.f32 %v2130, %v2695
    %v2957 = vadd.f32 %v2131, %v2784
    %v2958 = vadd.f32 %v2132, %v2873
    %v2959 = vadd.f32 %v2133, %v2431
    %v2960 = vadd.f32 %v2134, %v2520
    %v2961 = vadd.f32 %v2135, %v2609
    %v2962 = vadd.f32 %v2136, %v2698
    %v2963 = vadd.f32 %v2137, %v2787
    %v2964 = vadd.f32 %v2138, %v2876
    %v2965 = vadd.f32 %v2139, %v2434
    %v2966 = vadd.f32 %v2140, %v2523
    %v2967 = vadd.f32 %v2141, %v2612
    %v2968 = vadd.f32 %v2142, %v2701
    %v2969 = vadd.f32 %v2143, %v2790
    %v2970 = vadd.f32 %v2144, %v2879
    %v2971 = vadd.f32 %v2145, %v2437
    %v2972 = vadd.f32 %v2146, %v2526
    %v2973 = vadd.f32 %v2147, %v2615
    %v2974 = vadd.f32 %v2148, %v2704
    %v2975 = vadd.f32 %v2149, %v2793
    %v2976 = vadd.f32 %v2150, %v2882
    %v2977 = vadd.f32 %v2151, %v2440
    %v2978 = vadd.f32 %v2152, %v2529
    %v2979 = vadd.f32 %v2153, %v2618
    %v2980 = vadd.f32 %v2154, %v2707
    %v2981 = vadd.f32 %v2155, %v2796
    %v2982 = vadd.f32 %v2156, %v2885
    %v2983 = vadd.f32 %v2157, %v2443
    %v2984 = vadd.f32 %v2158, %v2532
    %v2985 = vadd.f32 %v2159, %v2621
    %v2986 = vadd.f32 %v2160, %v2710
    %v2987 = vadd.f32 %v2161, %v2799
    %v2988 = vadd.f32 %v2162, %v2888
    %v2989 = vadd.f32 %v2163, %v2446
    %v2990 = vadd.f32 %v2164, %v2535
    %v2991 = vadd.f32 %v2165, %v2624
    %v2992 = vadd.f32 %v2166, %v2713
    %v2993 = vadd.f32 %v2167, %v2802
    %v2994 = vadd.f32 %v2168, %v2891
    %v2995 = vadd.f32 %v2169, %v2449
    %v2996 = vadd.f32 %v2170, %v2538
    %v2997 = vadd.f32 %v2171, %v2627
    %v2998 = vadd.f32 %v2172, %v2716
    %v2999 = vadd.f32 %v2173, %v2805
    %v3000 = vadd.f32 %v2174, %v2894
    %v3001 = vadd.f32 %v2175, %v2452
    %v3002 = vadd.f32 %v2176, %v2541
    %v3003 = vadd.f32 %v2177, %v2630
    %v3004 = vadd.f32 %v2178, %v2719
    %v3005 = vadd.f32 %v2179, %v2808
    %v3006 = vadd.f32 %v2180, %v2897
    %v3007 = vadd.f32 %v2181, %v2455
    %v3008 = vadd.f32 %v2182, %v2544
    %v3009 = vadd.f32 %v2183, %v2633
    %v3010 = vadd.f32 %v2184, %v2722
    %v3011 = vadd.f32 %v2185, %v2811
    %v3012 = vadd.f32 %v2186, %v2900
    %v3013 = vadd.f32 %v2187, %v2458
    %v3014 = vadd.f32 %v2188, %v2547
    %v3015 = vadd.f32 %v2189, %v2636
    %v3016 = vadd.f32 %v2190, %v2725
    %v3017 = vadd.f32 %v2191, %v2814
    %v3018 = vadd.f32 %v2192, %v2903
    %v3019 = vadd.f32 %v2193, %v2461
    %v3020 = vadd.f32 %v2194, %v2550
    %v3021 = vadd.f32 %v2195, %v2639
    %v3022 = vadd.f32 %v2196, %v2728
    %v3023 = vadd.f32 %v2197, %v2817
    %v3024 = vadd.f32 %v2198, %v2906
    %v3025 = vadd.f32 %v2199, %v2464
    %v3026 = vadd.f32 %v2200, %v2553
    %v3027 = vadd.f32 %v2201, %v2642
    %v3028 = vadd.f32 %v2202, %v2731
    %v3029 = vadd.f32 %v2203, %v2820
    %v3030 = vadd.f32 %v2204, %v2909
    %v3031 = vadd.f32 %v2205, %v2467
    %v3032 = vadd.f32 %v2206, %v2556
    %v3033 = vadd.f32 %v2207, %v2645
    %v3034 = vadd.f32 %v2208, %v2734
    %v3035 = vadd.f32 %v2209, %v2823
    %v3036 = vadd.f32 %v2210, %v2912
    %v3037 = vadd.f32 %v2211, %v2470
    %v3038 = vadd.f32 %v2212, %v2559
    %v3039 = vadd.f32 %v2213, %v2648
    %v3040 = vadd.f32 %v2214, %v2737
    %v3041 = vadd.f32 %v2215, %v2826
    %v3042 = vadd.f32 %v2216, %v2915
    %v3043 = vadd.f32 %v2217, %v2473
    %v3044 = vadd.f32 %v2218, %v2562
    %v3045 = vadd.f32 %v2219, %v2651
    %v3046 = vadd.f32 %v2220, %v2740
    %v3047 = vadd.f32 %v2221, %v2829
    %v3048 = vadd.f32 %v2222, %v2918
    %v3049 = vadd.f32 %v2223, %v2476
    %v3050 = vadd.f32 %v2224, %v2565
    %v3051 = vadd.f32 %v2225, %v2654
    %v3052 = vadd.f32 %v2226, %v2743
    %v3053 = vadd.f32 %v2227, %v2832
    %v3054 = vadd.f32 %v2228, %v2921
    %v3055 = vadd.f32 %v2229, %v2479
    %v3056 = vadd.f32 %v2230, %v2568
    %v3057 = vadd.f32 %v2231, %v2657
    %v3058 = vadd.f32 %v2232, %v2746
    %v3059 = vadd.f32 %v2233, %v2835
    %v3060 = vadd.f32 %v2234, %v2924
    %v3061 = vadd.f32 %v2235, %v2482
    %v3062 = vadd.f32 %v2236, %v2571
    %v3063 = vadd.f32 %v2237, %v2660
    %v3064 = vadd.f32 %v2238, %v2749
    %v3065 = vadd.f32 %v2239, %v2838
    %v3066 = vadd.f32 %v2240, %v2927
    %v3067 = vadd.f32 %v2241, %v2485
    %v3068 = vadd.f32 %v2242, %v2574
    %v3069 = vadd.f32 %v2243, %v2663
    %v3070 = vadd.f32 %v2244, %v2752
    %v3071 = vadd.f32 %v2245, %v2841
    %v3072 = vadd.f32 %v2246, %v2930
    %v3073 = vadd.f32 %v2247, %v2488
    %v3074 = vadd.f32 %v2248, %v2577
    %v3075 = vadd.f32 %v2249, %v2666
    %v3076 = vadd.f32 %v2250, %v2755
    %v3077 = vadd.f32 %v2251, %v2844
    %v3078 = vadd.f32 %v2252, %v2933
    %v3079 = vrot.slane %v55, 4
    %v3080 = vrot.slane %v56, 4
    %v3081 = vsel %vm274, %v3079, %v3080
    %v3082 = vrot.slane %v57, 4
    %v3083 = vsel %vm274, %v3080, %v3082
    %v3084 = vrot.slane %v58, 4
    %v3085 = vsel %vm274, %v3082, %v3084
    %v3086 = vrot.slane %v59, 4
    %v3087 = vrot.slane %v60, 4
    %v3088 = vsel %vm274, %v3086, %v3087
    %v3089 = vrot.slane %v61, 4
    %v3090 = vsel %vm274, %v3087, %v3089
    %v3091 = vrot.slane %v62, 4
    %v3092 = vsel %vm274, %v3089, %v3091
    %v3093 = vrot.slane %v63, 4
    %v3094 = vrot.slane %v64, 4
    %v3095 = vsel %vm274, %v3093, %v3094
    %v3096 = vrot.slane %v65, 4
    %v3097 = vsel %vm274, %v3094, %v3096
    %v3098 = vrot.slane %v66, 4
    %v3099 = vsel %vm274, %v3096, %v3098
    %v3100 = vrot.slane %v67, 4
    %v3101 = vrot.slane %v68, 4
    %v3102 = vsel %vm274, %v3100, %v3101
    %v3103 = vrot.slane %v69, 4
    %v3104 = vsel %vm274, %v3101, %v3103
    %v3105 = vrot.slane %v70, 4
    %v3106 = vsel %vm274, %v3103, %v3105
    %v3107 = vrot.slane %v71, 4
    %v3108 = vrot.slane %v72, 4
    %v3109 = vsel %vm274, %v3107, %v3108
    %v3110 = vrot.slane %v73, 4
    %v3111 = vsel %vm274, %v3108, %v3110
    %v3112 = vrot.slane %v74, 4
    %v3113 = vsel %vm274, %v3110, %v3112
    %v3114 = vrot.slane %v75, 4
    %v3115 = vrot.slane %v76, 4
    %v3116 = vsel %vm274, %v3114, %v3115
    %v3117 = vrot.slane %v77, 4
    %v3118 = vsel %vm274, %v3115, %v3117
    %v3119 = vrot.slane %v78, 4
    %v3120 = vsel %vm274, %v3117, %v3119
    %v3121 = vrot.slane %v79, 4
    %v3122 = vrot.slane %v80, 4
    %v3123 = vsel %vm274, %v3121, %v3122
    %v3124 = vrot.slane %v81, 4
    %v3125 = vsel %vm274, %v3122, %v3124
    %v3126 = vrot.slane %v82, 4
    %v3127 = vsel %vm274, %v3124, %v3126
    %v3128 = vrot.slane %v83, 4
    %v3129 = vrot.slane %v84, 4
    %v3130 = vsel %vm274, %v3128, %v3129
    %v3131 = vrot.slane %v85, 4
    %v3132 = vsel %vm274, %v3129, %v3131
    %v3133 = vrot.slane %v86, 4
    %v3134 = vsel %vm274, %v3131, %v3133
    %s3135 = scalar_lea.vmem [#allocation3], 768
    %v3136 = vld [vmem:[%s3135] sm:$0xff]
    %v3137 = vld [vmem:[%s3135 + $0x8] sm:$0xff]
    %v3138 = vld [vmem:[%s3135 + $0x10] sm:$0xff]
    %v3139 = vld [vmem:[%s3135 + $0x18] sm:$0xff]
    %v3140 = vld [vmem:[%s3135 + $0x20] sm:$0xff]
    %v3141 = vld [vmem:[%s3135 + $0x28] sm:$0xff]
    %v3142 = vld [vmem:[%s3135 + $0x30] sm:$0xff]
    %v3143 = vld [vmem:[%s3135 + $0x38] sm:$0xff]
    %v3144 = vld [vmem:[%s3135 + $0x40] sm:$0xff]
    %v3145 = vld [vmem:[%s3135 + $0x48] sm:$0xff]
    %v3146 = vld [vmem:[%s3135 + $0x50] sm:$0xff]
    %v3147 = vld [vmem:[%s3135 + $0x58] sm:$0xff]
    %v3148 = vld [vmem:[%s3135 + $0x60] sm:$0xff]
    %v3149 = vld [vmem:[%s3135 + $0x68] sm:$0xff]
    %v3150 = vld [vmem:[%s3135 + $0x70] sm:$0xff]
    %v3151 = vld [vmem:[%s3135 + $0x78] sm:$0xff]
    %v3152 = vld [vmem:[%s3135 + $0x80] sm:$0xff]
    %v3153 = vld [vmem:[%s3135 + $0x88] sm:$0xff]
    %v3154 = vld [vmem:[%s3135 + $0x90] sm:$0xf]
    %v3155 = vld [vmem:[%s3135 + $0x98] sm:$0xf]
    %v3156 = vld [vmem:[%s3135 + $0xa0] sm:$0xf]
    %v3157 = vld [vmem:[%s3135 + $0xa8] sm:$0xf]
    %v3158 = vld [vmem:[%s3135 + $0xb0] sm:$0xf]
    %v3159 = vld [vmem:[%s3135 + $0xb8] sm:$0xf]
    %v3160 = vsel %vm225, %v3081, 0
    %v3162 = vsel %vm225, %v3083, 0
    %v3164 = vsel %vm225, %v3085, 0
    %v3166 = vsel %vm225, %v3088, 0
    %v3168 = vsel %vm225, %v3090, 0
    %v3170 = vsel %vm225, %v3092, 0
    %v3172 = vsel %vm225, %v3095, 0
    %v3174 = vsel %vm225, %v3097, 0
    %v3176 = vsel %vm225, %v3099, 0
    %v3178 = vsel %vm225, %v3102, 0
    %v3180 = vsel %vm225, %v3104, 0
    %v3182 = vsel %vm225, %v3106, 0
    %v3184 = vsel %vm225, %v3109, 0
    %v3186 = vsel %vm225, %v3111, 0
    %v3188 = vsel %vm225, %v3113, 0
    %v3190 = vsel %vm225, %v3116, 0
    %v3192 = vsel %vm225, %v3118, 0
    %v3194 = vsel %vm225, %v3120, 0
    %v3196 = vsel %vm225, %v3123, 0
    %v3198 = vsel %vm225, %v3125, 0
    %v3200 = vsel %vm225, %v3127, 0
    %v3202 = vsel %vm225, %v3130, 0
    %v3204 = vsel %vm225, %v3132, 0
    %v3206 = vsel %vm225, %v3134, 0
    %v3209 = vsel %vm274, %v3154, 0
    %v3212 = vsel %vm274, %v3155, 0
    %v3215 = vsel %vm274, %v3156, 0
    %v3218 = vsel %vm274, %v3157, 0
    %v3221 = vsel %vm274, %v3158, 0
    %v3224 = vsel %vm274, %v3159, 0
    %3226 = vmatpush.msra.mxu0 0.0
    %3227 = vmatpush.msra.mxu0 0.0
    %3228 = vmatpush.msra.mxu0 0.0
    %3229 = vmatpush.msra.mxu0 0.0
    %3230 = vmatpush.msra.mxu0 0.0
    %3231 = vmatpush.msra.mxu0 0.0
    %3232 = vmatpush.msra.mxu0 0.0
    %3233 = vmatpush.msra.mxu0 0.0
    %3234 = vmatpush.msra.mxu0 0.0
    %3235 = vmatpush.msra.mxu0 0.0
    %3236 = vmatpush.msra.mxu0 0.0
    %3237 = vmatpush.msra.mxu0 0.0
    %3238 = vmatpush.msra.mxu0 %v3209
    %3239 = vmatpush.msra.mxu0 %v3148
    %3240 = vmatpush.msra.mxu0 %v3142
    %3241 = vmatpush.msra.mxu0 %v3136
    %3242 = vmatmul.f32.gmra.mxu0 %v3160
    %v3243 = vpop.f32.mrf.mxu0
    %v3244 = vadd.f32 0.0, %v3243
    %3245 = vmatmul.f32.gmra.mxu0 %v3162
    %v3246 = vpop.f32.mrf.mxu0
    %v3247 = vadd.f32 0.0, %v3246
    %3248 = vmatmul.f32.gmra.mxu0 %v3164
    %v3249 = vpop.f32.mrf.mxu0
    %v3250 = vadd.f32 0.0, %v3249
    %3251 = vmatmul.f32.gmra.mxu0 %v3166
    %v3252 = vpop.f32.mrf.mxu0
    %v3253 = vadd.f32 0.0, %v3252
    %3254 = vmatmul.f32.gmra.mxu0 %v3168
    %v3255 = vpop.f32.mrf.mxu0
    %v3256 = vadd.f32 0.0, %v3255
    %3257 = vmatmul.f32.gmra.mxu0 %v3170
    %v3258 = vpop.f32.mrf.mxu0
    %v3259 = vadd.f32 0.0, %v3258
    %3260 = vmatmul.f32.gmra.mxu0 %v3172
    %v3261 = vpop.f32.mrf.mxu0
    %v3262 = vadd.f32 0.0, %v3261
    %3263 = vmatmul.f32.gmra.mxu0 %v3174
    %v3264 = vpop.f32.mrf.mxu0
    %v3265 = vadd.f32 0.0, %v3264
    %3266 = vmatmul.f32.gmra.mxu0 %v3176
    %v3267 = vpop.f32.mrf.mxu0
    %v3268 = vadd.f32 0.0, %v3267
    %3269 = vmatmul.f32.gmra.mxu0 %v3178
    %v3270 = vpop.f32.mrf.mxu0
    %v3271 = vadd.f32 0.0, %v3270
    %3272 = vmatmul.f32.gmra.mxu0 %v3180
    %v3273 = vpop.f32.mrf.mxu0
    %v3274 = vadd.f32 0.0, %v3273
    %3275 = vmatmul.f32.gmra.mxu0 %v3182
    %v3276 = vpop.f32.mrf.mxu0
    %v3277 = vadd.f32 0.0, %v3276
    %3278 = vmatmul.f32.gmra.mxu0 %v3184
    %v3279 = vpop.f32.mrf.mxu0
    %v3280 = vadd.f32 0.0, %v3279
    %3281 = vmatmul.f32.gmra.mxu0 %v3186
    %v3282 = vpop.f32.mrf.mxu0
    %v3283 = vadd.f32 0.0, %v3282
    %3284 = vmatmul.f32.gmra.mxu0 %v3188
    %v3285 = vpop.f32.mrf.mxu0
    %v3286 = vadd.f32 0.0, %v3285
    %3287 = vmatmul.f32.gmra.mxu0 %v3190
    %v3288 = vpop.f32.mrf.mxu0
    %v3289 = vadd.f32 0.0, %v3288
    %3290 = vmatmul.f32.gmra.mxu0 %v3192
    %v3291 = vpop.f32.mrf.mxu0
    %v3292 = vadd.f32 0.0, %v3291
    %3293 = vmatmul.f32.gmra.mxu0 %v3194
    %v3294 = vpop.f32.mrf.mxu0
    %v3295 = vadd.f32 0.0, %v3294
    %3296 = vmatmul.f32.gmra.mxu0 %v3196
    %v3297 = vpop.f32.mrf.mxu0
    %v3298 = vadd.f32 0.0, %v3297
    %3299 = vmatmul.f32.gmra.mxu0 %v3198
    %v3300 = vpop.f32.mrf.mxu0
    %v3301 = vadd.f32 0.0, %v3300
    %3302 = vmatmul.f32.gmra.mxu0 %v3200
    %v3303 = vpop.f32.mrf.mxu0
    %v3304 = vadd.f32 0.0, %v3303
    %3305 = vmatmul.f32.gmra.mxu0 %v3202
    %v3306 = vpop.f32.mrf.mxu0
    %v3307 = vadd.f32 0.0, %v3306
    %3308 = vmatmul.f32.gmra.mxu0 %v3204
    %v3309 = vpop.f32.mrf.mxu0
    %v3310 = vadd.f32 0.0, %v3309
    %3311 = vmatmul.f32.gmra.mxu0 %v3206
    %v3312 = vpop.f32.mrf.mxu0
    %v3313 = vadd.f32 0.0, %v3312
    %3314 = vdwg.mxu0
    %3315 = vmatpush.msra.mxu0 0.0
    %3316 = vmatpush.msra.mxu0 0.0
    %3317 = vmatpush.msra.mxu0 0.0
    %3318 = vmatpush.msra.mxu0 0.0
    %3319 = vmatpush.msra.mxu0 0.0
    %3320 = vmatpush.msra.mxu0 0.0
    %3321 = vmatpush.msra.mxu0 0.0
    %3322 = vmatpush.msra.mxu0 0.0
    %3323 = vmatpush.msra.mxu0 0.0
    %3324 = vmatpush.msra.mxu0 0.0
    %3325 = vmatpush.msra.mxu0 0.0
    %3326 = vmatpush.msra.mxu0 0.0
    %3327 = vmatpush.msra.mxu0 %v3212
    %3328 = vmatpush.msra.mxu0 %v3149
    %3329 = vmatpush.msra.mxu0 %v3143
    %3330 = vmatpush.msra.mxu0 %v3137
    %3331 = vmatmul.f32.gmra.mxu0 %v3160
    %v3332 = vpop.f32.mrf.mxu0
    %v3333 = vadd.f32 0.0, %v3332
    %3334 = vmatmul.f32.gmra.mxu0 %v3162
    %v3335 = vpop.f32.mrf.mxu0
    %v3336 = vadd.f32 0.0, %v3335
    %3337 = vmatmul.f32.gmra.mxu0 %v3164
    %v3338 = vpop.f32.mrf.mxu0
    %v3339 = vadd.f32 0.0, %v3338
    %3340 = vmatmul.f32.gmra.mxu0 %v3166
    %v3341 = vpop.f32.mrf.mxu0
    %v3342 = vadd.f32 0.0, %v3341
    %3343 = vmatmul.f32.gmra.mxu0 %v3168
    %v3344 = vpop.f32.mrf.mxu0
    %v3345 = vadd.f32 0.0, %v3344
    %3346 = vmatmul.f32.gmra.mxu0 %v3170
    %v3347 = vpop.f32.mrf.mxu0
    %v3348 = vadd.f32 0.0, %v3347
    %3349 = vmatmul.f32.gmra.mxu0 %v3172
    %v3350 = vpop.f32.mrf.mxu0
    %v3351 = vadd.f32 0.0, %v3350
    %3352 = vmatmul.f32.gmra.mxu0 %v3174
    %v3353 = vpop.f32.mrf.mxu0
    %v3354 = vadd.f32 0.0, %v3353
    %3355 = vmatmul.f32.gmra.mxu0 %v3176
    %v3356 = vpop.f32.mrf.mxu0
    %v3357 = vadd.f32 0.0, %v3356
    %3358 = vmatmul.f32.gmra.mxu0 %v3178
    %v3359 = vpop.f32.mrf.mxu0
    %v3360 = vadd.f32 0.0, %v3359
    %3361 = vmatmul.f32.gmra.mxu0 %v3180
    %v3362 = vpop.f32.mrf.mxu0
    %v3363 = vadd.f32 0.0, %v3362
    %3364 = vmatmul.f32.gmra.mxu0 %v3182
    %v3365 = vpop.f32.mrf.mxu0
    %v3366 = vadd.f32 0.0, %v3365
    %3367 = vmatmul.f32.gmra.mxu0 %v3184
    %v3368 = vpop.f32.mrf.mxu0
    %v3369 = vadd.f32 0.0, %v3368
    %3370 = vmatmul.f32.gmra.mxu0 %v3186
    %v3371 = vpop.f32.mrf.mxu0
    %v3372 = vadd.f32 0.0, %v3371
    %3373 = vmatmul.f32.gmra.mxu0 %v3188
    %v3374 = vpop.f32.mrf.mxu0
    %v3375 = vadd.f32 0.0, %v3374
    %3376 = vmatmul.f32.gmra.mxu0 %v3190
    %v3377 = vpop.f32.mrf.mxu0
    %v3378 = vadd.f32 0.0, %v3377
    %3379 = vmatmul.f32.gmra.mxu0 %v3192
    %v3380 = vpop.f32.mrf.mxu0
    %v3381 = vadd.f32 0.0, %v3380
    %3382 = vmatmul.f32.gmra.mxu0 %v3194
    %v3383 = vpop.f32.mrf.mxu0
    %v3384 = vadd.f32 0.0, %v3383
    %3385 = vmatmul.f32.gmra.mxu0 %v3196
    %v3386 = vpop.f32.mrf.mxu0
    %v3387 = vadd.f32 0.0, %v3386
    %3388 = vmatmul.f32.gmra.mxu0 %v3198
    %v3389 = vpop.f32.mrf.mxu0
    %v3390 = vadd.f32 0.0, %v3389
    %3391 = vmatmul.f32.gmra.mxu0 %v3200
    %v3392 = vpop.f32.mrf.mxu0
    %v3393 = vadd.f32 0.0, %v3392
    %3394 = vmatmul.f32.gmra.mxu0 %v3202
    %v3395 = vpop.f32.mrf.mxu0
    %v3396 = vadd.f32 0.0, %v3395
    %3397 = vmatmul.f32.gmra.mxu0 %v3204
    %v3398 = vpop.f32.mrf.mxu0
    %v3399 = vadd.f32 0.0, %v3398
    %3400 = vmatmul.f32.gmra.mxu0 %v3206
    %v3401 = vpop.f32.mrf.mxu0
    %v3402 = vadd.f32 0.0, %v3401
    %3403 = vdwg.mxu0
    %3404 = vmatpush.msra.mxu0 0.0
    %3405 = vmatpush.msra.mxu0 0.0
    %3406 = vmatpush.msra.mxu0 0.0
    %3407 = vmatpush.msra.mxu0 0.0
    %3408 = vmatpush.msra.mxu0 0.0
    %3409 = vmatpush.msra.mxu0 0.0
    %3410 = vmatpush.msra.mxu0 0.0
    %3411 = vmatpush.msra.mxu0 0.0
    %3412 = vmatpush.msra.mxu0 0.0
    %3413 = vmatpush.msra.mxu0 0.0
    %3414 = vmatpush.msra.mxu0 0.0
    %3415 = vmatpush.msra.mxu0 0.0
    %3416 = vmatpush.msra.mxu0 %v3215
    %3417 = vmatpush.msra.mxu0 %v3150
    %3418 = vmatpush.msra.mxu0 %v3144
    %3419 = vmatpush.msra.mxu0 %v3138
    %3420 = vmatmul.f32.gmra.mxu0 %v3160
    %v3421 = vpop.f32.mrf.mxu0
    %v3422 = vadd.f32 0.0, %v3421
    %3423 = vmatmul.f32.gmra.mxu0 %v3162
    %v3424 = vpop.f32.mrf.mxu0
    %v3425 = vadd.f32 0.0, %v3424
    %3426 = vmatmul.f32.gmra.mxu0 %v3164
    %v3427 = vpop.f32.mrf.mxu0
    %v3428 = vadd.f32 0.0, %v3427
    %3429 = vmatmul.f32.gmra.mxu0 %v3166
    %v3430 = vpop.f32.mrf.mxu0
    %v3431 = vadd.f32 0.0, %v3430
    %3432 = vmatmul.f32.gmra.mxu0 %v3168
    %v3433 = vpop.f32.mrf.mxu0
    %v3434 = vadd.f32 0.0, %v3433
    %3435 = vmatmul.f32.gmra.mxu0 %v3170
    %v3436 = vpop.f32.mrf.mxu0
    %v3437 = vadd.f32 0.0, %v3436
    %3438 = vmatmul.f32.gmra.mxu0 %v3172
    %v3439 = vpop.f32.mrf.mxu0
    %v3440 = vadd.f32 0.0, %v3439
    %3441 = vmatmul.f32.gmra.mxu0 %v3174
    %v3442 = vpop.f32.mrf.mxu0
    %v3443 = vadd.f32 0.0, %v3442
    %3444 = vmatmul.f32.gmra.mxu0 %v3176
    %v3445 = vpop.f32.mrf.mxu0
    %v3446 = vadd.f32 0.0, %v3445
    %3447 = vmatmul.f32.gmra.mxu0 %v3178
    %v3448 = vpop.f32.mrf.mxu0
    %v3449 = vadd.f32 0.0, %v3448
    %3450 = vmatmul.f32.gmra.mxu0 %v3180
    %v3451 = vpop.f32.mrf.mxu0
    %v3452 = vadd.f32 0.0, %v3451
    %3453 = vmatmul.f32.gmra.mxu0 %v3182
    %v3454 = vpop.f32.mrf.mxu0
    %v3455 = vadd.f32 0.0, %v3454
    %3456 = vmatmul.f32.gmra.mxu0 %v3184
    %v3457 = vpop.f32.mrf.mxu0
    %v3458 = vadd.f32 0.0, %v3457
    %3459 = vmatmul.f32.gmra.mxu0 %v3186
    %v3460 = vpop.f32.mrf.mxu0
    %v3461 = vadd.f32 0.0, %v3460
    %3462 = vmatmul.f32.gmra.mxu0 %v3188
    %v3463 = vpop.f32.mrf.mxu0
    %v3464 = vadd.f32 0.0, %v3463
    %3465 = vmatmul.f32.gmra.mxu0 %v3190
    %v3466 = vpop.f32.mrf.mxu0
    %v3467 = vadd.f32 0.0, %v3466
    %3468 = vmatmul.f32.gmra.mxu0 %v3192
    %v3469 = vpop.f32.mrf.mxu0
    %v3470 = vadd.f32 0.0, %v3469
    %3471 = vmatmul.f32.gmra.mxu0 %v3194
    %v3472 = vpop.f32.mrf.mxu0
    %v3473 = vadd.f32 0.0, %v3472
    %3474 = vmatmul.f32.gmra.mxu0 %v3196
    %v3475 = vpop.f32.mrf.mxu0
    %v3476 = vadd.f32 0.0, %v3475
    %3477 = vmatmul.f32.gmra.mxu0 %v3198
    %v3478 = vpop.f32.mrf.mxu0
    %v3479 = vadd.f32 0.0, %v3478
    %3480 = vmatmul.f32.gmra.mxu0 %v3200
    %v3481 = vpop.f32.mrf.mxu0
    %v3482 = vadd.f32 0.0, %v3481
    %3483 = vmatmul.f32.gmra.mxu0 %v3202
    %v3484 = vpop.f32.mrf.mxu0
    %v3485 = vadd.f32 0.0, %v3484
    %3486 = vmatmul.f32.gmra.mxu0 %v3204
    %v3487 = vpop.f32.mrf.mxu0
    %v3488 = vadd.f32 0.0, %v3487
    %3489 = vmatmul.f32.gmra.mxu0 %v3206
    %v3490 = vpop.f32.mrf.mxu0
    %v3491 = vadd.f32 0.0, %v3490
    %3492 = vdwg.mxu0
    %3493 = vmatpush.msra.mxu0 0.0
    %3494 = vmatpush.msra.mxu0 0.0
    %3495 = vmatpush.msra.mxu0 0.0
    %3496 = vmatpush.msra.mxu0 0.0
    %3497 = vmatpush.msra.mxu0 0.0
    %3498 = vmatpush.msra.mxu0 0.0
    %3499 = vmatpush.msra.mxu0 0.0
    %3500 = vmatpush.msra.mxu0 0.0
    %3501 = vmatpush.msra.mxu0 0.0
    %3502 = vmatpush.msra.mxu0 0.0
    %3503 = vmatpush.msra.mxu0 0.0
    %3504 = vmatpush.msra.mxu0 0.0
    %3505 = vmatpush.msra.mxu0 %v3218
    %3506 = vmatpush.msra.mxu0 %v3151
    %3507 = vmatpush.msra.mxu0 %v3145
    %3508 = vmatpush.msra.mxu0 %v3139
    %3509 = vmatmul.f32.gmra.mxu0 %v3160
    %v3510 = vpop.f32.mrf.mxu0
    %v3511 = vadd.f32 0.0, %v3510
    %3512 = vmatmul.f32.gmra.mxu0 %v3162
    %v3513 = vpop.f32.mrf.mxu0
    %v3514 = vadd.f32 0.0, %v3513
    %3515 = vmatmul.f32.gmra.mxu0 %v3164
    %v3516 = vpop.f32.mrf.mxu0
    %v3517 = vadd.f32 0.0, %v3516
    %3518 = vmatmul.f32.gmra.mxu0 %v3166
    %v3519 = vpop.f32.mrf.mxu0
    %v3520 = vadd.f32 0.0, %v3519
    %3521 = vmatmul.f32.gmra.mxu0 %v3168
    %v3522 = vpop.f32.mrf.mxu0
    %v3523 = vadd.f32 0.0, %v3522
    %3524 = vmatmul.f32.gmra.mxu0 %v3170
    %v3525 = vpop.f32.mrf.mxu0
    %v3526 = vadd.f32 0.0, %v3525
    %3527 = vmatmul.f32.gmra.mxu0 %v3172
    %v3528 = vpop.f32.mrf.mxu0
    %v3529 = vadd.f32 0.0, %v3528
    %3530 = vmatmul.f32.gmra.mxu0 %v3174
    %v3531 = vpop.f32.mrf.mxu0
    %v3532 = vadd.f32 0.0, %v3531
    %3533 = vmatmul.f32.gmra.mxu0 %v3176
    %v3534 = vpop.f32.mrf.mxu0
    %v3535 = vadd.f32 0.0, %v3534
    %3536 = vmatmul.f32.gmra.mxu0 %v3178
    %v3537 = vpop.f32.mrf.mxu0
    %v3538 = vadd.f32 0.0, %v3537
    %3539 = vmatmul.f32.gmra.mxu0 %v3180
    %v3540 = vpop.f32.mrf.mxu0
    %v3541 = vadd.f32 0.0, %v3540
    %3542 = vmatmul.f32.gmra.mxu0 %v3182
    %v3543 = vpop.f32.mrf.mxu0
    %v3544 = vadd.f32 0.0, %v3543
    %3545 = vmatmul.f32.gmra.mxu0 %v3184
    %v3546 = vpop.f32.mrf.mxu0
    %v3547 = vadd.f32 0.0, %v3546
    %3548 = vmatmul.f32.gmra.mxu0 %v3186
    %v3549 = vpop.f32.mrf.mxu0
    %v3550 = vadd.f32 0.0, %v3549
    %3551 = vmatmul.f32.gmra.mxu0 %v3188
    %v3552 = vpop.f32.mrf.mxu0
    %v3553 = vadd.f32 0.0, %v3552
    %3554 = vmatmul.f32.gmra.mxu0 %v3190
    %v3555 = vpop.f32.mrf.mxu0
    %v3556 = vadd.f32 0.0, %v3555
    %3557 = vmatmul.f32.gmra.mxu0 %v3192
    %v3558 = vpop.f32.mrf.mxu0
    %v3559 = vadd.f32 0.0, %v3558
    %3560 = vmatmul.f32.gmra.mxu0 %v3194
    %v3561 = vpop.f32.mrf.mxu0
    %v3562 = vadd.f32 0.0, %v3561
    %3563 = vmatmul.f32.gmra.mxu0 %v3196
    %v3564 = vpop.f32.mrf.mxu0
    %v3565 = vadd.f32 0.0, %v3564
    %3566 = vmatmul.f32.gmra.mxu0 %v3198
    %v3567 = vpop.f32.mrf.mxu0
    %v3568 = vadd.f32 0.0, %v3567
    %3569 = vmatmul.f32.gmra.mxu0 %v3200
    %v3570 = vpop.f32.mrf.mxu0
    %v3571 = vadd.f32 0.0, %v3570
    %3572 = vmatmul.f32.gmra.mxu0 %v3202
    %v3573 = vpop.f32.mrf.mxu0
    %v3574 = vadd.f32 0.0, %v3573
    %3575 = vmatmul.f32.gmra.mxu0 %v3204
    %v3576 = vpop.f32.mrf.mxu0
    %v3577 = vadd.f32 0.0, %v3576
    %3578 = vmatmul.f32.gmra.mxu0 %v3206
    %v3579 = vpop.f32.mrf.mxu0
    %v3580 = vadd.f32 0.0, %v3579
    %3581 = vdwg.mxu0
    %3582 = vmatpush.msra.mxu0 0.0
    %3583 = vmatpush.msra.mxu0 0.0
    %3584 = vmatpush.msra.mxu0 0.0
    %3585 = vmatpush.msra.mxu0 0.0
    %3586 = vmatpush.msra.mxu0 0.0
    %3587 = vmatpush.msra.mxu0 0.0
    %3588 = vmatpush.msra.mxu0 0.0
    %3589 = vmatpush.msra.mxu0 0.0
    %3590 = vmatpush.msra.mxu0 0.0
    %3591 = vmatpush.msra.mxu0 0.0
    %3592 = vmatpush.msra.mxu0 0.0
    %3593 = vmatpush.msra.mxu0 0.0
    %3594 = vmatpush.msra.mxu0 %v3221
    %3595 = vmatpush.msra.mxu0 %v3152
    %3596 = vmatpush.msra.mxu0 %v3146
    %3597 = vmatpush.msra.mxu0 %v3140
    %3598 = vmatmul.f32.gmra.mxu0 %v3160
    %v3599 = vpop.f32.mrf.mxu0
    %v3600 = vadd.f32 0.0, %v3599
    %3601 = vmatmul.f32.gmra.mxu0 %v3162
    %v3602 = vpop.f32.mrf.mxu0
    %v3603 = vadd.f32 0.0, %v3602
    %3604 = vmatmul.f32.gmra.mxu0 %v3164
    %v3605 = vpop.f32.mrf.mxu0
    %v3606 = vadd.f32 0.0, %v3605
    %3607 = vmatmul.f32.gmra.mxu0 %v3166
    %v3608 = vpop.f32.mrf.mxu0
    %v3609 = vadd.f32 0.0, %v3608
    %3610 = vmatmul.f32.gmra.mxu0 %v3168
    %v3611 = vpop.f32.mrf.mxu0
    %v3612 = vadd.f32 0.0, %v3611
    %3613 = vmatmul.f32.gmra.mxu0 %v3170
    %v3614 = vpop.f32.mrf.mxu0
    %v3615 = vadd.f32 0.0, %v3614
    %3616 = vmatmul.f32.gmra.mxu0 %v3172
    %v3617 = vpop.f32.mrf.mxu0
    %v3618 = vadd.f32 0.0, %v3617
    %3619 = vmatmul.f32.gmra.mxu0 %v3174
    %v3620 = vpop.f32.mrf.mxu0
    %v3621 = vadd.f32 0.0, %v3620
    %3622 = vmatmul.f32.gmra.mxu0 %v3176
    %v3623 = vpop.f32.mrf.mxu0
    %v3624 = vadd.f32 0.0, %v3623
    %3625 = vmatmul.f32.gmra.mxu0 %v3178
    %v3626 = vpop.f32.mrf.mxu0
    %v3627 = vadd.f32 0.0, %v3626
    %3628 = vmatmul.f32.gmra.mxu0 %v3180
    %v3629 = vpop.f32.mrf.mxu0
    %v3630 = vadd.f32 0.0, %v3629
    %3631 = vmatmul.f32.gmra.mxu0 %v3182
    %v3632 = vpop.f32.mrf.mxu0
    %v3633 = vadd.f32 0.0, %v3632
    %3634 = vmatmul.f32.gmra.mxu0 %v3184
    %v3635 = vpop.f32.mrf.mxu0
    %v3636 = vadd.f32 0.0, %v3635
    %3637 = vmatmul.f32.gmra.mxu0 %v3186
    %v3638 = vpop.f32.mrf.mxu0
    %v3639 = vadd.f32 0.0, %v3638
    %3640 = vmatmul.f32.gmra.mxu0 %v3188
    %v3641 = vpop.f32.mrf.mxu0
    %v3642 = vadd.f32 0.0, %v3641
    %3643 = vmatmul.f32.gmra.mxu0 %v3190
    %v3644 = vpop.f32.mrf.mxu0
    %v3645 = vadd.f32 0.0, %v3644
    %3646 = vmatmul.f32.gmra.mxu0 %v3192
    %v3647 = vpop.f32.mrf.mxu0
    %v3648 = vadd.f32 0.0, %v3647
    %3649 = vmatmul.f32.gmra.mxu0 %v3194
    %v3650 = vpop.f32.mrf.mxu0
    %v3651 = vadd.f32 0.0, %v3650
    %3652 = vmatmul.f32.gmra.mxu0 %v3196
    %v3653 = vpop.f32.mrf.mxu0
    %v3654 = vadd.f32 0.0, %v3653
    %3655 = vmatmul.f32.gmra.mxu0 %v3198
    %v3656 = vpop.f32.mrf.mxu0
    %v3657 = vadd.f32 0.0, %v3656
    %3658 = vmatmul.f32.gmra.mxu0 %v3200
    %v3659 = vpop.f32.mrf.mxu0
    %v3660 = vadd.f32 0.0, %v3659
    %3661 = vmatmul.f32.gmra.mxu0 %v3202
    %v3662 = vpop.f32.mrf.mxu0
    %v3663 = vadd.f32 0.0, %v3662
    %3664 = vmatmul.f32.gmra.mxu0 %v3204
    %v3665 = vpop.f32.mrf.mxu0
    %v3666 = vadd.f32 0.0, %v3665
    %3667 = vmatmul.f32.gmra.mxu0 %v3206
    %v3668 = vpop.f32.mrf.mxu0
    %v3669 = vadd.f32 0.0, %v3668
    %3670 = vdwg.mxu0
    %3671 = vmatpush.msra.mxu0 0.0
    %3672 = vmatpush.msra.mxu0 0.0
    %3673 = vmatpush.msra.mxu0 0.0
    %3674 = vmatpush.msra.mxu0 0.0
    %3675 = vmatpush.msra.mxu0 0.0
    %3676 = vmatpush.msra.mxu0 0.0
    %3677 = vmatpush.msra.mxu0 0.0
    %3678 = vmatpush.msra.mxu0 0.0
    %3679 = vmatpush.msra.mxu0 0.0
    %3680 = vmatpush.msra.mxu0 0.0
    %3681 = vmatpush.msra.mxu0 0.0
    %3682 = vmatpush.msra.mxu0 0.0
    %3683 = vmatpush.msra.mxu0 %v3224
    %3684 = vmatpush.msra.mxu0 %v3153
    %3685 = vmatpush.msra.mxu0 %v3147
    %3686 = vmatpush.msra.mxu0 %v3141
    %3687 = vmatmul.f32.gmra.mxu0 %v3160
    %v3688 = vpop.f32.mrf.mxu0
    %v3689 = vadd.f32 0.0, %v3688
    %3690 = vmatmul.f32.gmra.mxu0 %v3162
    %v3691 = vpop.f32.mrf.mxu0
    %v3692 = vadd.f32 0.0, %v3691
    %3693 = vmatmul.f32.gmra.mxu0 %v3164
    %v3694 = vpop.f32.mrf.mxu0
    %v3695 = vadd.f32 0.0, %v3694
    %3696 = vmatmul.f32.gmra.mxu0 %v3166
    %v3697 = vpop.f32.mrf.mxu0
    %v3698 = vadd.f32 0.0, %v3697
    %3699 = vmatmul.f32.gmra.mxu0 %v3168
    %v3700 = vpop.f32.mrf.mxu0
    %v3701 = vadd.f32 0.0, %v3700
    %3702 = vmatmul.f32.gmra.mxu0 %v3170
    %v3703 = vpop.f32.mrf.mxu0
    %v3704 = vadd.f32 0.0, %v3703
    %3705 = vmatmul.f32.gmra.mxu0 %v3172
    %v3706 = vpop.f32.mrf.mxu0
    %v3707 = vadd.f32 0.0, %v3706
    %3708 = vmatmul.f32.gmra.mxu0 %v3174
    %v3709 = vpop.f32.mrf.mxu0
    %v3710 = vadd.f32 0.0, %v3709
    %3711 = vmatmul.f32.gmra.mxu0 %v3176
    %v3712 = vpop.f32.mrf.mxu0
    %v3713 = vadd.f32 0.0, %v3712
    %3714 = vmatmul.f32.gmra.mxu0 %v3178
    %v3715 = vpop.f32.mrf.mxu0
    %v3716 = vadd.f32 0.0, %v3715
    %3717 = vmatmul.f32.gmra.mxu0 %v3180
    %v3718 = vpop.f32.mrf.mxu0
    %v3719 = vadd.f32 0.0, %v3718
    %3720 = vmatmul.f32.gmra.mxu0 %v3182
    %v3721 = vpop.f32.mrf.mxu0
    %v3722 = vadd.f32 0.0, %v3721
    %3723 = vmatmul.f32.gmra.mxu0 %v3184
    %v3724 = vpop.f32.mrf.mxu0
    %v3725 = vadd.f32 0.0, %v3724
    %3726 = vmatmul.f32.gmra.mxu0 %v3186
    %v3727 = vpop.f32.mrf.mxu0
    %v3728 = vadd.f32 0.0, %v3727
    %3729 = vmatmul.f32.gmra.mxu0 %v3188
    %v3730 = vpop.f32.mrf.mxu0
    %v3731 = vadd.f32 0.0, %v3730
    %3732 = vmatmul.f32.gmra.mxu0 %v3190
    %v3733 = vpop.f32.mrf.mxu0
    %v3734 = vadd.f32 0.0, %v3733
    %3735 = vmatmul.f32.gmra.mxu0 %v3192
    %v3736 = vpop.f32.mrf.mxu0
    %v3737 = vadd.f32 0.0, %v3736
    %3738 = vmatmul.f32.gmra.mxu0 %v3194
    %v3739 = vpop.f32.mrf.mxu0
    %v3740 = vadd.f32 0.0, %v3739
    %3741 = vmatmul.f32.gmra.mxu0 %v3196
    %v3742 = vpop.f32.mrf.mxu0
    %v3743 = vadd.f32 0.0, %v3742
    %3744 = vmatmul.f32.gmra.mxu0 %v3198
    %v3745 = vpop.f32.mrf.mxu0
    %v3746 = vadd.f32 0.0, %v3745
    %3747 = vmatmul.f32.gmra.mxu0 %v3200
    %v3748 = vpop.f32.mrf.mxu0
    %v3749 = vadd.f32 0.0, %v3748
    %3750 = vmatmul.f32.gmra.mxu0 %v3202
    %v3751 = vpop.f32.mrf.mxu0
    %v3752 = vadd.f32 0.0, %v3751
    %3753 = vmatmul.f32.gmra.mxu0 %v3204
    %v3754 = vpop.f32.mrf.mxu0
    %v3755 = vadd.f32 0.0, %v3754
    %3756 = vmatmul.f32.gmra.mxu0 %v3206
    %v3757 = vpop.f32.mrf.mxu0
    %v3758 = vadd.f32 0.0, %v3757
    %3759 = vdwg.mxu0
    %v3760 = vadd.f32 %v2935, %v3244
    %v3761 = vadd.f32 %v2936, %v3333
    %v3762 = vadd.f32 %v2937, %v3422
    %v3763 = vadd.f32 %v2938, %v3511
    %v3764 = vadd.f32 %v2939, %v3600
    %v3765 = vadd.f32 %v2940, %v3689
    %v3766 = vadd.f32 %v2941, %v3247
    %v3767 = vadd.f32 %v2942, %v3336
    %v3768 = vadd.f32 %v2943, %v3425
    %v3769 = vadd.f32 %v2944, %v3514
    %v3770 = vadd.f32 %v2945, %v3603
    %v3771 = vadd.f32 %v2946, %v3692
    %v3772 = vadd.f32 %v2947, %v3250
    %v3773 = vadd.f32 %v2948, %v3339
    %v3774 = vadd.f32 %v2949, %v3428
    %v3775 = vadd.f32 %v2950, %v3517
    %v3776 = vadd.f32 %v2951, %v3606
    %v3777 = vadd.f32 %v2952, %v3695
    %v3778 = vadd.f32 %v2953, %v3253
    %v3779 = vadd.f32 %v2954, %v3342
    %v3780 = vadd.f32 %v2955, %v3431
    %v3781 = vadd.f32 %v2956, %v3520
    %v3782 = vadd.f32 %v2957, %v3609
    %v3783 = vadd.f32 %v2958, %v3698
    %v3784 = vadd.f32 %v2959, %v3256
    %v3785 = vadd.f32 %v2960, %v3345
    %v3786 = vadd.f32 %v2961, %v3434
    %v3787 = vadd.f32 %v2962, %v3523
    %v3788 = vadd.f32 %v2963, %v3612
    %v3789 = vadd.f32 %v2964, %v3701
    %v3790 = vadd.f32 %v2965, %v3259
    %v3791 = vadd.f32 %v2966, %v3348
    %v3792 = vadd.f32 %v2967, %v3437
    %v3793 = vadd.f32 %v2968, %v3526
    %v3794 = vadd.f32 %v2969, %v3615
    %v3795 = vadd.f32 %v2970, %v3704
    %v3796 = vadd.f32 %v2971, %v3262
    %v3797 = vadd.f32 %v2972, %v3351
    %v3798 = vadd.f32 %v2973, %v3440
    %v3799 = vadd.f32 %v2974, %v3529
    %v3800 = vadd.f32 %v2975, %v3618
    %v3801 = vadd.f32 %v2976, %v3707
    %v3802 = vadd.f32 %v2977, %v3265
    %v3803 = vadd.f32 %v2978, %v3354
    %v3804 = vadd.f32 %v2979, %v3443
    %v3805 = vadd.f32 %v2980, %v3532
    %v3806 = vadd.f32 %v2981, %v3621
    %v3807 = vadd.f32 %v2982, %v3710
    %v3808 = vadd.f32 %v2983, %v3268
    %v3809 = vadd.f32 %v2984, %v3357
    %v3810 = vadd.f32 %v2985, %v3446
    %v3811 = vadd.f32 %v2986, %v3535
    %v3812 = vadd.f32 %v2987, %v3624
    %v3813 = vadd.f32 %v2988, %v3713
    %v3814 = vadd.f32 %v2989, %v3271
    %v3815 = vadd.f32 %v2990, %v3360
    %v3816 = vadd.f32 %v2991, %v3449
    %v3817 = vadd.f32 %v2992, %v3538
    %v3818 = vadd.f32 %v2993, %v3627
    %v3819 = vadd.f32 %v2994, %v3716
    %v3820 = vadd.f32 %v2995, %v3274
    %v3821 = vadd.f32 %v2996, %v3363
    %v3822 = vadd.f32 %v2997, %v3452
    %v3823 = vadd.f32 %v2998, %v3541
    %v3824 = vadd.f32 %v2999, %v3630
    %v3825 = vadd.f32 %v3000, %v3719
    %v3826 = vadd.f32 %v3001, %v3277
    %v3827 = vadd.f32 %v3002, %v3366
    %v3828 = vadd.f32 %v3003, %v3455
    %v3829 = vadd.f32 %v3004, %v3544
    %v3830 = vadd.f32 %v3005, %v3633
    %v3831 = vadd.f32 %v3006, %v3722
    %v3832 = vadd.f32 %v3007, %v3280
    %v3833 = vadd.f32 %v3008, %v3369
    %v3834 = vadd.f32 %v3009, %v3458
    %v3835 = vadd.f32 %v3010, %v3547
    %v3836 = vadd.f32 %v3011, %v3636
    %v3837 = vadd.f32 %v3012, %v3725
    %v3838 = vadd.f32 %v3013, %v3283
    %v3839 = vadd.f32 %v3014, %v3372
    %v3840 = vadd.f32 %v3015, %v3461
    %v3841 = vadd.f32 %v3016, %v3550
    %v3842 = vadd.f32 %v3017, %v3639
    %v3843 = vadd.f32 %v3018, %v3728
    %v3844 = vadd.f32 %v3019, %v3286
    %v3845 = vadd.f32 %v3020, %v3375
    %v3846 = vadd.f32 %v3021, %v3464
    %v3847 = vadd.f32 %v3022, %v3553
    %v3848 = vadd.f32 %v3023, %v3642
    %v3849 = vadd.f32 %v3024, %v3731
    %v3850 = vadd.f32 %v3025, %v3289
    %v3851 = vadd.f32 %v3026, %v3378
    %v3852 = vadd.f32 %v3027, %v3467
    %v3853 = vadd.f32 %v3028, %v3556
    %v3854 = vadd.f32 %v3029, %v3645
    %v3855 = vadd.f32 %v3030, %v3734
    %v3856 = vadd.f32 %v3031, %v3292
    %v3857 = vadd.f32 %v3032, %v3381
    %v3858 = vadd.f32 %v3033, %v3470
    %v3859 = vadd.f32 %v3034, %v3559
    %v3860 = vadd.f32 %v3035, %v3648
    %v3861 = vadd.f32 %v3036, %v3737
    %v3862 = vadd.f32 %v3037, %v3295
    %v3863 = vadd.f32 %v3038, %v3384
    %v3864 = vadd.f32 %v3039, %v3473
    %v3865 = vadd.f32 %v3040, %v3562
    %v3866 = vadd.f32 %v3041, %v3651
    %v3867 = vadd.f32 %v3042, %v3740
    %v3868 = vadd.f32 %v3043, %v3298
    %v3869 = vadd.f32 %v3044, %v3387
    %v3870 = vadd.f32 %v3045, %v3476
    %v3871 = vadd.f32 %v3046, %v3565
    %v3872 = vadd.f32 %v3047, %v3654
    %v3873 = vadd.f32 %v3048, %v3743
    %v3874 = vadd.f32 %v3049, %v3301
    %v3875 = vadd.f32 %v3050, %v3390
    %v3876 = vadd.f32 %v3051, %v3479
    %v3877 = vadd.f32 %v3052, %v3568
    %v3878 = vadd.f32 %v3053, %v3657
    %v3879 = vadd.f32 %v3054, %v3746
    %v3880 = vadd.f32 %v3055, %v3304
    %v3881 = vadd.f32 %v3056, %v3393
    %v3882 = vadd.f32 %v3057, %v3482
    %v3883 = vadd.f32 %v3058, %v3571
    %v3884 = vadd.f32 %v3059, %v3660
    %v3885 = vadd.f32 %v3060, %v3749
    %v3886 = vadd.f32 %v3061, %v3307
    %v3887 = vadd.f32 %v3062, %v3396
    %v3888 = vadd.f32 %v3063, %v3485
    %v3889 = vadd.f32 %v3064, %v3574
    %v3890 = vadd.f32 %v3065, %v3663
    %v3891 = vadd.f32 %v3066, %v3752
    %v3892 = vadd.f32 %v3067, %v3310
    %v3893 = vadd.f32 %v3068, %v3399
    %v3894 = vadd.f32 %v3069, %v3488
    %v3895 = vadd.f32 %v3070, %v3577
    %v3896 = vadd.f32 %v3071, %v3666
    %v3897 = vadd.f32 %v3072, %v3755
    %v3898 = vadd.f32 %v3073, %v3313
    %v3899 = vadd.f32 %v3074, %v3402
    %v3900 = vadd.f32 %v3075, %v3491
    %v3901 = vadd.f32 %v3076, %v3580
    %v3902 = vadd.f32 %v3077, %v3669
    %v3903 = vadd.f32 %v3078, %v3758
    %v3904 = vld [vmem:[%s2] sm:$0x3f]
    %v3906 = vperm.slane %v3904, 0
    %v3907 = vperm.slane %v3904, 1
    %v3908 = vperm.slane %v3904, 2
    %v3909 = vperm.slane %v3904, 3
    %v3910 = vperm.slane %v3904, 4
    %v3911 = vperm.slane %v3904, 5
    %v3918 = vadd.f32 %v3760, %v3906
    %v3919 = vadd.f32 %v3761, %v3907
    %v3920 = vadd.f32 %v3762, %v3908
    %v3921 = vadd.f32 %v3763, %v3909
    %v3922 = vadd.f32 %v3764, %v3910
    %v3923 = vadd.f32 %v3765, %v3911
    %v3924 = vadd.f32 %v3766, %v3906
    %v3925 = vadd.f32 %v3767, %v3907
    %v3926 = vadd.f32 %v3768, %v3908
    %v3927 = vadd.f32 %v3769, %v3909
    %v3928 = vadd.f32 %v3770, %v3910
    %v3929 = vadd.f32 %v3771, %v3911
    %v3930 = vadd.f32 %v3772, %v3906
    %v3931 = vadd.f32 %v3773, %v3907
    %v3932 = vadd.f32 %v3774, %v3908
    %v3933 = vadd.f32 %v3775, %v3909
    %v3934 = vadd.f32 %v3776, %v3910
    %v3935 = vadd.f32 %v3777, %v3911
    %v3936 = vadd.f32 %v3778, %v3906
    %v3937 = vadd.f32 %v3779, %v3907
    %v3938 = vadd.f32 %v3780, %v3908
    %v3939 = vadd.f32 %v3781, %v3909
    %v3940 = vadd.f32 %v3782, %v3910
    %v3941 = vadd.f32 %v3783, %v3911
    %v3942 = vadd.f32 %v3784, %v3906
    %v3943 = vadd.f32 %v3785, %v3907
    %v3944 = vadd.f32 %v3786, %v3908
    %v3945 = vadd.f32 %v3787, %v3909
    %v3946 = vadd.f32 %v3788, %v3910
    %v3947 = vadd.f32 %v3789, %v3911
    %v3948 = vadd.f32 %v3790, %v3906
    %v3949 = vadd.f32 %v3791, %v3907
    %v3950 = vadd.f32 %v3792, %v3908
    %v3951 = vadd.f32 %v3793, %v3909
    %v3952 = vadd.f32 %v3794, %v3910
    %v3953 = vadd.f32 %v3795, %v3911
    %v3954 = vadd.f32 %v3796, %v3906
    %v3955 = vadd.f32 %v3797, %v3907
    %v3956 = vadd.f32 %v3798, %v3908
    %v3957 = vadd.f32 %v3799, %v3909
    %v3958 = vadd.f32 %v3800, %v3910
    %v3959 = vadd.f32 %v3801, %v3911
    %v3960 = vadd.f32 %v3802, %v3906
    %v3961 = vadd.f32 %v3803, %v3907
    %v3962 = vadd.f32 %v3804, %v3908
    %v3963 = vadd.f32 %v3805, %v3909
    %v3964 = vadd.f32 %v3806, %v3910
    %v3965 = vadd.f32 %v3807, %v3911
    %v3966 = vadd.f32 %v3808, %v3906
    %v3967 = vadd.f32 %v3809, %v3907
    %v3968 = vadd.f32 %v3810, %v3908
    %v3969 = vadd.f32 %v3811, %v3909
    %v3970 = vadd.f32 %v3812, %v3910
    %v3971 = vadd.f32 %v3813, %v3911
    %v3972 = vadd.f32 %v3814, %v3906
    %v3973 = vadd.f32 %v3815, %v3907
    %v3974 = vadd.f32 %v3816, %v3908
    %v3975 = vadd.f32 %v3817, %v3909
    %v3976 = vadd.f32 %v3818, %v3910
    %v3977 = vadd.f32 %v3819, %v3911
    %v3978 = vadd.f32 %v3820, %v3906
    %v3979 = vadd.f32 %v3821, %v3907
    %v3980 = vadd.f32 %v3822, %v3908
    %v3981 = vadd.f32 %v3823, %v3909
    %v3982 = vadd.f32 %v3824, %v3910
    %v3983 = vadd.f32 %v3825, %v3911
    %v3984 = vadd.f32 %v3826, %v3906
    %v3985 = vadd.f32 %v3827, %v3907
    %v3986 = vadd.f32 %v3828, %v3908
    %v3987 = vadd.f32 %v3829, %v3909
    %v3988 = vadd.f32 %v3830, %v3910
    %v3989 = vadd.f32 %v3831, %v3911
    %v3990 = vadd.f32 %v3832, %v3906
    %v3991 = vadd.f32 %v3833, %v3907
    %v3992 = vadd.f32 %v3834, %v3908
    %v3993 = vadd.f32 %v3835, %v3909
    %v3994 = vadd.f32 %v3836, %v3910
    %v3995 = vadd.f32 %v3837, %v3911
    %v3996 = vadd.f32 %v3838, %v3906
    %v3997 = vadd.f32 %v3839, %v3907
    %v3998 = vadd.f32 %v3840, %v3908
    %v3999 = vadd.f32 %v3841, %v3909
    %v4000 = vadd.f32 %v3842, %v3910
    %v4001 = vadd.f32 %v3843, %v3911
    %v4002 = vadd.f32 %v3844, %v3906
    %v4003 = vadd.f32 %v3845, %v3907
    %v4004 = vadd.f32 %v3846, %v3908
    %v4005 = vadd.f32 %v3847, %v3909
    %v4006 = vadd.f32 %v3848, %v3910
    %v4007 = vadd.f32 %v3849, %v3911
    %v4008 = vadd.f32 %v3850, %v3906
    %v4009 = vadd.f32 %v3851, %v3907
    %v4010 = vadd.f32 %v3852, %v3908
    %v4011 = vadd.f32 %v3853, %v3909
    %v4012 = vadd.f32 %v3854, %v3910
    %v4013 = vadd.f32 %v3855, %v3911
    %v4014 = vadd.f32 %v3856, %v3906
    %v4015 = vadd.f32 %v3857, %v3907
    %v4016 = vadd.f32 %v3858, %v3908
    %v4017 = vadd.f32 %v3859, %v3909
    %v4018 = vadd.f32 %v3860, %v3910
    %v4019 = vadd.f32 %v3861, %v3911
    %v4020 = vadd.f32 %v3862, %v3906
    %v4021 = vadd.f32 %v3863, %v3907
    %v4022 = vadd.f32 %v3864, %v3908
    %v4023 = vadd.f32 %v3865, %v3909
    %v4024 = vadd.f32 %v3866, %v3910
    %v4025 = vadd.f32 %v3867, %v3911
    %v4026 = vadd.f32 %v3868, %v3906
    %v4027 = vadd.f32 %v3869, %v3907
    %v4028 = vadd.f32 %v3870, %v3908
    %v4029 = vadd.f32 %v3871, %v3909
    %v4030 = vadd.f32 %v3872, %v3910
    %v4031 = vadd.f32 %v3873, %v3911
    %v4032 = vadd.f32 %v3874, %v3906
    %v4033 = vadd.f32 %v3875, %v3907
    %v4034 = vadd.f32 %v3876, %v3908
    %v4035 = vadd.f32 %v3877, %v3909
    %v4036 = vadd.f32 %v3878, %v3910
    %v4037 = vadd.f32 %v3879, %v3911
    %v4038 = vadd.f32 %v3880, %v3906
    %v4039 = vadd.f32 %v3881, %v3907
    %v4040 = vadd.f32 %v3882, %v3908
    %v4041 = vadd.f32 %v3883, %v3909
    %v4042 = vadd.f32 %v3884, %v3910
    %v4043 = vadd.f32 %v3885, %v3911
    %v4044 = vadd.f32 %v3886, %v3906
    %v4045 = vadd.f32 %v3887, %v3907
    %v4046 = vadd.f32 %v3888, %v3908
    %v4047 = vadd.f32 %v3889, %v3909
    %v4048 = vadd.f32 %v3890, %v3910
    %v4049 = vadd.f32 %v3891, %v3911
    %v4050 = vadd.f32 %v3892, %v3906
    %v4051 = vadd.f32 %v3893, %v3907
    %v4052 = vadd.f32 %v3894, %v3908
    %v4053 = vadd.f32 %v3895, %v3909
    %v4054 = vadd.f32 %v3896, %v3910
    %v4055 = vadd.f32 %v3897, %v3911
    %v4056 = vadd.f32 %v3898, %v3906
    %v4057 = vadd.f32 %v3899, %v3907
    %v4058 = vadd.f32 %v3900, %v3908
    %v4059 = vadd.f32 %v3901, %v3909
    %v4060 = vadd.f32 %v3902, %v3910
    %v4061 = vadd.f32 %v3903, %v3911
    %v4062 = vmax.f32 %v3918, 0.0
    %v4063 = vmax.f32 %v3919, 0.0
    %v4064 = vmax.f32 %v3920, 0.0
    %v4065 = vmax.f32 %v3921, 0.0
    %v4066 = vmax.f32 %v3922, 0.0
    %v4067 = vmax.f32 %v3923, 0.0
    %v4068 = vmax.f32 %v3924, 0.0
    %v4069 = vmax.f32 %v3925, 0.0
    %v4070 = vmax.f32 %v3926, 0.0
    %v4071 = vmax.f32 %v3927, 0.0
    %v4072 = vmax.f32 %v3928, 0.0
    %v4073 = vmax.f32 %v3929, 0.0
    %v4074 = vmax.f32 %v3930, 0.0
    %v4075 = vmax.f32 %v3931, 0.0
    %v4076 = vmax.f32 %v3932, 0.0
    %v4077 = vmax.f32 %v3933, 0.0
    %v4078 = vmax.f32 %v3934, 0.0
    %v4079 = vmax.f32 %v3935, 0.0
    %v4080 = vmax.f32 %v3936, 0.0
    %v4081 = vmax.f32 %v3937, 0.0
    %v4082 = vmax.f32 %v3938, 0.0
    %v4083 = vmax.f32 %v3939, 0.0
    %v4084 = vmax.f32 %v3940, 0.0
    %v4085 = vmax.f32 %v3941, 0.0
    %v4086 = vmax.f32 %v3942, 0.0
    %v4087 = vmax.f32 %v3943, 0.0
    %v4088 = vmax.f32 %v3944, 0.0
    %v4089 = vmax.f32 %v3945, 0.0
    %v4090 = vmax.f32 %v3946, 0.0
    %v4091 = vmax.f32 %v3947, 0.0
    %v4092 = vmax.f32 %v3948, 0.0
    %v4093 = vmax.f32 %v3949, 0.0
    %v4094 = vmax.f32 %v3950, 0.0
    %v4095 = vmax.f32 %v3951, 0.0
    %v4096 = vmax.f32 %v3952, 0.0
    %v4097 = vmax.f32 %v3953, 0.0
    %v4098 = vmax.f32 %v3954, 0.0
    %v4099 = vmax.f32 %v3955, 0.0
    %v4100 = vmax.f32 %v3956, 0.0
    %v4101 = vmax.f32 %v3957, 0.0
    %v4102 = vmax.f32 %v3958, 0.0
    %v4103 = vmax.f32 %v3959, 0.0
    %v4104 = vmax.f32 %v3960, 0.0
    %v4105 = vmax.f32 %v3961, 0.0
    %v4106 = vmax.f32 %v3962, 0.0
    %v4107 = vmax.f32 %v3963, 0.0
    %v4108 = vmax.f32 %v3964, 0.0
    %v4109 = vmax.f32 %v3965, 0.0
    %v4110 = vmax.f32 %v3966, 0.0
    %v4111 = vmax.f32 %v3967, 0.0
    %v4112 = vmax.f32 %v3968, 0.0
    %v4113 = vmax.f32 %v3969, 0.0
    %v4114 = vmax.f32 %v3970, 0.0
    %v4115 = vmax.f32 %v3971, 0.0
    %v4116 = vmax.f32 %v3972, 0.0
    %v4117 = vmax.f32 %v3973, 0.0
    %v4118 = vmax.f32 %v3974, 0.0
    %v4119 = vmax.f32 %v3975, 0.0
    %v4120 = vmax.f32 %v3976, 0.0
    %v4121 = vmax.f32 %v3977, 0.0
    %v4122 = vmax.f32 %v3978, 0.0
    %v4123 = vmax.f32 %v3979, 0.0
    %v4124 = vmax.f32 %v3980, 0.0
    %v4125 = vmax.f32 %v3981, 0.0
    %v4126 = vmax.f32 %v3982, 0.0
    %v4127 = vmax.f32 %v3983, 0.0
    %v4128 = vmax.f32 %v3984, 0.0
    %v4129 = vmax.f32 %v3985, 0.0
    %v4130 = vmax.f32 %v3986, 0.0
    %v4131 = vmax.f32 %v3987, 0.0
    %v4132 = vmax.f32 %v3988, 0.0
    %v4133 = vmax.f32 %v3989, 0.0
    %v4134 = vmax.f32 %v3990, 0.0
    %v4135 = vmax.f32 %v3991, 0.0
    %v4136 = vmax.f32 %v3992, 0.0
    %v4137 = vmax.f32 %v3993, 0.0
    %v4138 = vmax.f32 %v3994, 0.0
    %v4139 = vmax.f32 %v3995, 0.0
    %v4140 = vmax.f32 %v3996, 0.0
    %v4141 = vmax.f32 %v3997, 0.0
    %v4142 = vmax.f32 %v3998, 0.0
    %v4143 = vmax.f32 %v3999, 0.0
    %v4144 = vmax.f32 %v4000, 0.0
    %v4145 = vmax.f32 %v4001, 0.0
    %v4146 = vmax.f32 %v4002, 0.0
    %v4147 = vmax.f32 %v4003, 0.0
    %v4148 = vmax.f32 %v4004, 0.0
    %v4149 = vmax.f32 %v4005, 0.0
    %v4150 = vmax.f32 %v4006, 0.0
    %v4151 = vmax.f32 %v4007, 0.0
    %v4152 = vmax.f32 %v4008, 0.0
    %v4153 = vmax.f32 %v4009, 0.0
    %v4154 = vmax.f32 %v4010, 0.0
    %v4155 = vmax.f32 %v4011, 0.0
    %v4156 = vmax.f32 %v4012, 0.0
    %v4157 = vmax.f32 %v4013, 0.0
    %v4158 = vmax.f32 %v4014, 0.0
    %v4159 = vmax.f32 %v4015, 0.0
    %v4160 = vmax.f32 %v4016, 0.0
    %v4161 = vmax.f32 %v4017, 0.0
    %v4162 = vmax.f32 %v4018, 0.0
    %v4163 = vmax.f32 %v4019, 0.0
    %v4164 = vmax.f32 %v4020, 0.0
    %v4165 = vmax.f32 %v4021, 0.0
    %v4166 = vmax.f32 %v4022, 0.0
    %v4167 = vmax.f32 %v4023, 0.0
    %v4168 = vmax.f32 %v4024, 0.0
    %v4169 = vmax.f32 %v4025, 0.0
    %v4170 = vmax.f32 %v4026, 0.0
    %v4171 = vmax.f32 %v4027, 0.0
    %v4172 = vmax.f32 %v4028, 0.0
    %v4173 = vmax.f32 %v4029, 0.0
    %v4174 = vmax.f32 %v4030, 0.0
    %v4175 = vmax.f32 %v4031, 0.0
    %v4176 = vmax.f32 %v4032, 0.0
    %v4177 = vmax.f32 %v4033, 0.0
    %v4178 = vmax.f32 %v4034, 0.0
    %v4179 = vmax.f32 %v4035, 0.0
    %v4180 = vmax.f32 %v4036, 0.0
    %v4181 = vmax.f32 %v4037, 0.0
    %v4182 = vmax.f32 %v4038, 0.0
    %v4183 = vmax.f32 %v4039, 0.0
    %v4184 = vmax.f32 %v4040, 0.0
    %v4185 = vmax.f32 %v4041, 0.0
    %v4186 = vmax.f32 %v4042, 0.0
    %v4187 = vmax.f32 %v4043, 0.0
    %v4188 = vmax.f32 %v4044, 0.0
    %v4189 = vmax.f32 %v4045, 0.0
    %v4190 = vmax.f32 %v4046, 0.0
    %v4191 = vmax.f32 %v4047, 0.0
    %v4192 = vmax.f32 %v4048, 0.0
    %v4193 = vmax.f32 %v4049, 0.0
    %v4194 = vmax.f32 %v4050, 0.0
    %v4195 = vmax.f32 %v4051, 0.0
    %v4196 = vmax.f32 %v4052, 0.0
    %v4197 = vmax.f32 %v4053, 0.0
    %v4198 = vmax.f32 %v4054, 0.0
    %v4199 = vmax.f32 %v4055, 0.0
    %v4200 = vmax.f32 %v4056, 0.0
    %v4201 = vmax.f32 %v4057, 0.0
    %v4202 = vmax.f32 %v4058, 0.0
    %v4203 = vmax.f32 %v4059, 0.0
    %v4204 = vmax.f32 %v4060, 0.0
    %v4205 = vmax.f32 %v4061, 0.0
    %v4206 = vld [vmem:[#allocation6] sm:$0xff]
    %v4207 = vld [vmem:[#allocation6 + $0x8] sm:$0xff]
    %v4208 = vld [vmem:[#allocation6 + $0x10] sm:$0xff]
    %v4209 = vld [vmem:[#allocation6 + $0x18] sm:$0xff]
    %v4210 = vld [vmem:[#allocation6 + $0x20] sm:$0xff]
    %v4211 = vld [vmem:[#allocation6 + $0x28] sm:$0xff]
    %v4212 = vld [vmem:[#allocation6 + $0x30] sm:$0xff]
    %v4213 = vld [vmem:[#allocation6 + $0x38] sm:$0xff]
    %v4214 = vld [vmem:[#allocation6 + $0x40] sm:$0xff]
    %v4215 = vld [vmem:[#allocation6 + $0x48] sm:$0xff]
    %v4216 = vld [vmem:[#allocation6 + $0x50] sm:$0xff]
    %v4217 = vld [vmem:[#allocation6 + $0x58] sm:$0xff]
    %v4218 = vld [vmem:[#allocation6 + $0x60] sm:$0xff]
    %v4219 = vld [vmem:[#allocation6 + $0x68] sm:$0xff]
    %v4220 = vld [vmem:[#allocation6 + $0x70] sm:$0xff]
    %v4221 = vld [vmem:[#allocation6 + $0x78] sm:$0xff]
    %v4222 = vld [vmem:[#allocation6 + $0x80] sm:$0xff]
    %v4223 = vld [vmem:[#allocation6 + $0x88] sm:$0xff]
    %v4224 = vld [vmem:[#allocation6 + $0x90] sm:$0xff]
    %v4225 = vld [vmem:[#allocation6 + $0x98] sm:$0xff]
    %v4226 = vld [vmem:[#allocation6 + $0xa0] sm:$0xff]
    %v4227 = vld [vmem:[#allocation6 + $0xa8] sm:$0xff]
    %v4228 = vld [vmem:[#allocation6 + $0xb0] sm:$0xff]
    %v4229 = vld [vmem:[#allocation6 + $0xb8] sm:$0xff]
    %v4230 = vld [vmem:[#allocation6 + $0xc0] sm:$0xff]
    %v4231 = vld [vmem:[#allocation6 + $0xc8] sm:$0xff]
    %v4232 = vld [vmem:[#allocation6 + $0xd0] sm:$0xff]
    %v4233 = vld [vmem:[#allocation6 + $0xd8] sm:$0xff]
    %v4234 = vld [vmem:[#allocation6 + $0xe0] sm:$0xff]
    %v4235 = vld [vmem:[#allocation6 + $0xe8] sm:$0xff]
    %v4236 = vld [vmem:[#allocation6 + $0xf0] sm:$0xff]
    %v4237 = vld [vmem:[#allocation6 + $0xf8] sm:$0xff]
    %v4238 = vld [vmem:[#allocation6 + $0x100] sm:$0xff]
    %v4239 = vld [vmem:[#allocation6 + $0x108] sm:$0xff]
    %v4240 = vld [vmem:[#allocation6 + $0x110] sm:$0xff]
    %v4241 = vld [vmem:[#allocation6 + $0x118] sm:$0xff]
    %v4242 = vld [vmem:[#allocation6 + $0x120] sm:$0xff]
    %v4243 = vld [vmem:[#allocation6 + $0x128] sm:$0xff]
    %v4244 = vld [vmem:[#allocation6 + $0x130] sm:$0xff]
    %v4245 = vld [vmem:[#allocation6 + $0x138] sm:$0xff]
    %v4246 = vld [vmem:[#allocation6 + $0x140] sm:$0xff]
    %v4247 = vld [vmem:[#allocation6 + $0x148] sm:$0xff]
    %v4248 = vld [vmem:[#allocation6 + $0x150] sm:$0xff]
    %v4249 = vld [vmem:[#allocation6 + $0x158] sm:$0xff]
    %v4250 = vld [vmem:[#allocation6 + $0x160] sm:$0xff]
    %v4251 = vld [vmem:[#allocation6 + $0x168] sm:$0xff]
    %v4252 = vld [vmem:[#allocation6 + $0x170] sm:$0xff]
    %v4253 = vld [vmem:[#allocation6 + $0x178] sm:$0xff]
    %v4254 = vld [vmem:[#allocation6 + $0x180] sm:$0xff]
    %v4255 = vld [vmem:[#allocation6 + $0x188] sm:$0xff]
    %v4256 = vld [vmem:[#allocation6 + $0x190] sm:$0xff]
    %v4257 = vld [vmem:[#allocation6 + $0x198] sm:$0xff]
    %v4258 = vld [vmem:[#allocation6 + $0x1a0] sm:$0xff]
    %v4259 = vld [vmem:[#allocation6 + $0x1a8] sm:$0xff]
    %v4260 = vld [vmem:[#allocation6 + $0x1b0] sm:$0xff]
    %v4261 = vld [vmem:[#allocation6 + $0x1b8] sm:$0xff]
    %v4262 = vld [vmem:[#allocation6 + $0x1c0] sm:$0xff]
    %v4263 = vld [vmem:[#allocation6 + $0x1c8] sm:$0xff]
    %v4264 = vld [vmem:[#allocation6 + $0x1d0] sm:$0xff]
    %v4265 = vld [vmem:[#allocation6 + $0x1d8] sm:$0xff]
    %v4266 = vld [vmem:[#allocation6 + $0x1e0] sm:$0xff]
    %v4267 = vld [vmem:[#allocation6 + $0x1e8] sm:$0xff]
    %v4268 = vld [vmem:[#allocation6 + $0x1f0] sm:$0xff]
    %v4269 = vld [vmem:[#allocation6 + $0x1f8] sm:$0xff]
    %v4270 = vld [vmem:[#allocation6 + $0x200] sm:$0xff]
    %v4271 = vld [vmem:[#allocation6 + $0x208] sm:$0xff]
    %v4272 = vld [vmem:[#allocation6 + $0x210] sm:$0xff]
    %v4273 = vld [vmem:[#allocation6 + $0x218] sm:$0xff]
    %v4274 = vld [vmem:[#allocation6 + $0x220] sm:$0xff]
    %v4275 = vld [vmem:[#allocation6 + $0x228] sm:$0xff]
    %v4276 = vld [vmem:[#allocation6 + $0x230] sm:$0xff]
    %v4277 = vld [vmem:[#allocation6 + $0x238] sm:$0xff]
    %v4278 = vld [vmem:[#allocation6 + $0x240] sm:$0xff]
    %v4279 = vld [vmem:[#allocation6 + $0x248] sm:$0xff]
    %v4280 = vld [vmem:[#allocation6 + $0x250] sm:$0xff]
    %v4281 = vld [vmem:[#allocation6 + $0x258] sm:$0xff]
    %v4282 = vld [vmem:[#allocation6 + $0x260] sm:$0xff]
    %v4283 = vld [vmem:[#allocation6 + $0x268] sm:$0xff]
    %v4284 = vld [vmem:[#allocation6 + $0x270] sm:$0xff]
    %v4285 = vld [vmem:[#allocation6 + $0x278] sm:$0xff]
    %v4286 = vld [vmem:[#allocation6 + $0x280] sm:$0xff]
    %v4287 = vld [vmem:[#allocation6 + $0x288] sm:$0xff]
    %v4288 = vld [vmem:[#allocation6 + $0x290] sm:$0xff]
    %v4289 = vld [vmem:[#allocation6 + $0x298] sm:$0xff]
    %v4290 = vld [vmem:[#allocation6 + $0x2a0] sm:$0xff]
    %v4291 = vld [vmem:[#allocation6 + $0x2a8] sm:$0xff]
    %v4292 = vld [vmem:[#allocation6 + $0x2b0] sm:$0xff]
    %v4293 = vld [vmem:[#allocation6 + $0x2b8] sm:$0xff]
    %v4294 = vld [vmem:[#allocation6 + $0x2c0] sm:$0xff]
    %v4295 = vld [vmem:[#allocation6 + $0x2c8] sm:$0xff]
    %v4296 = vld [vmem:[#allocation6 + $0x2d0] sm:$0xff]
    %v4297 = vld [vmem:[#allocation6 + $0x2d8] sm:$0xff]
    %v4298 = vld [vmem:[#allocation6 + $0x2e0] sm:$0xff]
    %v4299 = vld [vmem:[#allocation6 + $0x2e8] sm:$0xff]
    %v4300 = vld [vmem:[#allocation6 + $0x2f0] sm:$0xff]
    %v4301 = vld [vmem:[#allocation6 + $0x2f8] sm:$0xff]
    %v4302 = vld [vmem:[#allocation6 + $0x300] sm:$0xff]
    %v4303 = vld [vmem:[#allocation6 + $0x308] sm:$0xff]
    %v4304 = vld [vmem:[#allocation6 + $0x310] sm:$0xff]
    %v4305 = vld [vmem:[#allocation6 + $0x318] sm:$0xff]
    %v4306 = vld [vmem:[#allocation6 + $0x320] sm:$0xff]
    %v4307 = vld [vmem:[#allocation6 + $0x328] sm:$0xff]
    %v4308 = vld [vmem:[#allocation6 + $0x330] sm:$0xff]
    %v4309 = vld [vmem:[#allocation6 + $0x338] sm:$0xff]
    %v4310 = vld [vmem:[#allocation6 + $0x340] sm:$0xff]
    %v4311 = vld [vmem:[#allocation6 + $0x348] sm:$0xff]
    %v4312 = vld [vmem:[#allocation6 + $0x350] sm:$0xff]
    %v4313 = vld [vmem:[#allocation6 + $0x358] sm:$0xff]
    %v4314 = vld [vmem:[#allocation6 + $0x360] sm:$0xff]
    %v4315 = vld [vmem:[#allocation6 + $0x368] sm:$0xff]
    %v4316 = vld [vmem:[#allocation6 + $0x370] sm:$0xff]
    %v4317 = vld [vmem:[#allocation6 + $0x378] sm:$0xff]
    %v4318 = vld [vmem:[#allocation6 + $0x380] sm:$0xff]
    %v4319 = vld [vmem:[#allocation6 + $0x388] sm:$0xff]
    %v4320 = vld [vmem:[#allocation6 + $0x390] sm:$0xff]
    %v4321 = vld [vmem:[#allocation6 + $0x398] sm:$0xff]
    %v4322 = vld [vmem:[#allocation6 + $0x3a0] sm:$0xff]
    %v4323 = vld [vmem:[#allocation6 + $0x3a8] sm:$0xff]
    %v4324 = vld [vmem:[#allocation6 + $0x3b0] sm:$0xff]
    %v4325 = vld [vmem:[#allocation6 + $0x3b8] sm:$0xff]
    %v4326 = vld [vmem:[#allocation6 + $0x3c0] sm:$0xff]
    %v4327 = vld [vmem:[#allocation6 + $0x3c8] sm:$0xff]
    %v4328 = vld [vmem:[#allocation6 + $0x3d0] sm:$0xff]
    %v4329 = vld [vmem:[#allocation6 + $0x3d8] sm:$0xff]
    %v4330 = vld [vmem:[#allocation6 + $0x3e0] sm:$0xff]
    %v4331 = vld [vmem:[#allocation6 + $0x3e8] sm:$0xff]
    %v4332 = vld [vmem:[#allocation6 + $0x3f0] sm:$0xff]
    %v4333 = vld [vmem:[#allocation6 + $0x3f8] sm:$0xff]
    %v4334 = vld [vmem:[#allocation6 + $0x400] sm:$0xff]
    %v4335 = vld [vmem:[#allocation6 + $0x408] sm:$0xff]
    %v4336 = vld [vmem:[#allocation6 + $0x410] sm:$0xff]
    %v4337 = vld [vmem:[#allocation6 + $0x418] sm:$0xff]
    %v4338 = vld [vmem:[#allocation6 + $0x420] sm:$0xff]
    %v4339 = vld [vmem:[#allocation6 + $0x428] sm:$0xff]
    %v4340 = vld [vmem:[#allocation6 + $0x430] sm:$0xff]
    %v4341 = vld [vmem:[#allocation6 + $0x438] sm:$0xff]
    %v4342 = vld [vmem:[#allocation6 + $0x440] sm:$0xff]
    %v4343 = vld [vmem:[#allocation6 + $0x448] sm:$0xff]
    %v4344 = vld [vmem:[#allocation6 + $0x450] sm:$0xff]
    %v4345 = vld [vmem:[#allocation6 + $0x458] sm:$0xff]
    %v4346 = vld [vmem:[#allocation6 + $0x460] sm:$0xff]
    %v4347 = vld [vmem:[#allocation6 + $0x468] sm:$0xff]
    %v4348 = vld [vmem:[#allocation6 + $0x470] sm:$0xff]
    %v4349 = vld [vmem:[#allocation6 + $0x478] sm:$0xff]
    %v4350 = vmul.f32 %v4062, %v4206
    %v4351 = vmul.f32 %v4063, %v4207
    %v4352 = vmul.f32 %v4064, %v4208
    %v4353 = vmul.f32 %v4065, %v4209
    %v4354 = vmul.f32 %v4066, %v4210
    %v4355 = vmul.f32 %v4067, %v4211
    %v4356 = vmul.f32 %v4068, %v4212
    %v4357 = vmul.f32 %v4069, %v4213
    %v4358 = vmul.f32 %v4070, %v4214
    %v4359 = vmul.f32 %v4071, %v4215
    %v4360 = vmul.f32 %v4072, %v4216
    %v4361 = vmul.f32 %v4073, %v4217
    %v4362 = vmul.f32 %v4074, %v4218
    %v4363 = vmul.f32 %v4075, %v4219
    %v4364 = vmul.f32 %v4076, %v4220
    %v4365 = vmul.f32 %v4077, %v4221
    %v4366 = vmul.f32 %v4078, %v4222
    %v4367 = vmul.f32 %v4079, %v4223
    %v4368 = vmul.f32 %v4080, %v4224
    %v4369 = vmul.f32 %v4081, %v4225
    %v4370 = vmul.f32 %v4082, %v4226
    %v4371 = vmul.f32 %v4083, %v4227
    %v4372 = vmul.f32 %v4084, %v4228
    %v4373 = vmul.f32 %v4085, %v4229
    %v4374 = vmul.f32 %v4086, %v4230
    %v4375 = vmul.f32 %v4087, %v4231
    %v4376 = vmul.f32 %v4088, %v4232
    %v4377 = vmul.f32 %v4089, %v4233
    %v4378 = vmul.f32 %v4090, %v4234
    %v4379 = vmul.f32 %v4091, %v4235
    %v4380 = vmul.f32 %v4092, %v4236
    %v4381 = vmul.f32 %v4093, %v4237
    %v4382 = vmul.f32 %v4094, %v4238
    %v4383 = vmul.f32 %v4095, %v4239
    %v4384 = vmul.f32 %v4096, %v4240
    %v4385 = vmul.f32 %v4097, %v4241
    %v4386 = vmul.f32 %v4098, %v4242
    %v4387 = vmul.f32 %v4099, %v4243
    %v4388 = vmul.f32 %v4100, %v4244
    %v4389 = vmul.f32 %v4101, %v4245
    %v4390 = vmul.f32 %v4102, %v4246
    %v4391 = vmul.f32 %v4103, %v4247
    %v4392 = vmul.f32 %v4104, %v4248
    %v4393 = vmul.f32 %v4105, %v4249
    %v4394 = vmul.f32 %v4106, %v4250
    %v4395 = vmul.f32 %v4107, %v4251
    %v4396 = vmul.f32 %v4108, %v4252
    %v4397 = vmul.f32 %v4109, %v4253
    %v4398 = vmul.f32 %v4110, %v4254
    %v4399 = vmul.f32 %v4111, %v4255
    %v4400 = vmul.f32 %v4112, %v4256
    %v4401 = vmul.f32 %v4113, %v4257
    %v4402 = vmul.f32 %v4114, %v4258
    %v4403 = vmul.f32 %v4115, %v4259
    %v4404 = vmul.f32 %v4116, %v4260
    %v4405 = vmul.f32 %v4117, %v4261
    %v4406 = vmul.f32 %v4118, %v4262
    %v4407 = vmul.f32 %v4119, %v4263
    %v4408 = vmul.f32 %v4120, %v4264
    %v4409 = vmul.f32 %v4121, %v4265
    %v4410 = vmul.f32 %v4122, %v4266
    %v4411 = vmul.f32 %v4123, %v4267
    %v4412 = vmul.f32 %v4124, %v4268
    %v4413 = vmul.f32 %v4125, %v4269
    %v4414 = vmul.f32 %v4126, %v4270
    %v4415 = vmul.f32 %v4127, %v4271
    %v4416 = vmul.f32 %v4128, %v4272
    %v4417 = vmul.f32 %v4129, %v4273
    %v4418 = vmul.f32 %v4130, %v4274
    %v4419 = vmul.f32 %v4131, %v4275
    %v4420 = vmul.f32 %v4132, %v4276
    %v4421 = vmul.f32 %v4133, %v4277
    %v4422 = vmul.f32 %v4134, %v4278
    %v4423 = vmul.f32 %v4135, %v4279
    %v4424 = vmul.f32 %v4136, %v4280
    %v4425 = vmul.f32 %v4137, %v4281
    %v4426 = vmul.f32 %v4138, %v4282
    %v4427 = vmul.f32 %v4139, %v4283
    %v4428 = vmul.f32 %v4140, %v4284
    %v4429 = vmul.f32 %v4141, %v4285
    %v4430 = vmul.f32 %v4142, %v4286
    %v4431 = vmul.f32 %v4143, %v4287
    %v4432 = vmul.f32 %v4144, %v4288
    %v4433 = vmul.f32 %v4145, %v4289
    %v4434 = vmul.f32 %v4146, %v4290
    %v4435 = vmul.f32 %v4147, %v4291
    %v4436 = vmul.f32 %v4148, %v4292
    %v4437 = vmul.f32 %v4149, %v4293
    %v4438 = vmul.f32 %v4150, %v4294
    %v4439 = vmul.f32 %v4151, %v4295
    %v4440 = vmul.f32 %v4152, %v4296
    %v4441 = vmul.f32 %v4153, %v4297
    %v4442 = vmul.f32 %v4154, %v4298
    %v4443 = vmul.f32 %v4155, %v4299
    %v4444 = vmul.f32 %v4156, %v4300
    %v4445 = vmul.f32 %v4157, %v4301
    %v4446 = vmul.f32 %v4158, %v4302
    %v4447 = vmul.f32 %v4159, %v4303
    %v4448 = vmul.f32 %v4160, %v4304
    %v4449 = vmul.f32 %v4161, %v4305
    %v4450 = vmul.f32 %v4162, %v4306
    %v4451 = vmul.f32 %v4163, %v4307
    %v4452 = vmul.f32 %v4164, %v4308
    %v4453 = vmul.f32 %v4165, %v4309
    %v4454 = vmul.f32 %v4166, %v4310
    %v4455 = vmul.f32 %v4167, %v4311
    %v4456 = vmul.f32 %v4168, %v4312
    %v4457 = vmul.f32 %v4169, %v4313
    %v4458 = vmul.f32 %v4170, %v4314
    %v4459 = vmul.f32 %v4171, %v4315
    %v4460 = vmul.f32 %v4172, %v4316
    %v4461 = vmul.f32 %v4173, %v4317
    %v4462 = vmul.f32 %v4174, %v4318
    %v4463 = vmul.f32 %v4175, %v4319
    %v4464 = vmul.f32 %v4176, %v4320
    %v4465 = vmul.f32 %v4177, %v4321
    %v4466 = vmul.f32 %v4178, %v4322
    %v4467 = vmul.f32 %v4179, %v4323
    %v4468 = vmul.f32 %v4180, %v4324
    %v4469 = vmul.f32 %v4181, %v4325
    %v4470 = vmul.f32 %v4182, %v4326
    %v4471 = vmul.f32 %v4183, %v4327
    %v4472 = vmul.f32 %v4184, %v4328
    %v4473 = vmul.f32 %v4185, %v4329
    %v4474 = vmul.f32 %v4186, %v4330
    %v4475 = vmul.f32 %v4187, %v4331
    %v4476 = vmul.f32 %v4188, %v4332
    %v4477 = vmul.f32 %v4189, %v4333
    %v4478 = vmul.f32 %v4190, %v4334
    %v4479 = vmul.f32 %v4191, %v4335
    %v4480 = vmul.f32 %v4192, %v4336
    %v4481 = vmul.f32 %v4193, %v4337
    %v4482 = vmul.f32 %v4194, %v4338
    %v4483 = vmul.f32 %v4195, %v4339
    %v4484 = vmul.f32 %v4196, %v4340
    %v4485 = vmul.f32 %v4197, %v4341
    %v4486 = vmul.f32 %v4198, %v4342
    %v4487 = vmul.f32 %v4199, %v4343
    %v4488 = vmul.f32 %v4200, %v4344
    %v4489 = vmul.f32 %v4201, %v4345
    %v4490 = vmul.f32 %v4202, %v4346
    %v4491 = vmul.f32 %v4203, %v4347
    %v4492 = vmul.f32 %v4204, %v4348
    %v4493 = vmul.f32 %v4205, %v4349
    %v4494 = vadd.f32 %v4350, %v4351
    %v4495 = vadd.f32 %v4494, %v4352
    %v4496 = vadd.f32 %v4495, %v4353
    %v4497 = vadd.f32 %v4496, %v4354
    %v4498 = vadd.f32 %v4497, %v4355
    %4499 = vadd.xlane.f32.xlu0 %v4498
    %v4500 = vpop.xlane.xlu0 %4499
    %v4501 = vadd.f32 %v4356, %v4357
    %v4502 = vadd.f32 %v4501, %v4358
    %v4503 = vadd.f32 %v4502, %v4359
    %v4504 = vadd.f32 %v4503, %v4360
    %v4505 = vadd.f32 %v4504, %v4361
    %4506 = vadd.xlane.f32.xlu0 %v4505
    %v4507 = vpop.xlane.xlu0 %4506
    %v4508 = vadd.f32 %v4362, %v4363
    %v4509 = vadd.f32 %v4508, %v4364
    %v4510 = vadd.f32 %v4509, %v4365
    %v4511 = vadd.f32 %v4510, %v4366
    %v4512 = vadd.f32 %v4511, %v4367
    %4513 = vadd.xlane.f32.xlu0 %v4512
    %v4514 = vpop.xlane.xlu0 %4513
    %v4515 = vadd.f32 %v4368, %v4369
    %v4516 = vadd.f32 %v4515, %v4370
    %v4517 = vadd.f32 %v4516, %v4371
    %v4518 = vadd.f32 %v4517, %v4372
    %v4519 = vadd.f32 %v4518, %v4373
    %4520 = vadd.xlane.f32.xlu0 %v4519
    %v4521 = vpop.xlane.xlu0 %4520
    %v4522 = vadd.f32 %v4374, %v4375
    %v4523 = vadd.f32 %v4522, %v4376
    %v4524 = vadd.f32 %v4523, %v4377
    %v4525 = vadd.f32 %v4524, %v4378
    %v4526 = vadd.f32 %v4525, %v4379
    %4527 = vadd.xlane.f32.xlu0 %v4526
    %v4528 = vpop.xlane.xlu0 %4527
    %v4529 = vadd.f32 %v4380, %v4381
    %v4530 = vadd.f32 %v4529, %v4382
    %v4531 = vadd.f32 %v4530, %v4383
    %v4532 = vadd.f32 %v4531, %v4384
    %v4533 = vadd.f32 %v4532, %v4385
    %4534 = vadd.xlane.f32.xlu0 %v4533
    %v4535 = vpop.xlane.xlu0 %4534
    %v4536 = vadd.f32 %v4386, %v4387
    %v4537 = vadd.f32 %v4536, %v4388
    %v4538 = vadd.f32 %v4537, %v4389
    %v4539 = vadd.f32 %v4538, %v4390
    %v4540 = vadd.f32 %v4539, %v4391
    %4541 = vadd.xlane.f32.xlu0 %v4540
    %v4542 = vpop.xlane.xlu0 %4541
    %v4543 = vadd.f32 %v4392, %v4393
    %v4544 = vadd.f32 %v4543, %v4394
    %v4545 = vadd.f32 %v4544, %v4395
    %v4546 = vadd.f32 %v4545, %v4396
    %v4547 = vadd.f32 %v4546, %v4397
    %4548 = vadd.xlane.f32.xlu0 %v4547
    %v4549 = vpop.xlane.xlu0 %4548
    %v4550 = vadd.f32 %v4398, %v4399
    %v4551 = vadd.f32 %v4550, %v4400
    %v4552 = vadd.f32 %v4551, %v4401
    %v4553 = vadd.f32 %v4552, %v4402
    %v4554 = vadd.f32 %v4553, %v4403
    %4555 = vadd.xlane.f32.xlu0 %v4554
    %v4556 = vpop.xlane.xlu0 %4555
    %v4557 = vadd.f32 %v4404, %v4405
    %v4558 = vadd.f32 %v4557, %v4406
    %v4559 = vadd.f32 %v4558, %v4407
    %v4560 = vadd.f32 %v4559, %v4408
    %v4561 = vadd.f32 %v4560, %v4409
    %4562 = vadd.xlane.f32.xlu0 %v4561
    %v4563 = vpop.xlane.xlu0 %4562
    %v4564 = vadd.f32 %v4410, %v4411
    %v4565 = vadd.f32 %v4564, %v4412
    %v4566 = vadd.f32 %v4565, %v4413
    %v4567 = vadd.f32 %v4566, %v4414
    %v4568 = vadd.f32 %v4567, %v4415
    %4569 = vadd.xlane.f32.xlu0 %v4568
    %v4570 = vpop.xlane.xlu0 %4569
    %v4571 = vadd.f32 %v4416, %v4417
    %v4572 = vadd.f32 %v4571, %v4418
    %v4573 = vadd.f32 %v4572, %v4419
    %v4574 = vadd.f32 %v4573, %v4420
    %v4575 = vadd.f32 %v4574, %v4421
    %4576 = vadd.xlane.f32.xlu0 %v4575
    %v4577 = vpop.xlane.xlu0 %4576
    %v4578 = vadd.f32 %v4422, %v4423
    %v4579 = vadd.f32 %v4578, %v4424
    %v4580 = vadd.f32 %v4579, %v4425
    %v4581 = vadd.f32 %v4580, %v4426
    %v4582 = vadd.f32 %v4581, %v4427
    %4583 = vadd.xlane.f32.xlu0 %v4582
    %v4584 = vpop.xlane.xlu0 %4583
    %v4585 = vadd.f32 %v4428, %v4429
    %v4586 = vadd.f32 %v4585, %v4430
    %v4587 = vadd.f32 %v4586, %v4431
    %v4588 = vadd.f32 %v4587, %v4432
    %v4589 = vadd.f32 %v4588, %v4433
    %4590 = vadd.xlane.f32.xlu0 %v4589
    %v4591 = vpop.xlane.xlu0 %4590
    %v4592 = vadd.f32 %v4434, %v4435
    %v4593 = vadd.f32 %v4592, %v4436
    %v4594 = vadd.f32 %v4593, %v4437
    %v4595 = vadd.f32 %v4594, %v4438
    %v4596 = vadd.f32 %v4595, %v4439
    %4597 = vadd.xlane.f32.xlu0 %v4596
    %v4598 = vpop.xlane.xlu0 %4597
    %v4599 = vadd.f32 %v4440, %v4441
    %v4600 = vadd.f32 %v4599, %v4442
    %v4601 = vadd.f32 %v4600, %v4443
    %v4602 = vadd.f32 %v4601, %v4444
    %v4603 = vadd.f32 %v4602, %v4445
    %4604 = vadd.xlane.f32.xlu0 %v4603
    %v4605 = vpop.xlane.xlu0 %4604
    %v4606 = vadd.f32 %v4446, %v4447
    %v4607 = vadd.f32 %v4606, %v4448
    %v4608 = vadd.f32 %v4607, %v4449
    %v4609 = vadd.f32 %v4608, %v4450
    %v4610 = vadd.f32 %v4609, %v4451
    %4611 = vadd.xlane.f32.xlu0 %v4610
    %v4612 = vpop.xlane.xlu0 %4611
    %v4613 = vadd.f32 %v4452, %v4453
    %v4614 = vadd.f32 %v4613, %v4454
    %v4615 = vadd.f32 %v4614, %v4455
    %v4616 = vadd.f32 %v4615, %v4456
    %v4617 = vadd.f32 %v4616, %v4457
    %4618 = vadd.xlane.f32.xlu0 %v4617
    %v4619 = vpop.xlane.xlu0 %4618
    %v4620 = vadd.f32 %v4458, %v4459
    %v4621 = vadd.f32 %v4620, %v4460
    %v4622 = vadd.f32 %v4621, %v4461
    %v4623 = vadd.f32 %v4622, %v4462
    %v4624 = vadd.f32 %v4623, %v4463
    %4625 = vadd.xlane.f32.xlu0 %v4624
    %v4626 = vpop.xlane.xlu0 %4625
    %v4627 = vadd.f32 %v4464, %v4465
    %v4628 = vadd.f32 %v4627, %v4466
    %v4629 = vadd.f32 %v4628, %v4467
    %v4630 = vadd.f32 %v4629, %v4468
    %v4631 = vadd.f32 %v4630, %v4469
    %4632 = vadd.xlane.f32.xlu0 %v4631
    %v4633 = vpop.xlane.xlu0 %4632
    %v4634 = vadd.f32 %v4470, %v4471
    %v4635 = vadd.f32 %v4634, %v4472
    %v4636 = vadd.f32 %v4635, %v4473
    %v4637 = vadd.f32 %v4636, %v4474
    %v4638 = vadd.f32 %v4637, %v4475
    %4639 = vadd.xlane.f32.xlu0 %v4638
    %v4640 = vpop.xlane.xlu0 %4639
    %v4641 = vadd.f32 %v4476, %v4477
    %v4642 = vadd.f32 %v4641, %v4478
    %v4643 = vadd.f32 %v4642, %v4479
    %v4644 = vadd.f32 %v4643, %v4480
    %v4645 = vadd.f32 %v4644, %v4481
    %4646 = vadd.xlane.f32.xlu0 %v4645
    %v4647 = vpop.xlane.xlu0 %4646
    %v4648 = vadd.f32 %v4482, %v4483
    %v4649 = vadd.f32 %v4648, %v4484
    %v4650 = vadd.f32 %v4649, %v4485
    %v4651 = vadd.f32 %v4650, %v4486
    %v4652 = vadd.f32 %v4651, %v4487
    %4653 = vadd.xlane.f32.xlu0 %v4652
    %v4654 = vpop.xlane.xlu0 %4653
    %v4655 = vadd.f32 %v4488, %v4489
    %v4656 = vadd.f32 %v4655, %v4490
    %v4657 = vadd.f32 %v4656, %v4491
    %v4658 = vadd.f32 %v4657, %v4492
    %v4659 = vadd.f32 %v4658, %v4493
    %4660 = vadd.xlane.f32.xlu0 %v4659
    %v4661 = vpop.xlane.xlu0 %4660
    %v4686 = vlaneseq
    %v4687 = vand.u32 %v4686, 127
    %v4688 = vperm.slane %v4500, %v4687
    %v4689 = vadd.s32 %v4687, 4294967288
    %v4690 = vperm.slane %v4507, %v4689
    %vm4691 = vcmask 130112
    %v4692 = vsel %vm4691, %v4690, %v4688
    %v4693 = vadd.s32 %v4687, 4294967280
    %v4694 = vperm.slane %v4514, %v4693
    %vm4695 = vcmask 195712
    %v4696 = vsel %vm4695, %v4694, %v4692
    %v4697 = vperm.slane %v4521, %v4687
    %v4698 = vperm.slane %v4528, %v4689
    %v4699 = vsel %vm4691, %v4698, %v4697
    %v4700 = vperm.slane %v4535, %v4693
    %v4701 = vsel %vm4695, %v4700, %v4699
    %v4702 = vperm.slane %v4542, %v4687
    %v4703 = vperm.slane %v4549, %v4689
    %v4704 = vsel %vm4691, %v4703, %v4702
    %v4705 = vperm.slane %v4556, %v4693
    %v4706 = vsel %vm4695, %v4705, %v4704
    %v4707 = vperm.slane %v4563, %v4687
    %v4708 = vperm.slane %v4570, %v4689
    %v4709 = vsel %vm4691, %v4708, %v4707
    %v4710 = vperm.slane %v4577, %v4693
    %v4711 = vsel %vm4695, %v4710, %v4709
    %v4712 = vperm.slane %v4584, %v4687
    %v4713 = vperm.slane %v4591, %v4689
    %v4714 = vsel %vm4691, %v4713, %v4712
    %v4715 = vperm.slane %v4598, %v4693
    %v4716 = vsel %vm4695, %v4715, %v4714
    %v4717 = vperm.slane %v4605, %v4687
    %v4718 = vperm.slane %v4612, %v4689
    %v4719 = vsel %vm4691, %v4718, %v4717
    %v4720 = vperm.slane %v4619, %v4693
    %v4721 = vsel %vm4695, %v4720, %v4719
    %v4722 = vperm.slane %v4626, %v4687
    %v4723 = vperm.slane %v4633, %v4689
    %v4724 = vsel %vm4691, %v4723, %v4722
    %v4725 = vperm.slane %v4640, %v4693
    %v4726 = vsel %vm4695, %v4725, %v4724
    %v4727 = vperm.slane %v4647, %v4687
    %v4728 = vperm.slane %v4654, %v4689
    %v4729 = vsel %vm4691, %v4728, %v4727
    %v4730 = vperm.slane %v4661, %v4693
    %v4731 = vsel %vm4695, %v4730, %v4729
    %vm4732 = vcmask 1041409
    %v4733 = vsel %vm4732, %v4701, %v4696
    %vm4734 = vcmask 1042434
    %v4735 = vsel %vm4734, %v4706, %v4733
    %vm4736 = vcmask 1043459
    %v4737 = vsel %vm4736, %v4711, %v4735
    %vm4738 = vcmask 1044484
    %v4739 = vsel %vm4738, %v4716, %v4737
    %vm4740 = vcmask 1045509
    %v4741 = vsel %vm4740, %v4721, %v4739
    %vm4742 = vcmask 1046534
    %v4743 = vsel %vm4742, %v4726, %v4741
    %vm4744 = vcmask 1047559
    %v4745 = vsel %vm4744, %v4731, %v4743
    %vm4747 = vcmask 195584
    %v4748 = vsel %vm4747, %v4745, 0.0
    %4749 = vadd.xlane.f32.xlu0 %v4748
    %v4750 = vpop.xlane.xlu0 %4749
    %v4751 = vld [vmem:[#allocation2] sm:$0x1]
    %v4753 = vperm.slane %v4751, 0
    %v4755 = vadd.f32 %v4750, %v4753
    %4757 = vset.pattern.permute.xlu0 0
    %4758 = vperm.xlu0 %4757, %v4755
    %v4759 = vpop.permute.xlu0 %4758
    %4761 = vst [vmem:[#allocation8] sm:$0xff] %v4759
    // Predicated region
    $region30: #{tpu_custom_call.1} parent=1 // pred_check
      _
    $region31: #{tpu_custom_call.1} parent=1 // pred_check_branch
      %4763 = sbr.rel (0) target = $region33
    $region32: #{tpu_custom_call.1} parent=1 // pred_region
      %4765 = vsyncadd [#allocation5], 0
      %s4767 = sshll.u32 [#allocation8], 4
      %s4768 = int_to_ptr.vmem [resolvable:$true] %s4767
      %s4769 = sshll.u32 %s5, 4
      %s4770 = int_to_ptr.hbm [resolvable:$true] %s4769
      %4772 = dma.vmem_to_hbm [thread:$0]  %s4768, 128, %s4770, [#allocation5]
    $region33: #{tpu_custom_call.1} parent=1 // pred_fallthru
      _
    // Predicated region
    $region34: #{tpu_custom_call.1} parent=1 // pred_check
      _
    $region35: #{tpu_custom_call.1} parent=1 // pred_check_branch
      %4774 = sbr.rel (0) target = $region37
    $region36: #{tpu_custom_call.1} parent=1 // pred_region
      %4776 = dma.done [#allocation5], 128
    $region37: #{tpu_custom_call.1} parent=1 // pred_fallthru
      _
    %4777 = vsyncpa [#allocation4], 1
    %4778 = vsyncpa [#allocation7], 1
    %4779 = vsyncpa [#allocation5], 1

</llo_original>
